<compile_context>
chip_gen: v6e
topology: v6e:2x2x1
jax: 0.10.0
libtpu: 0.0.40
codegen_flags: <defaults>
</compile_context>

<pallas_src>
import jax
import jax.numpy as jnp
from jax.experimental import pallas as pl
from jax.experimental.pallas import tpu as pltpu

BN_EPS = 1e-5


def _tap_table(H, W, k):
    """Static tap metadata + border masks for a kxk conv with zero padding."""
    S = H * W
    p = (k - 1) // 2
    col = jnp.arange(S, dtype=jnp.int32) % W
    row = jnp.arange(S, dtype=jnp.int32) // W
    masks, taps = [], []
    for ddy in range(-p, p + 1):
        for ddx in range(-p, p + 1):
            off = ddy * W + ddx                       # flat source offset of the tap
            ok = ((col + ddx >= 0) & (col + ddx < W) &
                  (row + ddy >= 0) & (row + ddy < H))
            masks.append(ok.astype(jnp.float32))
            taps.append(((-off) % S, ddy == 0 and ddx == 0))
    return jnp.stack(masks, axis=0), taps             # (k*k, S), [(shift, is_center)]


def _make_kernel(C, S, taps3, taps5):
    """Fused SKConv kernel body.  One grid step == one batch item."""

    def build_slab(x, taps, mask_ref, xcat_ref):
        # x: (C, S) f32.  Row block t of xcat = x shifted by tap t's offset,
        # zeroed where the tap falls outside the spatial border (zero pad).
        for t, (shift, is_center) in enumerate(taps):
            if is_center:
                xs = x
            else:
                xs = pltpu.roll(x, shift, axis=1) * mask_ref[t:t + 1, :]
            xcat_ref[t * C:(t + 1) * C, :] = xs.astype(xcat_ref.dtype)

    def kernel(xl_ref, xg_ref, w3_ref, w5_ref, bconv_ref, m3_ref, m5_ref,
               wfct_ref, bfc_ref, watt_ref, batt_ref, o_ref, x3_ref, x5_ref):
        x0 = xl_ref[0].astype(jnp.float32)            # (C, S)
        x1 = xg_ref[0].astype(jnp.float32)
        build_slab(x0, taps3, m3_ref, x3_ref)         # (9*C, S) bf16 scratch
        build_slab(x1, taps5, m5_ref, x5_ref)         # (25*C, S) bf16 scratch

        # One MXU matmul per branch: (C, kk*C) @ (kk*C, S), f32 accumulation;
        # folded conv-bias + BN shift, then ReLU.
        fea0 = jnp.maximum(
            jnp.dot(w3_ref[...], x3_ref[...],
                    preferred_element_type=jnp.float32) + bconv_ref[:, 0:1], 0.0)
        fea1 = jnp.maximum(
            jnp.dot(w5_ref[...], x5_ref[...],
                    preferred_element_type=jnp.float32) + bconv_ref[:, 1:2], 0.0)

        # --- SK attention over the two branches (VPU / XLU / EUP only) ---
        fea_s = jnp.mean(fea0 + fea1, axis=1, keepdims=True)             # (C, 1)
        fea_z = jnp.sum(wfct_ref[...] * fea_s, axis=0,
                        keepdims=True) + bfc_ref[...]                    # (1, d)
        l0 = jnp.sum(watt_ref[0] * fea_z, axis=1,
                     keepdims=True) + batt_ref[:, 0:1]                   # (C, 1)
        l1 = jnp.sum(watt_ref[1] * fea_z, axis=1,
                     keepdims=True) + batt_ref[:, 1:2]                   # (C, 1)
        m = jnp.maximum(l0, l1)
        e0 = jnp.exp(l0 - m)
        e1 = jnp.exp(l1 - m)
        inv = pl.reciprocal(e0 + e1, approx=True)     # 2-way softmax denom (EUP)
        o_ref[0] = (fea0 * (e0 * inv) + fea1 * (e1 * inv)).astype(o_ref.dtype)

    return kernel


def _fold_branch(w, b, gamma, beta, mean, var, groups, eps=BN_EPS):
    """Expand the grouped conv weight to a dense, K-stacked (C_out, k*k*C_in)
    bf16 matrix with eval-mode BatchNorm scale folded in; fold conv bias + BN
    shift into a per-channel f32 bias.  K ordering is tap-major (row-major
    over ky, kx), input-channel-minor, matching the slab built in-kernel."""
    # TODO(synk): at production channel counts the dense (block-diagonal) fold
    # wastes G x MXU flops / weight VMEM; keep G block-diagonal matmuls or
    # tile C_out instead of densifying, and tile S in the BlockSpecs.
    cout, cin_g, kh, kw = w.shape
    cin = cin_g * groups
    og = cout // groups
    dense = jnp.zeros((cout, cin, kh, kw), jnp.float32)
    for g in range(groups):
        dense = dense.at[g * og:(g + 1) * og,
                         g * cin_g:(g + 1) * cin_g].set(w[g * og:(g + 1) * og])
    scale = gamma / jnp.sqrt(var + eps)                       # (cout,)
    dense = dense * scale[:, None, None, None]
    w_cat = jnp.transpose(dense, (0, 2, 3, 1)).reshape(cout, kh * kw * cin)
    b_eff = (b - mean) * scale + beta                         # (cout,)
    return w_cat.astype(jnp.bfloat16), b_eff


def skconv_new_forward(local, globel, params, *, groups):
    """Pallas forward for SKConv_new. local/globel: (B, C, H, W). Returns NCHW."""
    B, C, H, W = local.shape
    assert globel.shape == local.shape
    assert H == W, "AvgPool2d(WH) global pooling assumes square spatial input"
    # TODO(synk): stride > 1, training-mode BatchNorm batch statistics and
    # H*W not a multiple of 128 (lane padding) are not implemented.
    S = H * W
    d = params['fc_w'].shape[0]

    w3, be3 = _fold_branch(params['conv_w'][0], params['conv_b'][0],
                           params['bn_gamma'][0], params['bn_beta'][0],
                           params['bn_mean'][0], params['bn_var'][0], groups)
    w5, be5 = _fold_branch(params['conv_w'][1], params['conv_b'][1],
                           params['bn_gamma'][1], params['bn_beta'][1],
                           params['bn_mean'][1], params['bn_var'][1], groups)
    bconv = jnp.stack([be3, be5], axis=1)                     # (C, 2)
    wfct = params['fc_w'].T                                   # (C, d) lane-dense
    bfc = params['fc_b'].reshape(1, d)
    watt = jnp.stack(params['fcs_w'], axis=0)                 # (2, C, d)
    batt = jnp.stack(params['fcs_b'], axis=1)                 # (C, 2)

    mask3, taps3 = _tap_table(H, W, 3)                        # (9, S)
    mask5, taps5 = _tap_table(H, W, 5)                        # (25, S)
    kk3, kk5 = len(taps3), len(taps5)

    xl = local.reshape(B, C, S)
    xg = globel.reshape(B, C, S)

    batched = lambda b: (b, 0, 0)
    const2 = lambda b: (0, 0)
    const3 = lambda b: (0, 0, 0)

    out = pl.pallas_call(
        _make_kernel(C, S, taps3, taps5),
        out_shape=jax.ShapeDtypeStruct((B, C, S), local.dtype),
        grid=(B,),
        in_specs=[
            pl.BlockSpec((1, C, S), batched),      # local slab
            pl.BlockSpec((1, C, S), batched),      # globel slab
            pl.BlockSpec(w3.shape, const2),        # branch-0 stacked weights (C, 9C)
            pl.BlockSpec(w5.shape, const2),        # branch-1 stacked weights (C, 25C)
            pl.BlockSpec(bconv.shape, const2),     # folded conv/BN biases (C, 2)
            pl.BlockSpec(mask3.shape, const2),     # 3x3 border masks (9, S)
            pl.BlockSpec(mask5.shape, const2),     # 5x5 border masks (25, S)
            pl.BlockSpec(wfct.shape, const2),      # fc weight (C, d)
            pl.BlockSpec(bfc.shape, const2),       # fc bias (1, d)
            pl.BlockSpec(watt.shape, const3),      # fcs weights (2, C, d)
            pl.BlockSpec(batt.shape, const2),      # fcs biases (C, 2)
        ],
        out_specs=pl.BlockSpec((1, C, S), batched),
        scratch_shapes=[
            pltpu.VMEM((kk3 * C, S), jnp.bfloat16),   # X_cat for the 3x3 branch
            pltpu.VMEM((kk5 * C, S), jnp.bfloat16),   # X_cat for the 5x5 branch
        ],
        compiler_params=pltpu.CompilerParams(
            dimension_semantics=("parallel",)),
        cost_estimate=pl.CostEstimate(
            flops=2 * B * (kk3 + kk5) * C * C * S,
            transcendentals=3 * B * C,  # 2 exps + 1 reciprocal per channel/batch
            bytes_accessed=(3 * B * C * S * 4             # xl, xg, out
                            + (kk3 + kk5) * C * C * 2     # bf16 stacked weights
                            + (kk3 + kk5) * S * 4         # border masks
                            + (2 * C + C * d + d + 2 * C * d + 2 * C) * 4)),
    )(xl, xg, w3, w5, bconv, mask3, mask5, wfct, bfc, watt, batt)
    return out.reshape(B, C, H, W)


def skconv_new_ref(local, globel, params, *, groups, eps=BN_EPS):
    """Pure-JAX reference mirroring PyTorch SKConv_new.forward (eval-mode BN)."""
    with jax.default_matmul_precision("highest"):
        feas = []
        for m, x in enumerate((local, globel)):
            p = 1 + m
            y = jax.lax.conv_general_dilated(
                x, params['conv_w'][m], window_strides=(1, 1),
                padding=[(p, p), (p, p)],
                dimension_numbers=('NCHW', 'OIHW', 'NCHW'),
                feature_group_count=groups)
            y = y + params['conv_b'][m][None, :, None, None]
            sc = params['bn_gamma'][m] / jnp.sqrt(params['bn_var'][m] + eps)
            y = ((y - params['bn_mean'][m][None, :, None, None])
                 * sc[None, :, None, None]
                 + params['bn_beta'][m][None, :, None, None])
            feas.append(jnp.maximum(y, 0.0))
        fea_u = feas[0] + feas[1]
        fea_s = fea_u.mean(axis=(2, 3))                         # (B, C)
        fea_z = fea_s @ params['fc_w'].T + params['fc_b']       # (B, d)
        att = jnp.stack([fea_z @ params['fcs_w'][m].T + params['fcs_b'][m]
                         for m in range(2)], axis=1)            # (B, 2, C)
        att = jax.nn.softmax(att, axis=1)
        return (feas[0] * att[:, 0, :, None, None] +
                feas[1] * att[:, 1, :, None, None])


if __name__ == "__main__":
    # SKConv_new(features=16, WH=16, G=2, r=2, M=2, stride=1, L=8)
    B, C, H, W = 2, 16, 16, 16
    G, r, L = 2, 2, 8
    d = max(int(C / r), L)      # = 8

    key = jax.random.PRNGKey(0)
    ki = iter(jax.random.split(key, 24))
    nrm = lambda shape, s=0.1: s * jax.random.normal(next(ki), shape,
                                                     dtype=jnp.float32)

    local = jax.random.normal(next(ki), (B, C, H, W), dtype=jnp.float32)
    globel = jax.random.normal(next(ki), (B, C, H, W), dtype=jnp.float32)

    params = {
        'conv_w': [nrm((C, C // G, 3, 3)), nrm((C, C // G, 5, 5))],
        'conv_b': [nrm((C,)), nrm((C,))],
        'bn_gamma': [1.0 + nrm((C,)), 1.0 + nrm((C,))],
        'bn_beta': [nrm((C,)), nrm((C,))],
        'bn_mean': [nrm((C,)), nrm((C,))],
        'bn_var': [0.5 + jax.random.uniform(next(ki), (C,), dtype=jnp.float32),
                   0.5 + jax.random.uniform(next(ki), (C,), dtype=jnp.float32)],
        'fc_w': nrm((d, C)),
        'fc_b': nrm((d,)),
        'fcs_w': [nrm((C, d)), nrm((C, d))],
        'fcs_b': [nrm((C,)), nrm((C,))],
    }

    out = skconv_new_forward(local, globel, params, groups=G)
    out = jax.block_until_ready(out)

    ref = skconv_new_ref(local, globel, params, groups=G)
    assert out.shape == (B, C, H, W)
    err = float(jnp.max(jnp.abs(out - ref)))
    # Tolerance sized for bf16 MXU operands (f32 accumulation, K<=400 per tap
    # sum) plus the approximate EUP reciprocal in the 2-way softmax.
    assert jnp.allclose(out, ref, atol=2e-2, rtol=2e-2), f"max abs err {err}"
    print("KERNEL_OK")
</pallas_src>

<mosaic_0001>
module attributes {stable_mosaic.version = 11 : i64} {
  func.func @kernel(%arg0: i32, %arg1: memref<1x16x256xf32, #tpu.memory_space<vmem>>, %arg2: memref<1x16x256xf32, #tpu.memory_space<vmem>>, %arg3: memref<16x144xbf16, #tpu.memory_space<vmem>>, %arg4: memref<16x400xbf16, #tpu.memory_space<vmem>>, %arg5: memref<16x2xf32, #tpu.memory_space<vmem>>, %arg6: memref<9x256xf32, #tpu.memory_space<vmem>>, %arg7: memref<25x256xf32, #tpu.memory_space<vmem>>, %arg8: memref<16x8xf32, #tpu.memory_space<vmem>>, %arg9: memref<1x8xf32, #tpu.memory_space<vmem>>, %arg10: memref<2x16x8xf32, #tpu.memory_space<vmem>>, %arg11: memref<16x2xf32, #tpu.memory_space<vmem>>, %arg12: memref<1x16x256xf32, #tpu.memory_space<vmem>>, %arg13: memref<144x256xbf16, #tpu.memory_space<vmem>>, %arg14: memref<400x256xbf16, #tpu.memory_space<vmem>>) attributes {dimension_semantics = [#tpu.dimension_semantics<parallel>], iteration_bounds = array<i64: 2>, scalar_prefetch = 0 : i64, scratch_operands = 2 : i64, tpu.core_type = #tpu.core_type<tc>, window_params = [{transform_indices = @transform_0, window_bounds = array<i64: 1, 16, 256>}, {transform_indices = @transform_1, window_bounds = array<i64: 1, 16, 256>}, {pipeline_mode = #tpu.pipeline_mode<synchronous>, transform_indices = @transform_2, window_bounds = array<i64: 16, 144>}, {pipeline_mode = #tpu.pipeline_mode<synchronous>, transform_indices = @transform_3, window_bounds = array<i64: 16, 400>}, {pipeline_mode = #tpu.pipeline_mode<synchronous>, transform_indices = @transform_4, window_bounds = array<i64: 16, 2>}, {pipeline_mode = #tpu.pipeline_mode<synchronous>, transform_indices = @transform_5, window_bounds = array<i64: 9, 256>}, {pipeline_mode = #tpu.pipeline_mode<synchronous>, transform_indices = @transform_6, window_bounds = array<i64: 25, 256>}, {pipeline_mode = #tpu.pipeline_mode<synchronous>, transform_indices = @transform_7, window_bounds = array<i64: 16, 8>}, {pipeline_mode = #tpu.pipeline_mode<synchronous>, transform_indices = @transform_8, window_bounds = array<i64: 1, 8>}, {pipeline_mode = #tpu.pipeline_mode<synchronous>, transform_indices = @transform_9, window_bounds = array<i64: 2, 16, 8>}, {pipeline_mode = #tpu.pipeline_mode<synchronous>, transform_indices = @transform_10, window_bounds = array<i64: 16, 2>}, {transform_indices = @transform_11, window_bounds = array<i64: 1, 16, 256>}]} {
    %c0 = arith.constant 0 : index
    %c0_0 = arith.constant 0 : index
    %c0_1 = arith.constant 0 : index
    %0 = vector.load %arg1[%c0, %c0_0, %c0_1] : memref<1x16x256xf32, #tpu.memory_space<vmem>>, vector<1x16x256xf32>
    %1 = vector.shape_cast %0 : vector<1x16x256xf32> to vector<16x256xf32>
    %c0_2 = arith.constant 0 : index
    %c0_3 = arith.constant 0 : index
    %c0_4 = arith.constant 0 : index
    %2 = vector.load %arg2[%c0_2, %c0_3, %c0_4] : memref<1x16x256xf32, #tpu.memory_space<vmem>>, vector<1x16x256xf32>
    %3 = vector.shape_cast %2 : vector<1x16x256xf32> to vector<16x256xf32>
    %c17_i32 = arith.constant 17 : i32
    %4 = tpu.dynamic_rotate %1 by %c17_i32 dim 1 : vector<16x256xf32>, i32 -> vector<16x256xf32>
    %c0_5 = arith.constant 0 : index
    %c0_6 = arith.constant 0 : index
    %5 = vector.load %arg6[%c0_5, %c0_6] : memref<9x256xf32, #tpu.memory_space<vmem>>, vector<1x256xf32>
    %6 = vector.broadcast %5 : vector<1x256xf32> to vector<16x256xf32>
    %7 = arith.mulf %4, %6 : vector<16x256xf32>
    %8 = arith.truncf %7 : vector<16x256xf32> to vector<16x256xbf16>
    %c0_7 = arith.constant 0 : index
    %c0_8 = arith.constant 0 : index
    %9 = vector.load %arg13[%c0_7, %c0_8] : memref<144x256xbf16, #tpu.memory_space<vmem>>, vector<16x256xbf16>
    tpu.vector_store %arg13[%c0_7, %c0_8], %8 {strides = array<i32>} : memref<144x256xbf16, #tpu.memory_space<vmem>>, vector<16x256xbf16>,
    %c16_i32 = arith.constant 16 : i32
    %10 = tpu.dynamic_rotate %1 by %c16_i32 dim 1 : vector<16x256xf32>, i32 -> vector<16x256xf32>
    %c1 = arith.constant 1 : index
    %c0_9 = arith.constant 0 : index
    %11 = vector.load %arg6[%c1, %c0_9] : memref<9x256xf32, #tpu.memory_space<vmem>>, vector<1x256xf32>
    %12 = vector.broadcast %11 : vector<1x256xf32> to vector<16x256xf32>
    %13 = arith.mulf %10, %12 : vector<16x256xf32>
    %14 = arith.truncf %13 : vector<16x256xf32> to vector<16x256xbf16>
    %c16 = arith.constant 16 : index
    %c0_10 = arith.constant 0 : index
    %15 = vector.load %arg13[%c16, %c0_10] : memref<144x256xbf16, #tpu.memory_space<vmem>>, vector<16x256xbf16>
    tpu.vector_store %arg13[%c16, %c0_10], %14 {strides = array<i32>} : memref<144x256xbf16, #tpu.memory_space<vmem>>, vector<16x256xbf16>,
    %c15_i32 = arith.constant 15 : i32
    %16 = tpu.dynamic_rotate %1 by %c15_i32 dim 1 : vector<16x256xf32>, i32 -> vector<16x256xf32>
    %c2 = arith.constant 2 : index
    %c0_11 = arith.constant 0 : index
    %17 = vector.load %arg6[%c2, %c0_11] : memref<9x256xf32, #tpu.memory_space<vmem>>, vector<1x256xf32>
    %18 = vector.broadcast %17 : vector<1x256xf32> to vector<16x256xf32>
    %19 = arith.mulf %16, %18 : vector<16x256xf32>
    %20 = arith.truncf %19 : vector<16x256xf32> to vector<16x256xbf16>
    %c32 = arith.constant 32 : index
    %c0_12 = arith.constant 0 : index
    %21 = vector.load %arg13[%c32, %c0_12] : memref<144x256xbf16, #tpu.memory_space<vmem>>, vector<16x256xbf16>
    tpu.vector_store %arg13[%c32, %c0_12], %20 {strides = array<i32>} : memref<144x256xbf16, #tpu.memory_space<vmem>>, vector<16x256xbf16>,
    %c1_i32 = arith.constant 1 : i32
    %22 = tpu.dynamic_rotate %1 by %c1_i32 dim 1 : vector<16x256xf32>, i32 -> vector<16x256xf32>
    %c3 = arith.constant 3 : index
    %c0_13 = arith.constant 0 : index
    %23 = vector.load %arg6[%c3, %c0_13] : memref<9x256xf32, #tpu.memory_space<vmem>>, vector<1x256xf32>
    %24 = vector.broadcast %23 : vector<1x256xf32> to vector<16x256xf32>
    %25 = arith.mulf %22, %24 : vector<16x256xf32>
    %26 = arith.truncf %25 : vector<16x256xf32> to vector<16x256xbf16>
    %c48 = arith.constant 48 : index
    %c0_14 = arith.constant 0 : index
    %27 = vector.load %arg13[%c48, %c0_14] : memref<144x256xbf16, #tpu.memory_space<vmem>>, vector<16x256xbf16>
    tpu.vector_store %arg13[%c48, %c0_14], %26 {strides = array<i32>} : memref<144x256xbf16, #tpu.memory_space<vmem>>, vector<16x256xbf16>,
    %28 = arith.truncf %1 : vector<16x256xf32> to vector<16x256xbf16>
    %c64 = arith.constant 64 : index
    %c0_15 = arith.constant 0 : index
    %29 = vector.load %arg13[%c64, %c0_15] : memref<144x256xbf16, #tpu.memory_space<vmem>>, vector<16x256xbf16>
    tpu.vector_store %arg13[%c64, %c0_15], %28 {strides = array<i32>} : memref<144x256xbf16, #tpu.memory_space<vmem>>, vector<16x256xbf16>,
    %c255_i32 = arith.constant 255 : i32
    %30 = tpu.dynamic_rotate %1 by %c255_i32 dim 1 : vector<16x256xf32>, i32 -> vector<16x256xf32>
    %c5 = arith.constant 5 : index
    %c0_16 = arith.constant 0 : index
    %31 = vector.load %arg6[%c5, %c0_16] : memref<9x256xf32, #tpu.memory_space<vmem>>, vector<1x256xf32>
    %32 = vector.broadcast %31 : vector<1x256xf32> to vector<16x256xf32>
    %33 = arith.mulf %30, %32 : vector<16x256xf32>
    %34 = arith.truncf %33 : vector<16x256xf32> to vector<16x256xbf16>
    %c80 = arith.constant 80 : index
    %c0_17 = arith.constant 0 : index
    %35 = vector.load %arg13[%c80, %c0_17] : memref<144x256xbf16, #tpu.memory_space<vmem>>, vector<16x256xbf16>
    tpu.vector_store %arg13[%c80, %c0_17], %34 {strides = array<i32>} : memref<144x256xbf16, #tpu.memory_space<vmem>>, vector<16x256xbf16>,
    %c241_i32 = arith.constant 241 : i32
    %36 = tpu.dynamic_rotate %1 by %c241_i32 dim 1 : vector<16x256xf32>, i32 -> vector<16x256xf32>
    %c6 = arith.constant 6 : index
    %c0_18 = arith.constant 0 : index
    %37 = vector.load %arg6[%c6, %c0_18] : memref<9x256xf32, #tpu.memory_space<vmem>>, vector<1x256xf32>
    %38 = vector.broadcast %37 : vector<1x256xf32> to vector<16x256xf32>
    %39 = arith.mulf %36, %38 : vector<16x256xf32>
    %40 = arith.truncf %39 : vector<16x256xf32> to vector<16x256xbf16>
    %c96 = arith.constant 96 : index
    %c0_19 = arith.constant 0 : index
    %41 = vector.load %arg13[%c96, %c0_19] : memref<144x256xbf16, #tpu.memory_space<vmem>>, vector<16x256xbf16>
    tpu.vector_store %arg13[%c96, %c0_19], %40 {strides = array<i32>} : memref<144x256xbf16, #tpu.memory_space<vmem>>, vector<16x256xbf16>,
    %c240_i32 = arith.constant 240 : i32
    %42 = tpu.dynamic_rotate %1 by %c240_i32 dim 1 : vector<16x256xf32>, i32 -> vector<16x256xf32>
    %c7 = arith.constant 7 : index
    %c0_20 = arith.constant 0 : index
    %43 = vector.load %arg6[%c7, %c0_20] : memref<9x256xf32, #tpu.memory_space<vmem>>, vector<1x256xf32>
    %44 = vector.broadcast %43 : vector<1x256xf32> to vector<16x256xf32>
    %45 = arith.mulf %42, %44 : vector<16x256xf32>
    %46 = arith.truncf %45 : vector<16x256xf32> to vector<16x256xbf16>
    %c112 = arith.constant 112 : index
    %c0_21 = arith.constant 0 : index
    %47 = vector.load %arg13[%c112, %c0_21] : memref<144x256xbf16, #tpu.memory_space<vmem>>, vector<16x256xbf16>
    tpu.vector_store %arg13[%c112, %c0_21], %46 {strides = array<i32>} : memref<144x256xbf16, #tpu.memory_space<vmem>>, vector<16x256xbf16>,
    %c239_i32 = arith.constant 239 : i32
    %48 = tpu.dynamic_rotate %1 by %c239_i32 dim 1 : vector<16x256xf32>, i32 -> vector<16x256xf32>
    %c8 = arith.constant 8 : index
    %c0_22 = arith.constant 0 : index
    %49 = vector.load %arg6[%c8, %c0_22] : memref<9x256xf32, #tpu.memory_space<vmem>>, vector<1x256xf32>
    %50 = vector.broadcast %49 : vector<1x256xf32> to vector<16x256xf32>
    %51 = arith.mulf %48, %50 : vector<16x256xf32>
    %52 = arith.truncf %51 : vector<16x256xf32> to vector<16x256xbf16>
    %c128 = arith.constant 128 : index
    %c0_23 = arith.constant 0 : index
    %53 = vector.load %arg13[%c128, %c0_23] : memref<144x256xbf16, #tpu.memory_space<vmem>>, vector<16x256xbf16>
    tpu.vector_store %arg13[%c128, %c0_23], %52 {strides = array<i32>} : memref<144x256xbf16, #tpu.memory_space<vmem>>, vector<16x256xbf16>,
    %c34_i32 = arith.constant 34 : i32
    %54 = tpu.dynamic_rotate %3 by %c34_i32 dim 1 : vector<16x256xf32>, i32 -> vector<16x256xf32>
    %c0_24 = arith.constant 0 : index
    %c0_25 = arith.constant 0 : index
    %55 = vector.load %arg7[%c0_24, %c0_25] : memref<25x256xf32, #tpu.memory_space<vmem>>, vector<1x256xf32>
    %56 = vector.broadcast %55 : vector<1x256xf32> to vector<16x256xf32>
    %57 = arith.mulf %54, %56 : vector<16x256xf32>
    %58 = arith.truncf %57 : vector<16x256xf32> to vector<16x256xbf16>
    %c0_26 = arith.constant 0 : index
    %c0_27 = arith.constant 0 : index
    %59 = vector.load %arg14[%c0_26, %c0_27] : memref<400x256xbf16, #tpu.memory_space<vmem>>, vector<16x256xbf16>
    tpu.vector_store %arg14[%c0_26, %c0_27], %58 {strides = array<i32>} : memref<400x256xbf16, #tpu.memory_space<vmem>>, vector<16x256xbf16>,
    %c33_i32 = arith.constant 33 : i32
    %60 = tpu.dynamic_rotate %3 by %c33_i32 dim 1 : vector<16x256xf32>, i32 -> vector<16x256xf32>
    %c1_28 = arith.constant 1 : index
    %c0_29 = arith.constant 0 : index
    %61 = vector.load %arg7[%c1_28, %c0_29] : memref<25x256xf32, #tpu.memory_space<vmem>>, vector<1x256xf32>
    %62 = vector.broadcast %61 : vector<1x256xf32> to vector<16x256xf32>
    %63 = arith.mulf %60, %62 : vector<16x256xf32>
    %64 = arith.truncf %63 : vector<16x256xf32> to vector<16x256xbf16>
    %c16_30 = arith.constant 16 : index
    %c0_31 = arith.constant 0 : index
    %65 = vector.load %arg14[%c16_30, %c0_31] : memref<400x256xbf16, #tpu.memory_space<vmem>>, vector<16x256xbf16>
    tpu.vector_store %arg14[%c16_30, %c0_31], %64 {strides = array<i32>} : memref<400x256xbf16, #tpu.memory_space<vmem>>, vector<16x256xbf16>,
    %c32_i32 = arith.constant 32 : i32
    %66 = tpu.dynamic_rotate %3 by %c32_i32 dim 1 : vector<16x256xf32>, i32 -> vector<16x256xf32>
    %c2_32 = arith.constant 2 : index
    %c0_33 = arith.constant 0 : index
    %67 = vector.load %arg7[%c2_32, %c0_33] : memref<25x256xf32, #tpu.memory_space<vmem>>, vector<1x256xf32>
    %68 = vector.broadcast %67 : vector<1x256xf32> to vector<16x256xf32>
    %69 = arith.mulf %66, %68 : vector<16x256xf32>
    %70 = arith.truncf %69 : vector<16x256xf32> to vector<16x256xbf16>
    %c32_34 = arith.constant 32 : index
    %c0_35 = arith.constant 0 : index
    %71 = vector.load %arg14[%c32_34, %c0_35] : memref<400x256xbf16, #tpu.memory_space<vmem>>, vector<16x256xbf16>
    tpu.vector_store %arg14[%c32_34, %c0_35], %70 {strides = array<i32>} : memref<400x256xbf16, #tpu.memory_space<vmem>>, vector<16x256xbf16>,
    %c31_i32 = arith.constant 31 : i32
    %72 = tpu.dynamic_rotate %3 by %c31_i32 dim 1 : vector<16x256xf32>, i32 -> vector<16x256xf32>
    %c3_36 = arith.constant 3 : index
    %c0_37 = arith.constant 0 : index
    %73 = vector.load %arg7[%c3_36, %c0_37] : memref<25x256xf32, #tpu.memory_space<vmem>>, vector<1x256xf32>
    %74 = vector.broadcast %73 : vector<1x256xf32> to vector<16x256xf32>
    %75 = arith.mulf %72, %74 : vector<16x256xf32>
    %76 = arith.truncf %75 : vector<16x256xf32> to vector<16x256xbf16>
    %c48_38 = arith.constant 48 : index
    %c0_39 = arith.constant 0 : index
    %77 = vector.load %arg14[%c48_38, %c0_39] : memref<400x256xbf16, #tpu.memory_space<vmem>>, vector<16x256xbf16>
    tpu.vector_store %arg14[%c48_38, %c0_39], %76 {strides = array<i32>} : memref<400x256xbf16, #tpu.memory_space<vmem>>, vector<16x256xbf16>,
    %c30_i32 = arith.constant 30 : i32
    %78 = tpu.dynamic_rotate %3 by %c30_i32 dim 1 : vector<16x256xf32>, i32 -> vector<16x256xf32>
    %c4 = arith.constant 4 : index
    %c0_40 = arith.constant 0 : index
    %79 = vector.load %arg7[%c4, %c0_40] : memref<25x256xf32, #tpu.memory_space<vmem>>, vector<1x256xf32>
    %80 = vector.broadcast %79 : vector<1x256xf32> to vector<16x256xf32>
    %81 = arith.mulf %78, %80 : vector<16x256xf32>
    %82 = arith.truncf %81 : vector<16x256xf32> to vector<16x256xbf16>
    %c64_41 = arith.constant 64 : index
    %c0_42 = arith.constant 0 : index
    %83 = vector.load %arg14[%c64_41, %c0_42] : memref<400x256xbf16, #tpu.memory_space<vmem>>, vector<16x256xbf16>
    tpu.vector_store %arg14[%c64_41, %c0_42], %82 {strides = array<i32>} : memref<400x256xbf16, #tpu.memory_space<vmem>>, vector<16x256xbf16>,
    %c18_i32 = arith.constant 18 : i32
    %84 = tpu.dynamic_rotate %3 by %c18_i32 dim 1 : vector<16x256xf32>, i32 -> vector<16x256xf32>
    %c5_43 = arith.constant 5 : index
    %c0_44 = arith.constant 0 : index
    %85 = vector.load %arg7[%c5_43, %c0_44] : memref<25x256xf32, #tpu.memory_space<vmem>>, vector<1x256xf32>
    %86 = vector.broadcast %85 : vector<1x256xf32> to vector<16x256xf32>
    %87 = arith.mulf %84, %86 : vector<16x256xf32>
    %88 = arith.truncf %87 : vector<16x256xf32> to vector<16x256xbf16>
    %c80_45 = arith.constant 80 : index
    %c0_46 = arith.constant 0 : index
    %89 = vector.load %arg14[%c80_45, %c0_46] : memref<400x256xbf16, #tpu.memory_space<vmem>>, vector<16x256xbf16>
    tpu.vector_store %arg14[%c80_45, %c0_46], %88 {strides = array<i32>} : memref<400x256xbf16, #tpu.memory_space<vmem>>, vector<16x256xbf16>,
    %c17_i32_47 = arith.constant 17 : i32
    %90 = tpu.dynamic_rotate %3 by %c17_i32_47 dim 1 : vector<16x256xf32>, i32 -> vector<16x256xf32>
    %c6_48 = arith.constant 6 : index
    %c0_49 = arith.constant 0 : index
    %91 = vector.load %arg7[%c6_48, %c0_49] : memref<25x256xf32, #tpu.memory_space<vmem>>, vector<1x256xf32>
    %92 = vector.broadcast %91 : vector<1x256xf32> to vector<16x256xf32>
    %93 = arith.mulf %90, %92 : vector<16x256xf32>
    %94 = arith.truncf %93 : vector<16x256xf32> to vector<16x256xbf16>
    %c96_50 = arith.constant 96 : index
    %c0_51 = arith.constant 0 : index
    %95 = vector.load %arg14[%c96_50, %c0_51] : memref<400x256xbf16, #tpu.memory_space<vmem>>, vector<16x256xbf16>
    tpu.vector_store %arg14[%c96_50, %c0_51], %94 {strides = array<i32>} : memref<400x256xbf16, #tpu.memory_space<vmem>>, vector<16x256xbf16>,
    %c16_i32_52 = arith.constant 16 : i32
    %96 = tpu.dynamic_rotate %3 by %c16_i32_52 dim 1 : vector<16x256xf32>, i32 -> vector<16x256xf32>
    %c7_53 = arith.constant 7 : index
    %c0_54 = arith.constant 0 : index
    %97 = vector.load %arg7[%c7_53, %c0_54] : memref<25x256xf32, #tpu.memory_space<vmem>>, vector<1x256xf32>
    %98 = vector.broadcast %97 : vector<1x256xf32> to vector<16x256xf32>
    %99 = arith.mulf %96, %98 : vector<16x256xf32>
    %100 = arith.truncf %99 : vector<16x256xf32> to vector<16x256xbf16>
    %c112_55 = arith.constant 112 : index
    %c0_56 = arith.constant 0 : index
    %101 = vector.load %arg14[%c112_55, %c0_56] : memref<400x256xbf16, #tpu.memory_space<vmem>>, vector<16x256xbf16>
    tpu.vector_store %arg14[%c112_55, %c0_56], %100 {strides = array<i32>} : memref<400x256xbf16, #tpu.memory_space<vmem>>, vector<16x256xbf16>,
    %c15_i32_57 = arith.constant 15 : i32
    %102 = tpu.dynamic_rotate %3 by %c15_i32_57 dim 1 : vector<16x256xf32>, i32 -> vector<16x256xf32>
    %c8_58 = arith.constant 8 : index
    %c0_59 = arith.constant 0 : index
    %103 = vector.load %arg7[%c8_58, %c0_59] : memref<25x256xf32, #tpu.memory_space<vmem>>, vector<1x256xf32>
    %104 = vector.broadcast %103 : vector<1x256xf32> to vector<16x256xf32>
    %105 = arith.mulf %102, %104 : vector<16x256xf32>
    %106 = arith.truncf %105 : vector<16x256xf32> to vector<16x256xbf16>
    %c128_60 = arith.constant 128 : index
    %c0_61 = arith.constant 0 : index
    %107 = vector.load %arg14[%c128_60, %c0_61] : memref<400x256xbf16, #tpu.memory_space<vmem>>, vector<16x256xbf16>
    tpu.vector_store %arg14[%c128_60, %c0_61], %106 {strides = array<i32>} : memref<400x256xbf16, #tpu.memory_space<vmem>>, vector<16x256xbf16>,
    %c14_i32 = arith.constant 14 : i32
    %108 = tpu.dynamic_rotate %3 by %c14_i32 dim 1 : vector<16x256xf32>, i32 -> vector<16x256xf32>
    %c9 = arith.constant 9 : index
    %c0_62 = arith.constant 0 : index
    %109 = vector.load %arg7[%c9, %c0_62] : memref<25x256xf32, #tpu.memory_space<vmem>>, vector<1x256xf32>
    %110 = vector.broadcast %109 : vector<1x256xf32> to vector<16x256xf32>
    %111 = arith.mulf %108, %110 : vector<16x256xf32>
    %112 = arith.truncf %111 : vector<16x256xf32> to vector<16x256xbf16>
    %c144 = arith.constant 144 : index
    %c0_63 = arith.constant 0 : index
    %113 = vector.load %arg14[%c144, %c0_63] : memref<400x256xbf16, #tpu.memory_space<vmem>>, vector<16x256xbf16>
    tpu.vector_store %arg14[%c144, %c0_63], %112 {strides = array<i32>} : memref<400x256xbf16, #tpu.memory_space<vmem>>, vector<16x256xbf16>,
    %c2_i32 = arith.constant 2 : i32
    %114 = tpu.dynamic_rotate %3 by %c2_i32 dim 1 : vector<16x256xf32>, i32 -> vector<16x256xf32>
    %c10 = arith.constant 10 : index
    %c0_64 = arith.constant 0 : index
    %115 = vector.load %arg7[%c10, %c0_64] : memref<25x256xf32, #tpu.memory_space<vmem>>, vector<1x256xf32>
    %116 = vector.broadcast %115 : vector<1x256xf32> to vector<16x256xf32>
    %117 = arith.mulf %114, %116 : vector<16x256xf32>
    %118 = arith.truncf %117 : vector<16x256xf32> to vector<16x256xbf16>
    %c160 = arith.constant 160 : index
    %c0_65 = arith.constant 0 : index
    %119 = vector.load %arg14[%c160, %c0_65] : memref<400x256xbf16, #tpu.memory_space<vmem>>, vector<16x256xbf16>
    tpu.vector_store %arg14[%c160, %c0_65], %118 {strides = array<i32>} : memref<400x256xbf16, #tpu.memory_space<vmem>>, vector<16x256xbf16>,
    %c1_i32_66 = arith.constant 1 : i32
    %120 = tpu.dynamic_rotate %3 by %c1_i32_66 dim 1 : vector<16x256xf32>, i32 -> vector<16x256xf32>
    %c11 = arith.constant 11 : index
    %c0_67 = arith.constant 0 : index
    %121 = vector.load %arg7[%c11, %c0_67] : memref<25x256xf32, #tpu.memory_space<vmem>>, vector<1x256xf32>
    %122 = vector.broadcast %121 : vector<1x256xf32> to vector<16x256xf32>
    %123 = arith.mulf %120, %122 : vector<16x256xf32>
    %124 = arith.truncf %123 : vector<16x256xf32> to vector<16x256xbf16>
    %c176 = arith.constant 176 : index
    %c0_68 = arith.constant 0 : index
    %125 = vector.load %arg14[%c176, %c0_68] : memref<400x256xbf16, #tpu.memory_space<vmem>>, vector<16x256xbf16>
    tpu.vector_store %arg14[%c176, %c0_68], %124 {strides = array<i32>} : memref<400x256xbf16, #tpu.memory_space<vmem>>, vector<16x256xbf16>,
    %126 = arith.truncf %3 : vector<16x256xf32> to vector<16x256xbf16>
    %c192 = arith.constant 192 : index
    %c0_69 = arith.constant 0 : index
    %127 = vector.load %arg14[%c192, %c0_69] : memref<400x256xbf16, #tpu.memory_space<vmem>>, vector<16x256xbf16>
    tpu.vector_store %arg14[%c192, %c0_69], %126 {strides = array<i32>} : memref<400x256xbf16, #tpu.memory_space<vmem>>, vector<16x256xbf16>,
    %c255_i32_70 = arith.constant 255 : i32
    %128 = tpu.dynamic_rotate %3 by %c255_i32_70 dim 1 : vector<16x256xf32>, i32 -> vector<16x256xf32>
    %c13 = arith.constant 13 : index
    %c0_71 = arith.constant 0 : index
    %129 = vector.load %arg7[%c13, %c0_71] : memref<25x256xf32, #tpu.memory_space<vmem>>, vector<1x256xf32>
    %130 = vector.broadcast %129 : vector<1x256xf32> to vector<16x256xf32>
    %131 = arith.mulf %128, %130 : vector<16x256xf32>
    %132 = arith.truncf %131 : vector<16x256xf32> to vector<16x256xbf16>
    %c208 = arith.constant 208 : index
    %c0_72 = arith.constant 0 : index
    %133 = vector.load %arg14[%c208, %c0_72] : memref<400x256xbf16, #tpu.memory_space<vmem>>, vector<16x256xbf16>
    tpu.vector_store %arg14[%c208, %c0_72], %132 {strides = array<i32>} : memref<400x256xbf16, #tpu.memory_space<vmem>>, vector<16x256xbf16>,
    %c254_i32 = arith.constant 254 : i32
    %134 = tpu.dynamic_rotate %3 by %c254_i32 dim 1 : vector<16x256xf32>, i32 -> vector<16x256xf32>
    %c14 = arith.constant 14 : index
    %c0_73 = arith.constant 0 : index
    %135 = vector.load %arg7[%c14, %c0_73] : memref<25x256xf32, #tpu.memory_space<vmem>>, vector<1x256xf32>
    %136 = vector.broadcast %135 : vector<1x256xf32> to vector<16x256xf32>
    %137 = arith.mulf %134, %136 : vector<16x256xf32>
    %138 = arith.truncf %137 : vector<16x256xf32> to vector<16x256xbf16>
    %c224 = arith.constant 224 : index
    %c0_74 = arith.constant 0 : index
    %139 = vector.load %arg14[%c224, %c0_74] : memref<400x256xbf16, #tpu.memory_space<vmem>>, vector<16x256xbf16>
    tpu.vector_store %arg14[%c224, %c0_74], %138 {strides = array<i32>} : memref<400x256xbf16, #tpu.memory_space<vmem>>, vector<16x256xbf16>,
    %c242_i32 = arith.constant 242 : i32
    %140 = tpu.dynamic_rotate %3 by %c242_i32 dim 1 : vector<16x256xf32>, i32 -> vector<16x256xf32>
    %c15 = arith.constant 15 : index
    %c0_75 = arith.constant 0 : index
    %141 = vector.load %arg7[%c15, %c0_75] : memref<25x256xf32, #tpu.memory_space<vmem>>, vector<1x256xf32>
    %142 = vector.broadcast %141 : vector<1x256xf32> to vector<16x256xf32>
    %143 = arith.mulf %140, %142 : vector<16x256xf32>
    %144 = arith.truncf %143 : vector<16x256xf32> to vector<16x256xbf16>
    %c240 = arith.constant 240 : index
    %c0_76 = arith.constant 0 : index
    %145 = vector.load %arg14[%c240, %c0_76] : memref<400x256xbf16, #tpu.memory_space<vmem>>, vector<16x256xbf16>
    tpu.vector_store %arg14[%c240, %c0_76], %144 {strides = array<i32>} : memref<400x256xbf16, #tpu.memory_space<vmem>>, vector<16x256xbf16>,
    %c241_i32_77 = arith.constant 241 : i32
    %146 = tpu.dynamic_rotate %3 by %c241_i32_77 dim 1 : vector<16x256xf32>, i32 -> vector<16x256xf32>
    %c16_78 = arith.constant 16 : index
    %c0_79 = arith.constant 0 : index
    %147 = vector.load %arg7[%c16_78, %c0_79] : memref<25x256xf32, #tpu.memory_space<vmem>>, vector<1x256xf32>
    %148 = vector.broadcast %147 : vector<1x256xf32> to vector<16x256xf32>
    %149 = arith.mulf %146, %148 : vector<16x256xf32>
    %150 = arith.truncf %149 : vector<16x256xf32> to vector<16x256xbf16>
    %c256 = arith.constant 256 : index
    %c0_80 = arith.constant 0 : index
    %151 = vector.load %arg14[%c256, %c0_80] : memref<400x256xbf16, #tpu.memory_space<vmem>>, vector<16x256xbf16>
    tpu.vector_store %arg14[%c256, %c0_80], %150 {strides = array<i32>} : memref<400x256xbf16, #tpu.memory_space<vmem>>, vector<16x256xbf16>,
    %c240_i32_81 = arith.constant 240 : i32
    %152 = tpu.dynamic_rotate %3 by %c240_i32_81 dim 1 : vector<16x256xf32>, i32 -> vector<16x256xf32>
    %c17 = arith.constant 17 : index
    %c0_82 = arith.constant 0 : index
    %153 = vector.load %arg7[%c17, %c0_82] : memref<25x256xf32, #tpu.memory_space<vmem>>, vector<1x256xf32>
    %154 = vector.broadcast %153 : vector<1x256xf32> to vector<16x256xf32>
    %155 = arith.mulf %152, %154 : vector<16x256xf32>
    %156 = arith.truncf %155 : vector<16x256xf32> to vector<16x256xbf16>
    %c272 = arith.constant 272 : index
    %c0_83 = arith.constant 0 : index
    %157 = vector.load %arg14[%c272, %c0_83] : memref<400x256xbf16, #tpu.memory_space<vmem>>, vector<16x256xbf16>
    tpu.vector_store %arg14[%c272, %c0_83], %156 {strides = array<i32>} : memref<400x256xbf16, #tpu.memory_space<vmem>>, vector<16x256xbf16>,
    %c239_i32_84 = arith.constant 239 : i32
    %158 = tpu.dynamic_rotate %3 by %c239_i32_84 dim 1 : vector<16x256xf32>, i32 -> vector<16x256xf32>
    %c18 = arith.constant 18 : index
    %c0_85 = arith.constant 0 : index
    %159 = vector.load %arg7[%c18, %c0_85] : memref<25x256xf32, #tpu.memory_space<vmem>>, vector<1x256xf32>
    %160 = vector.broadcast %159 : vector<1x256xf32> to vector<16x256xf32>
    %161 = arith.mulf %158, %160 : vector<16x256xf32>
    %162 = arith.truncf %161 : vector<16x256xf32> to vector<16x256xbf16>
    %c288 = arith.constant 288 : index
    %c0_86 = arith.constant 0 : index
    %163 = vector.load %arg14[%c288, %c0_86] : memref<400x256xbf16, #tpu.memory_space<vmem>>, vector<16x256xbf16>
    tpu.vector_store %arg14[%c288, %c0_86], %162 {strides = array<i32>} : memref<400x256xbf16, #tpu.memory_space<vmem>>, vector<16x256xbf16>,
    %c238_i32 = arith.constant 238 : i32
    %164 = tpu.dynamic_rotate %3 by %c238_i32 dim 1 : vector<16x256xf32>, i32 -> vector<16x256xf32>
    %c19 = arith.constant 19 : index
    %c0_87 = arith.constant 0 : index
    %165 = vector.load %arg7[%c19, %c0_87] : memref<25x256xf32, #tpu.memory_space<vmem>>, vector<1x256xf32>
    %166 = vector.broadcast %165 : vector<1x256xf32> to vector<16x256xf32>
    %167 = arith.mulf %164, %166 : vector<16x256xf32>
    %168 = arith.truncf %167 : vector<16x256xf32> to vector<16x256xbf16>
    %c304 = arith.constant 304 : index
    %c0_88 = arith.constant 0 : index
    %169 = vector.load %arg14[%c304, %c0_88] : memref<400x256xbf16, #tpu.memory_space<vmem>>, vector<16x256xbf16>
    tpu.vector_store %arg14[%c304, %c0_88], %168 {strides = array<i32>} : memref<400x256xbf16, #tpu.memory_space<vmem>>, vector<16x256xbf16>,
    %c226_i32 = arith.constant 226 : i32
    %170 = tpu.dynamic_rotate %3 by %c226_i32 dim 1 : vector<16x256xf32>, i32 -> vector<16x256xf32>
    %c20 = arith.constant 20 : index
    %c0_89 = arith.constant 0 : index
    %171 = vector.load %arg7[%c20, %c0_89] : memref<25x256xf32, #tpu.memory_space<vmem>>, vector<1x256xf32>
    %172 = vector.broadcast %171 : vector<1x256xf32> to vector<16x256xf32>
    %173 = arith.mulf %170, %172 : vector<16x256xf32>
    %174 = arith.truncf %173 : vector<16x256xf32> to vector<16x256xbf16>
    %c320 = arith.constant 320 : index
    %c0_90 = arith.constant 0 : index
    %175 = vector.load %arg14[%c320, %c0_90] : memref<400x256xbf16, #tpu.memory_space<vmem>>, vector<16x256xbf16>
    tpu.vector_store %arg14[%c320, %c0_90], %174 {strides = array<i32>} : memref<400x256xbf16, #tpu.memory_space<vmem>>, vector<16x256xbf16>,
    %c225_i32 = arith.constant 225 : i32
    %176 = tpu.dynamic_rotate %3 by %c225_i32 dim 1 : vector<16x256xf32>, i32 -> vector<16x256xf32>
    %c21 = arith.constant 21 : index
    %c0_91 = arith.constant 0 : index
    %177 = vector.load %arg7[%c21, %c0_91] : memref<25x256xf32, #tpu.memory_space<vmem>>, vector<1x256xf32>
    %178 = vector.broadcast %177 : vector<1x256xf32> to vector<16x256xf32>
    %179 = arith.mulf %176, %178 : vector<16x256xf32>
    %180 = arith.truncf %179 : vector<16x256xf32> to vector<16x256xbf16>
    %c336 = arith.constant 336 : index
    %c0_92 = arith.constant 0 : index
    %181 = vector.load %arg14[%c336, %c0_92] : memref<400x256xbf16, #tpu.memory_space<vmem>>, vector<16x256xbf16>
    tpu.vector_store %arg14[%c336, %c0_92], %180 {strides = array<i32>} : memref<400x256xbf16, #tpu.memory_space<vmem>>, vector<16x256xbf16>,
    %c224_i32 = arith.constant 224 : i32
    %182 = tpu.dynamic_rotate %3 by %c224_i32 dim 1 : vector<16x256xf32>, i32 -> vector<16x256xf32>
    %c22 = arith.constant 22 : index
    %c0_93 = arith.constant 0 : index
    %183 = vector.load %arg7[%c22, %c0_93] : memref<25x256xf32, #tpu.memory_space<vmem>>, vector<1x256xf32>
    %184 = vector.broadcast %183 : vector<1x256xf32> to vector<16x256xf32>
    %185 = arith.mulf %182, %184 : vector<16x256xf32>
    %186 = arith.truncf %185 : vector<16x256xf32> to vector<16x256xbf16>
    %c352 = arith.constant 352 : index
    %c0_94 = arith.constant 0 : index
    %187 = vector.load %arg14[%c352, %c0_94] : memref<400x256xbf16, #tpu.memory_space<vmem>>, vector<16x256xbf16>
    tpu.vector_store %arg14[%c352, %c0_94], %186 {strides = array<i32>} : memref<400x256xbf16, #tpu.memory_space<vmem>>, vector<16x256xbf16>,
    %c223_i32 = arith.constant 223 : i32
    %188 = tpu.dynamic_rotate %3 by %c223_i32 dim 1 : vector<16x256xf32>, i32 -> vector<16x256xf32>
    %c23 = arith.constant 23 : index
    %c0_95 = arith.constant 0 : index
    %189 = vector.load %arg7[%c23, %c0_95] : memref<25x256xf32, #tpu.memory_space<vmem>>, vector<1x256xf32>
    %190 = vector.broadcast %189 : vector<1x256xf32> to vector<16x256xf32>
    %191 = arith.mulf %188, %190 : vector<16x256xf32>
    %192 = arith.truncf %191 : vector<16x256xf32> to vector<16x256xbf16>
    %c368 = arith.constant 368 : index
    %c0_96 = arith.constant 0 : index
    %193 = vector.load %arg14[%c368, %c0_96] : memref<400x256xbf16, #tpu.memory_space<vmem>>, vector<16x256xbf16>
    tpu.vector_store %arg14[%c368, %c0_96], %192 {strides = array<i32>} : memref<400x256xbf16, #tpu.memory_space<vmem>>, vector<16x256xbf16>,
    %c222_i32 = arith.constant 222 : i32
    %194 = tpu.dynamic_rotate %3 by %c222_i32 dim 1 : vector<16x256xf32>, i32 -> vector<16x256xf32>
    %c24 = arith.constant 24 : index
    %c0_97 = arith.constant 0 : index
    %195 = vector.load %arg7[%c24, %c0_97] : memref<25x256xf32, #tpu.memory_space<vmem>>, vector<1x256xf32>
    %196 = vector.broadcast %195 : vector<1x256xf32> to vector<16x256xf32>
    %197 = arith.mulf %194, %196 : vector<16x256xf32>
    %198 = arith.truncf %197 : vector<16x256xf32> to vector<16x256xbf16>
    %c384 = arith.constant 384 : index
    %c0_98 = arith.constant 0 : index
    %199 = vector.load %arg14[%c384, %c0_98] : memref<400x256xbf16, #tpu.memory_space<vmem>>, vector<16x256xbf16>
    tpu.vector_store %arg14[%c384, %c0_98], %198 {strides = array<i32>} : memref<400x256xbf16, #tpu.memory_space<vmem>>, vector<16x256xbf16>,
    %c0_99 = arith.constant 0 : index
    %c0_100 = arith.constant 0 : index
    %200 = vector.load %arg3[%c0_99, %c0_100] : memref<16x144xbf16, #tpu.memory_space<vmem>>, vector<16x144xbf16>
    %c0_101 = arith.constant 0 : index
    %c0_102 = arith.constant 0 : index
    %201 = vector.load %arg13[%c0_101, %c0_102] : memref<144x256xbf16, #tpu.memory_space<vmem>>, vector<144x256xbf16>
    %cst = arith.constant dense<0.000000e+00> : vector<16x256xf32>
    %202 = tpu.matmul %200, %201, %cst {dimension_numbers = #tpu.dot_dimension_numbers<[1], [0], [0], [1], [0, 0, 1, 1], [], []>} : vector<16x144xbf16>, vector<144x256xbf16>, vector<16x256xf32> -> vector<16x256xf32>
    %c0_103 = arith.constant 0 : index
    %c0_104 = arith.constant 0 : index
    %203 = vector.load %arg5[%c0_103, %c0_104] : memref<16x2xf32, #tpu.memory_space<vmem>>, vector<16x1xf32>
    %204 = vector.broadcast %203 : vector<16x1xf32> to vector<16x256xf32>
    %205 = arith.addf %202, %204 : vector<16x256xf32>
    %cst_105 = arith.constant 0.000000e+00 : f32
    %206 = vector.broadcast %cst_105 : f32 to vector<16x256xf32>
    %207 = arith.maximumf %205, %206 : vector<16x256xf32>
    %c0_106 = arith.constant 0 : index
    %c0_107 = arith.constant 0 : index
    %208 = vector.load %arg4[%c0_106, %c0_107] : memref<16x400xbf16, #tpu.memory_space<vmem>>, vector<16x400xbf16>
    %c0_108 = arith.constant 0 : index
    %c0_109 = arith.constant 0 : index
    %209 = vector.load %arg14[%c0_108, %c0_109] : memref<400x256xbf16, #tpu.memory_space<vmem>>, vector<400x256xbf16>
    %cst_110 = arith.constant dense<0.000000e+00> : vector<16x256xf32>
    %210 = tpu.matmul %208, %209, %cst_110 {dimension_numbers = #tpu.dot_dimension_numbers<[1], [0], [0], [1], [0, 0, 1, 1], [], []>} : vector<16x400xbf16>, vector<400x256xbf16>, vector<16x256xf32> -> vector<16x256xf32>
    %c0_111 = arith.constant 0 : index
    %c1_112 = arith.constant 1 : index
    %211 = vector.load %arg5[%c0_111, %c1_112] : memref<16x2xf32, #tpu.memory_space<vmem>>, vector<16x1xf32>
    %212 = vector.broadcast %211 : vector<16x1xf32> to vector<16x256xf32>
    %213 = arith.addf %210, %212 : vector<16x256xf32>
    %cst_113 = arith.constant 0.000000e+00 : f32
    %214 = vector.broadcast %cst_113 : f32 to vector<16x256xf32>
    %215 = arith.maximumf %213, %214 : vector<16x256xf32>
    %216 = arith.addf %207, %215 : vector<16x256xf32>
    %cst_114 = arith.constant dense<0.000000e+00> : vector<16xf32>
    %217 = vector.multi_reduction <add>, %216, %cst_114 [1] : vector<16x256xf32> to vector<16xf32>
    %218 = vector.shape_cast %217 : vector<16xf32> to vector<16x1xf32>
    %cst_115 = arith.constant 2.560000e+02 : f32
    %219 = vector.broadcast %cst_115 : f32 to vector<16x1xf32>
    %220 = arith.divf %218, %219 : vector<16x1xf32>
    %c0_116 = arith.constant 0 : index
    %c0_117 = arith.constant 0 : index
    %221 = vector.load %arg8[%c0_116, %c0_117] : memref<16x8xf32, #tpu.memory_space<vmem>>, vector<16x8xf32>
    %222 = vector.broadcast %220 : vector<16x1xf32> to vector<16x8xf32>
    %223 = arith.mulf %221, %222 : vector<16x8xf32>
    %cst_118 = arith.constant dense<0.000000e+00> : vector<8xf32>
    %224 = vector.multi_reduction <add>, %223, %cst_118 [0] : vector<16x8xf32> to vector<8xf32>
    %225 = vector.shape_cast %224 : vector<8xf32> to vector<1x8xf32>
    %c0_119 = arith.constant 0 : index
    %c0_120 = arith.constant 0 : index
    %226 = vector.load %arg9[%c0_119, %c0_120] : memref<1x8xf32, #tpu.memory_space<vmem>>, vector<1x8xf32>
    %227 = arith.addf %225, %226 : vector<1x8xf32>
    %c0_121 = arith.constant 0 : index
    %c0_122 = arith.constant 0 : index
    %c0_123 = arith.constant 0 : index
    %228 = vector.load %arg10[%c0_121, %c0_122, %c0_123] : memref<2x16x8xf32, #tpu.memory_space<vmem>>, vector<1x16x8xf32>
    %229 = vector.shape_cast %228 : vector<1x16x8xf32> to vector<16x8xf32>
    %230 = vector.broadcast %227 : vector<1x8xf32> to vector<16x8xf32>
    %231 = arith.mulf %229, %230 : vector<16x8xf32>
    %cst_124 = arith.constant dense<0.000000e+00> : vector<16xf32>
    %232 = vector.multi_reduction <add>, %231, %cst_124 [1] : vector<16x8xf32> to vector<16xf32>
    %233 = vector.shape_cast %232 : vector<16xf32> to vector<16x1xf32>
    %c0_125 = arith.constant 0 : index
    %c0_126 = arith.constant 0 : index
    %234 = vector.load %arg11[%c0_125, %c0_126] : memref<16x2xf32, #tpu.memory_space<vmem>>, vector<16x1xf32>
    %235 = arith.addf %233, %234 : vector<16x1xf32>
    %c1_127 = arith.constant 1 : index
    %c0_128 = arith.constant 0 : index
    %c0_129 = arith.constant 0 : index
    %236 = vector.load %arg10[%c1_127, %c0_128, %c0_129] : memref<2x16x8xf32, #tpu.memory_space<vmem>>, vector<1x16x8xf32>
    %237 = vector.shape_cast %236 : vector<1x16x8xf32> to vector<16x8xf32>
    %238 = vector.broadcast %227 : vector<1x8xf32> to vector<16x8xf32>
    %239 = arith.mulf %237, %238 : vector<16x8xf32>
    %cst_130 = arith.constant dense<0.000000e+00> : vector<16xf32>
    %240 = vector.multi_reduction <add>, %239, %cst_130 [1] : vector<16x8xf32> to vector<16xf32>
    %241 = vector.shape_cast %240 : vector<16xf32> to vector<16x1xf32>
    %c0_131 = arith.constant 0 : index
    %c1_132 = arith.constant 1 : index
    %242 = vector.load %arg11[%c0_131, %c1_132] : memref<16x2xf32, #tpu.memory_space<vmem>>, vector<16x1xf32>
    %243 = arith.addf %241, %242 : vector<16x1xf32>
    %244 = arith.maximumf %235, %243 : vector<16x1xf32>
    %245 = arith.subf %235, %244 : vector<16x1xf32>
    %246 = math.exp %245 : vector<16x1xf32>
    %247 = arith.subf %243, %244 : vector<16x1xf32>
    %248 = math.exp %247 : vector<16x1xf32>
    %249 = arith.addf %246, %248 : vector<16x1xf32>
    %250 = tpu.reciprocal %249 {approx = true} : vector<16x1xf32> -> vector<16x1xf32>
    %251 = arith.mulf %246, %250 : vector<16x1xf32>
    %252 = vector.broadcast %251 : vector<16x1xf32> to vector<16x256xf32>
    %253 = arith.mulf %207, %252 : vector<16x256xf32>
    %254 = arith.mulf %248, %250 : vector<16x1xf32>
    %255 = vector.broadcast %254 : vector<16x1xf32> to vector<16x256xf32>
    %256 = arith.mulf %215, %255 : vector<16x256xf32>
    %257 = arith.addf %253, %256 : vector<16x256xf32>
    %c0_133 = arith.constant 0 : index
    %c0_134 = arith.constant 0 : index
    %c0_135 = arith.constant 0 : index
    %258 = vector.load %arg12[%c0_133, %c0_134, %c0_135] : memref<1x16x256xf32, #tpu.memory_space<vmem>>, vector<1x16x256xf32>
    %259 = vector.shape_cast %258 : vector<1x16x256xf32> to vector<16x256xf32>
    %260 = vector.shape_cast %257 : vector<16x256xf32> to vector<1x16x256xf32>
    tpu.vector_store %arg12[%c0_133, %c0_134, %c0_135], %260 {strides = array<i32>} : memref<1x16x256xf32, #tpu.memory_space<vmem>>, vector<1x16x256xf32>,
    return
  }
  func.func @transform_0(%arg0: i32) -> (i32, i32, i32) {
    %c0_i32 = arith.constant 0 : i32
    %c0_i32_0 = arith.constant 0 : i32
    %c0_i32_1 = arith.constant 0 : i32
    return %arg0, %c0_i32, %c0_i32_0 : i32, i32, i32
  }
  func.func @transform_1(%arg0: i32) -> (i32, i32, i32) {
    %c0_i32 = arith.constant 0 : i32
    %c0_i32_0 = arith.constant 0 : i32
    %c0_i32_1 = arith.constant 0 : i32
    return %arg0, %c0_i32, %c0_i32_0 : i32, i32, i32
  }
  func.func @transform_2(%arg0: i32) -> (i32, i32) {
    %c0_i32 = arith.constant 0 : i32
    %c0_i32_0 = arith.constant 0 : i32
    %c0_i32_1 = arith.constant 0 : i32
    return %c0_i32, %c0_i32_0 : i32, i32
  }
  func.func @transform_3(%arg0: i32) -> (i32, i32) {
    %c0_i32 = arith.constant 0 : i32
    %c0_i32_0 = arith.constant 0 : i32
    %c0_i32_1 = arith.constant 0 : i32
    return %c0_i32, %c0_i32_0 : i32, i32
  }
  func.func @transform_4(%arg0: i32) -> (i32, i32) {
    %c0_i32 = arith.constant 0 : i32
    %c0_i32_0 = arith.constant 0 : i32
    %c0_i32_1 = arith.constant 0 : i32
    return %c0_i32, %c0_i32_0 : i32, i32
  }
  func.func @transform_5(%arg0: i32) -> (i32, i32) {
    %c0_i32 = arith.constant 0 : i32
    %c0_i32_0 = arith.constant 0 : i32
    %c0_i32_1 = arith.constant 0 : i32
    return %c0_i32, %c0_i32_0 : i32, i32
  }
  func.func @transform_6(%arg0: i32) -> (i32, i32) {
    %c0_i32 = arith.constant 0 : i32
    %c0_i32_0 = arith.constant 0 : i32
    %c0_i32_1 = arith.constant 0 : i32
    return %c0_i32, %c0_i32_0 : i32, i32
  }
  func.func @transform_7(%arg0: i32) -> (i32, i32) {
    %c0_i32 = arith.constant 0 : i32
    %c0_i32_0 = arith.constant 0 : i32
    %c0_i32_1 = arith.constant 0 : i32
    return %c0_i32, %c0_i32_0 : i32, i32
  }
  func.func @transform_8(%arg0: i32) -> (i32, i32) {
    %c0_i32 = arith.constant 0 : i32
    %c0_i32_0 = arith.constant 0 : i32
    %c0_i32_1 = arith.constant 0 : i32
    return %c0_i32, %c0_i32_0 : i32, i32
  }
  func.func @transform_9(%arg0: i32) -> (i32, i32, i32) {
    %c0_i32 = arith.constant 0 : i32
    %c0_i32_0 = arith.constant 0 : i32
    %c0_i32_1 = arith.constant 0 : i32
    %c0_i32_2 = arith.constant 0 : i32
    return %c0_i32, %c0_i32_0, %c0_i32_1 : i32, i32, i32
  }
  func.func @transform_10(%arg0: i32) -> (i32, i32) {
    %c0_i32 = arith.constant 0 : i32
    %c0_i32_0 = arith.constant 0 : i32
    %c0_i32_1 = arith.constant 0 : i32
    return %c0_i32, %c0_i32_0 : i32, i32
  }
  func.func @transform_11(%arg0: i32) -> (i32, i32, i32) {
    %c0_i32 = arith.constant 0 : i32
    %c0_i32_0 = arith.constant 0 : i32
    %c0_i32_1 = arith.constant 0 : i32
    return %arg0, %c0_i32, %c0_i32_0 : i32, i32, i32
  }
}

</mosaic_0001>

<llo_original>
// kernel: tpu_custom_call.1
$region0: #{tpu_custom_call.1}
  #allocation0 [shape = 'u32[]', space=smem, size = 0x4, offset = 0x4, fixed_abs, tag = 'smem constant byte address 0x4 - core index']
  #allocation1 [shape = 'u32[144,128]{1,0:T(1,128)}', space=vmem, size = 0x12000, scoped, tag = 'internal scratch']
  #allocation2 [shape = 'bf16[144,256]{1,0:T(8,128)(2,1)}', space=vmem, size = 0x12000, scoped, tag = 'scratch operand']
  #allocation3 [shape = 'bf16[400,256]{1,0:T(8,128)(2,1)}', space=vmem, size = 0x32000, scoped, tag = 'scratch operand']
  %s0 = inlined_call_operand.vmem [shape: f32[2,16,256], index: 0, kind: input, shape index: {}]
  %s1 = inlined_call_operand.hbm [shape: f32[2,16,256], index: 1, kind: input, shape index: {}]
  %s2 = inlined_call_operand.hbm [shape: bf16[16,144], index: 2, kind: input, shape index: {}]
  %s3 = inlined_call_operand.vmem [shape: bf16[16,400], index: 3, kind: input, shape index: {}]
  %s4 = inlined_call_operand.vmem [shape: f32[16,2], index: 4, kind: input, shape index: {}]
  %s5 = inlined_call_operand.hbm [shape: f32[9,256], index: 5, kind: input, shape index: {}]
  %s6 = inlined_call_operand.hbm [shape: f32[25,256], index: 6, kind: input, shape index: {}]
  %s7 = inlined_call_operand.vmem [shape: f32[16,8], index: 7, kind: input, shape index: {}]
  %s8 = inlined_call_operand.hbm [shape: f32[1,8], index: 8, kind: input, shape index: {}]
  %s9 = inlined_call_operand.vmem [shape: f32[2,16,8], index: 9, kind: input, shape index: {}]
  %s10 = inlined_call_operand.vmem [shape: f32[16,2], index: 10, kind: input, shape index: {}]
  %s11 = inlined_call_operand.hbm [shape: f32[2,16,256], index: 11, kind: output, shape index: {}]
  %s12 = sld [smem:[#allocation0]]
  $region97: #{tpu_custom_call.1} parent=0
    _
  %s14 = ssub.s32 1, %s12
  %s15 = scalar_select 0, %s14, %s12
  $region1: #{tpu_custom_call.1} parent=0
    #allocation4 [shape = 'u8[32768]{0}', space=vmem, size = 0x8000, scoped, tag = 'input window, operand 1']
    #allocation5 [shape = 's32[2]{0}', space=sflag, size = 0x8, scoped, tag = 'scoped memory for tpu_custom_call.1']
    #allocation6 [shape = 's32[2]{0}', space=sflag, size = 0x8, scoped, tag = 'scoped memory for tpu_custom_call.1']
    #allocation7 [shape = 'u8[8192]{0}', space=vmem, size = 0x2000, scoped, tag = 'input window, operand 2, single buffered']
    #allocation8 [shape = 's32[1]{0}', space=sflag, size = 0x4, scoped, tag = 'scoped memory for tpu_custom_call.1']
    #allocation9 [shape = 'u8[16384]{0}', space=vmem, size = 0x4000, scoped, tag = 'input window, operand 5, single buffered']
    #allocation10 [shape = 'u8[32768]{0}', space=vmem, size = 0x8000, scoped, tag = 'input window, operand 6, single buffered']
    #allocation11 [shape = 's32[1]{0}', space=sflag, size = 0x4, scoped, tag = 'scoped memory for tpu_custom_call.1']
    #allocation12 [shape = 'u8[512]{0}', space=vmem, size = 0x400, scoped, tag = 'input window, operand 8, single buffered']
    #allocation13 [shape = 'u8[32768]{0}', space=vmem, size = 0x8000, scoped, tag = 'output window, operand 0']
    %16 = vsyncpa [#allocation5], 0
    %s17 = scalar_lea.sflag [#allocation5], 1
    %18 = vsyncpa %s17, 0
    %19 = vsyncpa [#allocation8], 0
    %20 = vsyncpa [#allocation11], 0
    %21 = vsyncpa [#allocation6], 0
    %s22 = scalar_lea.sflag [#allocation6], 1
    %23 = vsyncpa %s22, 0
    loop: start=0, step=1, limit=4
    $region2: #{tpu_custom_call.1} parent=1 // loop_pre_header
      _
    $region3: #{tpu_custom_call.1} parent=1 // loop_header
      %s25 = sphi 0, %s29
      %p26 = scmp.ge.s32.totalorder %s25, 4
      %s35 = sphi 0, %s37
      %s38 = sphi 0, %s35
      %s39 = sphi 0, %s38
      %s55 = sphi 0, %s39
      %s61 = sphi 0, %s63
      %s64 = sphi 0, %s61
      %s65 = sphi 0, %s64
      %s81 = sphi 0, %s65
      %s85 = sphi 0, %s85
      %s87 = sphi 0, %s85
      %s88 = sphi 0, %s87
      %s102 = sphi 0, %s88
      %s106 = sphi 0, %s106
      %s108 = sphi 0, %s106
      %s109 = sphi 0, %s108
      %s123 = sphi 0, %s109
      %s127 = sphi 0, %s127
      %s129 = sphi 0, %s127
      %s130 = sphi 0, %s129
      %s144 = sphi 0, %s130
      %s148 = sphi 0, %s148
      %s150 = sphi 0, %s148
      %s151 = sphi 0, %s150
      %s165 = sphi 0, %s151
      %s169 = sphi 0, %s169
      %s171 = sphi 0, %s169
      %s172 = sphi 0, %s171
      %s186 = sphi 0, %s172
      %s190 = sphi 0, %s190
      %s192 = sphi 0, %s190
      %s193 = sphi 0, %s192
      %s207 = sphi 0, %s193
      %s211 = sphi 0, %s211
      %s213 = sphi 0, %s211
      %s214 = sphi 0, %s213
      %s228 = sphi 0, %s214
      %s232 = sphi 0, %s232
      %s234 = sphi 0, %s232
      %s235 = sphi 0, %s234
      %s249 = sphi 0, %s235
      %s253 = sphi 0, %s253
      %s255 = sphi 0, %s253
      %s256 = sphi 0, %s255
      %s270 = sphi 0, %s256
      %s276 = sphi 0, %s278
      %s279 = sphi 0, %s276
      %s280 = sphi 0, %s279
      %s296 = sphi 0, %s280
    $region4: #{tpu_custom_call.1} parent=1 // loop_header_branch
      %28 = sbr.rel (%p26) target = $region8
    $region5: #{tpu_custom_call.1} parent=1 // loop_body
      %s30 = ssub.s32 %s25, 1
      %s31 = ssub.s32 %s25, 2
      %s32 = sadd.s32 %s25, 1
      %s33 = ssub.s32 %s25, %s32
      %p34 = scmp.eq.s32.totalorder %s33, 0
      %s36 = sadd.s32 %s35, 1
      %s37 = scalar_select %p34, %s35, %s36
      %p40 = pneg %p34
      %p41 = scmp.eq.s32.totalorder %s25, 1
      %p42 = por %p40, %p41
      %p43 = scmp.ne.s32.totalorder %s35, %s38
      %p44 = scmp.eq.s32.totalorder %s25, 0
      %p45 = por %p43, %p44
      %p46 = scmp.ne.s32.totalorder %s35, %s38
      %p47 = scmp.eq.s32.totalorder %s30, 1
      %p48 = por %p46, %p47
      %p49 = scmp.ne.s32.totalorder %s38, %s39
      %p50 = scmp.eq.s32.totalorder %s30, 0
      %p51 = por %p49, %p50
      %p52 = scmp.ne.s32.totalorder %s38, %s39
      %p53 = scmp.eq.s32.totalorder %s31, 1
      %p54 = por %p52, %p53
      %p56 = scmp.ne.s32.totalorder %s39, %s55
      %p57 = scmp.eq.s32.totalorder %s31, 0
      %p58 = por %p56, %p57
      %s59 = ssub.s32 %s25, %s32
      %p60 = scmp.eq.s32.totalorder %s59, 0
      %s62 = sadd.s32 %s61, 1
      %s63 = scalar_select %p60, %s61, %s62
      %p66 = pneg %p60
      %p67 = scmp.eq.s32.totalorder %s25, 1
      %p68 = por %p66, %p67
      %p69 = scmp.ne.s32.totalorder %s61, %s64
      %p70 = scmp.eq.s32.totalorder %s25, 0
      %p71 = por %p69, %p70
      %p72 = scmp.ne.s32.totalorder %s61, %s64
      %p73 = scmp.eq.s32.totalorder %s30, 1
      %p74 = por %p72, %p73
      %p75 = scmp.ne.s32.totalorder %s64, %s65
      %p76 = scmp.eq.s32.totalorder %s30, 0
      %p77 = por %p75, %p76
      %p78 = scmp.ne.s32.totalorder %s64, %s65
      %p79 = scmp.eq.s32.totalorder %s31, 1
      %p80 = por %p78, %p79
      %p82 = scmp.ne.s32.totalorder %s65, %s81
      %p83 = scmp.eq.s32.totalorder %s31, 0
      %p84 = por %p82, %p83
      %s86 = sadd.s32 %s85, 1
      %p89 = scmp.eq.s32.totalorder %s25, 1
      %p90 = scmp.ne.s32.totalorder %s85, %s87
      %p91 = scmp.eq.s32.totalorder %s25, 0
      %p92 = por %p90, %p91
      %p93 = scmp.ne.s32.totalorder %s85, %s87
      %p94 = scmp.eq.s32.totalorder %s30, 1
      %p95 = por %p93, %p94
      %p96 = scmp.ne.s32.totalorder %s87, %s88
      %p97 = scmp.eq.s32.totalorder %s30, 0
      %p98 = por %p96, %p97
      %p99 = scmp.ne.s32.totalorder %s87, %s88
      %p100 = scmp.eq.s32.totalorder %s31, 1
      %p101 = por %p99, %p100
      %p103 = scmp.ne.s32.totalorder %s88, %s102
      %p104 = scmp.eq.s32.totalorder %s31, 0
      %p105 = por %p103, %p104
      %s107 = sadd.s32 %s106, 1
      %p110 = scmp.eq.s32.totalorder %s25, 1
      %p111 = scmp.ne.s32.totalorder %s106, %s108
      %p112 = scmp.eq.s32.totalorder %s25, 0
      %p113 = por %p111, %p112
      %p114 = scmp.ne.s32.totalorder %s106, %s108
      %p115 = scmp.eq.s32.totalorder %s30, 1
      %p116 = por %p114, %p115
      %p117 = scmp.ne.s32.totalorder %s108, %s109
      %p118 = scmp.eq.s32.totalorder %s30, 0
      %p119 = por %p117, %p118
      %p120 = scmp.ne.s32.totalorder %s108, %s109
      %p121 = scmp.eq.s32.totalorder %s31, 1
      %p122 = por %p120, %p121
      %p124 = scmp.ne.s32.totalorder %s109, %s123
      %p125 = scmp.eq.s32.totalorder %s31, 0
      %p126 = por %p124, %p125
      %s128 = sadd.s32 %s127, 1
      %p131 = scmp.eq.s32.totalorder %s25, 1
      %p132 = scmp.ne.s32.totalorder %s127, %s129
      %p133 = scmp.eq.s32.totalorder %s25, 0
      %p134 = por %p132, %p133
      %p135 = scmp.ne.s32.totalorder %s127, %s129
      %p136 = scmp.eq.s32.totalorder %s30, 1
      %p137 = por %p135, %p136
      %p138 = scmp.ne.s32.totalorder %s129, %s130
      %p139 = scmp.eq.s32.totalorder %s30, 0
      %p140 = por %p138, %p139
      %p141 = scmp.ne.s32.totalorder %s129, %s130
      %p142 = scmp.eq.s32.totalorder %s31, 1
      %p143 = por %p141, %p142
      %p145 = scmp.ne.s32.totalorder %s130, %s144
      %p146 = scmp.eq.s32.totalorder %s31, 0
      %p147 = por %p145, %p146
      %s149 = sadd.s32 %s148, 1
      %p152 = scmp.eq.s32.totalorder %s25, 1
      %p153 = scmp.ne.s32.totalorder %s148, %s150
      %p154 = scmp.eq.s32.totalorder %s25, 0
      %p155 = por %p153, %p154
      %p156 = scmp.ne.s32.totalorder %s148, %s150
      %p157 = scmp.eq.s32.totalorder %s30, 1
      %p158 = por %p156, %p157
      %p159 = scmp.ne.s32.totalorder %s150, %s151
      %p160 = scmp.eq.s32.totalorder %s30, 0
      %p161 = por %p159, %p160
      %p162 = scmp.ne.s32.totalorder %s150, %s151
      %p163 = scmp.eq.s32.totalorder %s31, 1
      %p164 = por %p162, %p163
      %p166 = scmp.ne.s32.totalorder %s151, %s165
      %p167 = scmp.eq.s32.totalorder %s31, 0
      %p168 = por %p166, %p167
      %s170 = sadd.s32 %s169, 1
      %p173 = scmp.eq.s32.totalorder %s25, 1
      %p174 = scmp.ne.s32.totalorder %s169, %s171
      %p175 = scmp.eq.s32.totalorder %s25, 0
      %p176 = por %p174, %p175
      %p177 = scmp.ne.s32.totalorder %s169, %s171
      %p178 = scmp.eq.s32.totalorder %s30, 1
      %p179 = por %p177, %p178
      %p180 = scmp.ne.s32.totalorder %s171, %s172
      %p181 = scmp.eq.s32.totalorder %s30, 0
      %p182 = por %p180, %p181
      %p183 = scmp.ne.s32.totalorder %s171, %s172
      %p184 = scmp.eq.s32.totalorder %s31, 1
      %p185 = por %p183, %p184
      %p187 = scmp.ne.s32.totalorder %s172, %s186
      %p188 = scmp.eq.s32.totalorder %s31, 0
      %p189 = por %p187, %p188
      %s191 = sadd.s32 %s190, 1
      %p194 = scmp.eq.s32.totalorder %s25, 1
      %p195 = scmp.ne.s32.totalorder %s190, %s192
      %p196 = scmp.eq.s32.totalorder %s25, 0
      %p197 = por %p195, %p196
      %p198 = scmp.ne.s32.totalorder %s190, %s192
      %p199 = scmp.eq.s32.totalorder %s30, 1
      %p200 = por %p198, %p199
      %p201 = scmp.ne.s32.totalorder %s192, %s193
      %p202 = scmp.eq.s32.totalorder %s30, 0
      %p203 = por %p201, %p202
      %p204 = scmp.ne.s32.totalorder %s192, %s193
      %p205 = scmp.eq.s32.totalorder %s31, 1
      %p206 = por %p204, %p205
      %p208 = scmp.ne.s32.totalorder %s193, %s207
      %p209 = scmp.eq.s32.totalorder %s31, 0
      %p210 = por %p208, %p209
      %s212 = sadd.s32 %s211, 1
      %p215 = scmp.eq.s32.totalorder %s25, 1
      %p216 = scmp.ne.s32.totalorder %s211, %s213
      %p217 = scmp.eq.s32.totalorder %s25, 0
      %p218 = por %p216, %p217
      %p219 = scmp.ne.s32.totalorder %s211, %s213
      %p220 = scmp.eq.s32.totalorder %s30, 1
      %p221 = por %p219, %p220
      %p222 = scmp.ne.s32.totalorder %s213, %s214
      %p223 = scmp.eq.s32.totalorder %s30, 0
      %p224 = por %p222, %p223
      %p225 = scmp.ne.s32.totalorder %s213, %s214
      %p226 = scmp.eq.s32.totalorder %s31, 1
      %p227 = por %p225, %p226
      %p229 = scmp.ne.s32.totalorder %s214, %s228
      %p230 = scmp.eq.s32.totalorder %s31, 0
      %p231 = por %p229, %p230
      %s233 = sadd.s32 %s232, 1
      %p236 = scmp.eq.s32.totalorder %s25, 1
      %p237 = scmp.ne.s32.totalorder %s232, %s234
      %p238 = scmp.eq.s32.totalorder %s25, 0
      %p239 = por %p237, %p238
      %p240 = scmp.ne.s32.totalorder %s232, %s234
      %p241 = scmp.eq.s32.totalorder %s30, 1
      %p242 = por %p240, %p241
      %p243 = scmp.ne.s32.totalorder %s234, %s235
      %p244 = scmp.eq.s32.totalorder %s30, 0
      %p245 = por %p243, %p244
      %p246 = scmp.ne.s32.totalorder %s234, %s235
      %p247 = scmp.eq.s32.totalorder %s31, 1
      %p248 = por %p246, %p247
      %p250 = scmp.ne.s32.totalorder %s235, %s249
      %p251 = scmp.eq.s32.totalorder %s31, 0
      %p252 = por %p250, %p251
      %s254 = sadd.s32 %s253, 1
      %p257 = scmp.eq.s32.totalorder %s25, 1
      %p258 = scmp.ne.s32.totalorder %s253, %s255
      %p259 = scmp.eq.s32.totalorder %s25, 0
      %p260 = por %p258, %p259
      %p261 = scmp.ne.s32.totalorder %s253, %s255
      %p262 = scmp.eq.s32.totalorder %s30, 1
      %p263 = por %p261, %p262
      %p264 = scmp.ne.s32.totalorder %s255, %s256
      %p265 = scmp.eq.s32.totalorder %s30, 0
      %p266 = por %p264, %p265
      %p267 = scmp.ne.s32.totalorder %s255, %s256
      %p268 = scmp.eq.s32.totalorder %s31, 1
      %p269 = por %p267, %p268
      %p271 = scmp.ne.s32.totalorder %s256, %s270
      %p272 = scmp.eq.s32.totalorder %s31, 0
      %p273 = por %p271, %p272
      %s274 = ssub.s32 %s25, %s32
      %p275 = scmp.eq.s32.totalorder %s274, 0
      %s277 = sadd.s32 %s276, 1
      %s278 = scalar_select %p275, %s276, %s277
      %p281 = pneg %p275
      %p282 = scmp.eq.s32.totalorder %s25, 1
      %p283 = por %p281, %p282
      %p284 = scmp.ne.s32.totalorder %s276, %s279
      %p285 = scmp.eq.s32.totalorder %s25, 0
      %p286 = por %p284, %p285
      %p287 = scmp.ne.s32.totalorder %s276, %s279
      %p288 = scmp.eq.s32.totalorder %s30, 1
      %p289 = por %p287, %p288
      %p290 = scmp.ne.s32.totalorder %s279, %s280
      %p291 = scmp.eq.s32.totalorder %s30, 0
      %p292 = por %p290, %p291
      %p293 = scmp.ne.s32.totalorder %s279, %s280
      %p294 = scmp.eq.s32.totalorder %s31, 1
      %p295 = por %p293, %p294
      %p297 = scmp.ne.s32.totalorder %s280, %s296
      %p298 = scmp.eq.s32.totalorder %s31, 0
      %p299 = por %p297, %p298
      %p300 = scmp.le.s32.totalorder 1, %s25
      %p301 = scmp.lt.s32.totalorder %s25, 3
      %p302 = pnand %p300, %p301
      %p303 = pneg %p302
      // Predicated region
      $region9: #{tpu_custom_call.1} parent=5 // pred_check
        _
      $region10: #{tpu_custom_call.1} parent=5 // pred_check_branch
        %305 = sbr.rel (%p302) target = $region12
      $region11: #{tpu_custom_call.1} parent=5 // pred_region
        %s306 = ssub.s32 %s25, 1
        // Predicated region
        $region13: #{tpu_custom_call.1} parent=11 // pred_check
          %p307 = pneg %p98
        $region14: #{tpu_custom_call.1} parent=11 // pred_check_branch
          %309 = sbr.rel (%p307) target = $region16
        $region15: #{tpu_custom_call.1} parent=11 // pred_region
          %s311 = ssub.s32 256, 256
          %312 = vsyncadd [#allocation8], %s311
          %s313 = sshll.u32 [#allocation7], 4
          %s314 = int_to_ptr.vmem [resolvable:$true] %s313
          %319 = dma.hbm_to_vmem [thread:$0]  %s2, 256, %s314, [#allocation8], 128, 128, 8
        $region16: #{tpu_custom_call.1} parent=11 // pred_fallthru
          _
        // Predicated region
        $region17: #{tpu_custom_call.1} parent=11 // pred_check
          %p320 = pneg %p119
        $region18: #{tpu_custom_call.1} parent=11 // pred_check_branch
          %322 = sbr.rel (%p320) target = $region20
        $region19: #{tpu_custom_call.1} parent=11 // pred_region
          _
        $region20: #{tpu_custom_call.1} parent=11 // pred_fallthru
          _
        // Predicated region
        $region21: #{tpu_custom_call.1} parent=11 // pred_check
          %p323 = pneg %p140
        $region22: #{tpu_custom_call.1} parent=11 // pred_check_branch
          %325 = sbr.rel (%p323) target = $region24
        $region23: #{tpu_custom_call.1} parent=11 // pred_region
          _
        $region24: #{tpu_custom_call.1} parent=11 // pred_fallthru
          _
        // Predicated region
        $region25: #{tpu_custom_call.1} parent=11 // pred_check
          %p326 = pneg %p161
        $region26: #{tpu_custom_call.1} parent=11 // pred_check_branch
          %328 = sbr.rel (%p326) target = $region28
        $region27: #{tpu_custom_call.1} parent=11 // pred_region
          %s330 = ssub.s32 512, 512
          %331 = vsyncadd [#allocation8], %s330
          %s332 = sshll.u32 [#allocation9], 4
          %s333 = int_to_ptr.vmem [resolvable:$true] %s332
          %338 = dma.hbm_to_vmem [thread:$0]  %s5, 512, %s333, [#allocation8], 256, 256, 16
        $region28: #{tpu_custom_call.1} parent=11 // pred_fallthru
          _
        // Predicated region
        $region29: #{tpu_custom_call.1} parent=11 // pred_check
          %p339 = pneg %p182
        $region30: #{tpu_custom_call.1} parent=11 // pred_check_branch
          %341 = sbr.rel (%p339) target = $region32
        $region31: #{tpu_custom_call.1} parent=11 // pred_region
          %s343 = ssub.s32 1024, 1024
          %344 = vsyncadd [#allocation11], %s343
          %s345 = sshll.u32 [#allocation10], 4
          %s346 = int_to_ptr.vmem [resolvable:$true] %s345
          %351 = dma.hbm_to_vmem [thread:$0]  %s6, 1024, %s346, [#allocation11], 256, 256, 16
        $region32: #{tpu_custom_call.1} parent=11 // pred_fallthru
          _
        // Predicated region
        $region33: #{tpu_custom_call.1} parent=11 // pred_check
          %p352 = pneg %p203
        $region34: #{tpu_custom_call.1} parent=11 // pred_check_branch
          %354 = sbr.rel (%p352) target = $region36
        $region35: #{tpu_custom_call.1} parent=11 // pred_region
          _
        $region36: #{tpu_custom_call.1} parent=11 // pred_fallthru
          _
        // Predicated region
        $region37: #{tpu_custom_call.1} parent=11 // pred_check
          %p355 = pneg %p224
        $region38: #{tpu_custom_call.1} parent=11 // pred_check_branch
          %357 = sbr.rel (%p355) target = $region40
        $region39: #{tpu_custom_call.1} parent=11 // pred_region
          %s359 = ssub.s32 16, 16
          %360 = vsyncadd [#allocation11], %s359
          %s362 = sshll.u32 [#allocation12], 4
          %s363 = int_to_ptr.vmem [resolvable:$true] %s362
          %365 = dma.hbm_to_vmem [thread:$0]  %s8, 16, %s363, [#allocation11]
        $region40: #{tpu_custom_call.1} parent=11 // pred_fallthru
          _
        // Predicated region
        $region41: #{tpu_custom_call.1} parent=11 // pred_check
          %p366 = pneg %p245
        $region42: #{tpu_custom_call.1} parent=11 // pred_check_branch
          %368 = sbr.rel (%p366) target = $region44
        $region43: #{tpu_custom_call.1} parent=11 // pred_region
          _
        $region44: #{tpu_custom_call.1} parent=11 // pred_fallthru
          _
        // Predicated region
        $region45: #{tpu_custom_call.1} parent=11 // pred_check
          %p369 = pneg %p266
        $region46: #{tpu_custom_call.1} parent=11 // pred_check_branch
          %371 = sbr.rel (%p369) target = $region48
        $region47: #{tpu_custom_call.1} parent=11 // pred_region
          _
        $region48: #{tpu_custom_call.1} parent=11 // pred_fallthru
          _
      $region12: #{tpu_custom_call.1} parent=5 // pred_fallthru
        _
      %p372 = scmp.lt.s32.totalorder %s25, 2
      // Predicated region
      $region49: #{tpu_custom_call.1} parent=5 // pred_check
        %p373 = pneg %p372
      $region50: #{tpu_custom_call.1} parent=5 // pred_check_branch
        %375 = sbr.rel (%p373) target = $region52
      $region51: #{tpu_custom_call.1} parent=5 // pred_region
        // Predicated region
        $region53: #{tpu_custom_call.1} parent=51 // pred_check
          %p376 = pneg %p45
        $region54: #{tpu_custom_call.1} parent=51 // pred_check_branch
          %378 = sbr.rel (%p376) target = $region56
        $region55: #{tpu_custom_call.1} parent=51 // pred_region
          %p379 = scmp.lt.s32.totalorder %s25, 1
          %s380 = scalar_select %p379, %s25, 1
          %s381 = smul.addr %s380, 4
          %s382 = smul.addr %s381, 8
          %s383 = scalar_lea.vmem %s0, %s382
        $region56: #{tpu_custom_call.1} parent=51 // pred_fallthru
          _
        // Predicated region
        $region57: #{tpu_custom_call.1} parent=51 // pred_check
          %p384 = pneg %p71
        $region58: #{tpu_custom_call.1} parent=51 // pred_check_branch
          %386 = sbr.rel (%p384) target = $region60
        $region59: #{tpu_custom_call.1} parent=51 // pred_region
          %s387 = sand.u32 %s61, 1
          %s388 = scalar_lea.sflag [#allocation5], %s387
          %s389 = sand.u32 %s61, 1
          %s390 = smul.addr %s389, 32
          %s391 = scalar_lea.vmem [#allocation4], %s390
          %s393 = ssub.s32 512, 512
          %394 = vsyncadd %s388, %s393
          %s395 = smul.addr %s25, 4
          %s396 = smul.addr %s395, 128
          %s397 = scalar_lea.hbm %s1, %s396
          %s398 = sshll.u32 %s391, 4
          %s399 = int_to_ptr.vmem [resolvable:$true] %s398
          %404 = dma.hbm_to_vmem [thread:$0]  %s397, 512, %s399, %s388, 256, 256, 16
        $region60: #{tpu_custom_call.1} parent=51 // pred_fallthru
          _
      $region52: #{tpu_custom_call.1} parent=5 // pred_fallthru
        _
      %p405 = scmp.le.s32.totalorder 1, %s25
      %p406 = scmp.lt.s32.totalorder %s25, 3
      %p407 = pnand %p405, %p406
      %p408 = pneg %p407
      // Predicated region
      $region61: #{tpu_custom_call.1} parent=5 // pred_check
        _
      $region62: #{tpu_custom_call.1} parent=5 // pred_check_branch
        %410 = sbr.rel (%p407) target = $region64
      $region63: #{tpu_custom_call.1} parent=5 // pred_region
        %s411 = ssub.s32 %s25, 1
        %s412 = sand.u32 %s64, 1
        %s413 = scalar_lea.sflag [#allocation5], %s412
        %s414 = sand.u32 %s64, 1
        %s415 = smul.addr %s414, 32
        %s416 = scalar_lea.vmem [#allocation4], %s415
        // Predicated region
        $region65: #{tpu_custom_call.1} parent=63 // pred_check
          %p417 = pneg %p77
        $region66: #{tpu_custom_call.1} parent=63 // pred_check_branch
          %419 = sbr.rel (%p417) target = $region68
        $region67: #{tpu_custom_call.1} parent=63 // pred_region
          %420 = dma.done %s413, 512
        $region68: #{tpu_custom_call.1} parent=63 // pred_fallthru
          _
        // Predicated region
        $region69: #{tpu_custom_call.1} parent=63 // pred_check
          %p421 = pneg %p98
        $region70: #{tpu_custom_call.1} parent=63 // pred_check_branch
          %423 = sbr.rel (%p421) target = $region72
        $region71: #{tpu_custom_call.1} parent=63 // pred_region
          %424 = dma.done [#allocation8], 256
        $region72: #{tpu_custom_call.1} parent=63 // pred_fallthru
          _
        // Predicated region
        $region73: #{tpu_custom_call.1} parent=63 // pred_check
          %p425 = pneg %p161
        $region74: #{tpu_custom_call.1} parent=63 // pred_check_branch
          %427 = sbr.rel (%p425) target = $region76
        $region75: #{tpu_custom_call.1} parent=63 // pred_region
          %428 = dma.done [#allocation8], 512
        $region76: #{tpu_custom_call.1} parent=63 // pred_fallthru
          _
        // Predicated region
        $region77: #{tpu_custom_call.1} parent=63 // pred_check
          %p429 = pneg %p182
        $region78: #{tpu_custom_call.1} parent=63 // pred_check_branch
          %431 = sbr.rel (%p429) target = $region80
        $region79: #{tpu_custom_call.1} parent=63 // pred_region
          %432 = dma.done [#allocation11], 1024
        $region80: #{tpu_custom_call.1} parent=63 // pred_fallthru
          _
        // Predicated region
        $region81: #{tpu_custom_call.1} parent=63 // pred_check
          %p433 = pneg %p224
        $region82: #{tpu_custom_call.1} parent=63 // pred_check_branch
          %435 = sbr.rel (%p433) target = $region84
        $region83: #{tpu_custom_call.1} parent=63 // pred_region
          %436 = dma.done [#allocation11], 16
        $region84: #{tpu_custom_call.1} parent=63 // pred_fallthru
          _
        %p437 = scmp.lt.s32.totalorder %s30, 1
        %s438 = scalar_select %p437, %s30, 1
        %s439 = smul.addr %s438, 4
        %s440 = smul.addr %s439, 8
        %s441 = scalar_lea.vmem %s0, %s440
        %p442 = pneg %p51
        %p443 = pneg %p48
        %s444 = sand.u32 %s64, 1
        %s445 = scalar_lea.sflag [#allocation5], %s444
        %s446 = sand.u32 %s64, 1
        %s447 = smul.addr %s446, 32
        %s448 = scalar_lea.vmem [#allocation4], %s447
        %p449 = pneg %p77
        %p450 = pneg %p74
        %p451 = pneg %p98
        %p452 = pneg %p95
        %p453 = pneg %p119
        %p454 = pneg %p116
        %p455 = pneg %p140
        %p456 = pneg %p137
        %p457 = pneg %p161
        %p458 = pneg %p158
        %p459 = pneg %p182
        %p460 = pneg %p179
        %p461 = pneg %p203
        %p462 = pneg %p200
        %p463 = pneg %p224
        %p464 = pneg %p221
        %p465 = pneg %p245
        %p466 = pneg %p242
        %p467 = pneg %p266
        %p468 = pneg %p263
        %p469 = pneg %p292
        %p470 = pneg %p289
        %s471 = sand.u32 %s279, 1
        %s472 = scalar_lea.sflag [#allocation6], %s471
        %s473 = sand.u32 %s279, 1
        %s474 = smul.addr %s473, 32
        %s475 = scalar_lea.vmem [#allocation13], %s474
        %p476 = scmp.lt.s32.totalorder %s30, 1
        %s477 = scalar_select %p476, %s30, 1
        %s478 = smul.addr %s477, 4
        %s479 = smul.addr %s478, 8
        %s480 = scalar_lea.vmem %s0, %s479
        %v482 = vld [vmem:[%s480] sm:$0xff]
        %v483 = vld [vmem:[%s480 + $0x8] sm:$0xff]
        %v484 = vld [vmem:[%s480 + $0x10] sm:$0xff]
        %v485 = vld [vmem:[%s480 + $0x18] sm:$0xff]
        %v486 = vld [vmem:[%s416] sm:$0xff]
        %v487 = vld [vmem:[%s416 + $0x8] sm:$0xff]
        %v488 = vld [vmem:[%s416 + $0x10] sm:$0xff]
        %v489 = vld [vmem:[%s416 + $0x18] sm:$0xff]
        %490 = vrot.lane.b32.xlu0 %v482, 17
        %v491 = vpop.permute.xlu0 %490
        %492 = vrot.lane.b32.xlu0 %v484, 17
        %v493 = vpop.permute.xlu0 %492
        %494 = vrot.lane.b32.xlu0 %v483, 17
        %v495 = vpop.permute.xlu0 %494
        %496 = vrot.lane.b32.xlu0 %v485, 17
        %v497 = vpop.permute.xlu0 %496
        %v498 = vlaneseq
        %v499 = vand.u32 %v498, 127
        %vm500 = vcmp.lt.s32.totalorder %v499, 17
        %v501 = vsel %vm500, %v491, %v495
        %v502 = vsel %vm500, %v493, %v497
        %v503 = vsel %vm500, %v495, %v491
        %v504 = vsel %vm500, %v497, %v493
        %v505 = vld [vmem:[#allocation9] ss:$8 sm:$0x3]
        %v507 = vlaneseq
        %v508 = vshrl.u32 %v507, 7
        %v509 = vsub.s32 0, %v508
        %v510 = vrot.slane %v505, %v509
        %v511 = vlaneseq
        %v512 = vshrl.u32 %v511, 7
        %v513 = vsub.s32 1, %v512
        %v514 = vrot.slane %v505, %v513
        %v517 = vmul.f32 %v503, %v510
        %v518 = vmul.f32 %v501, %v514
        %v519 = vmul.f32 %v504, %v510
        %v520 = vmul.f32 %v502, %v514
        %v521 = vpack.c.bf16 %v519, %v517
        %v522 = vpack.c.bf16 %v520, %v518
        %v525 = vunpack.c.l.b16 %v521
        %v526 = vunpack.c.l.b16 %v522
        %v527 = vunpack.c.h.b16 %v521
        %v528 = vunpack.c.h.b16 %v522
        %v529 = vpack.c.b16 %v526, %v525
        %v530 = vpack.c.b16 %v528, %v527
        %533 = vst [vmem:[#allocation2] sm:$0xff] %v529
        %534 = vst [vmem:[#allocation2 + $0x8] sm:$0xff] %v530
        %535 = vrot.lane.b32.xlu0 %v482, 16
        %v536 = vpop.permute.xlu0 %535
        %537 = vrot.lane.b32.xlu0 %v484, 16
        %v538 = vpop.permute.xlu0 %537
        %539 = vrot.lane.b32.xlu0 %v483, 16
        %v540 = vpop.permute.xlu0 %539
        %541 = vrot.lane.b32.xlu0 %v485, 16
        %v542 = vpop.permute.xlu0 %541
        %vm543 = vcmp.lt.s32.totalorder %v499, 16
        %v544 = vsel %vm543, %v536, %v540
        %v545 = vsel %vm543, %v538, %v542
        %v546 = vsel %vm543, %v540, %v536
        %v547 = vsel %vm543, %v542, %v538
        %s548 = scalar_lea.vmem [#allocation9], 1
        %v549 = vld [vmem:[%s548] ss:$8 sm:$0x3]
        %v551 = vlaneseq
        %v552 = vshrl.u32 %v551, 7
        %v553 = vsub.s32 0, %v552
        %v554 = vrot.slane %v549, %v553
        %v555 = vlaneseq
        %v556 = vshrl.u32 %v555, 7
        %v557 = vsub.s32 1, %v556
        %v558 = vrot.slane %v549, %v557
        %v561 = vmul.f32 %v546, %v554
        %v562 = vmul.f32 %v544, %v558
        %v563 = vmul.f32 %v547, %v554
        %v564 = vmul.f32 %v545, %v558
        %v565 = vpack.c.bf16 %v563, %v561
        %v566 = vpack.c.bf16 %v564, %v562
        %v569 = vunpack.c.l.b16 %v565
        %v570 = vunpack.c.l.b16 %v566
        %v571 = vunpack.c.h.b16 %v565
        %v572 = vunpack.c.h.b16 %v566
        %v573 = vpack.c.b16 %v570, %v569
        %v574 = vpack.c.b16 %v572, %v571
        %577 = vst [vmem:[#allocation2 + $0x10] sm:$0xff] %v573
        %578 = vst [vmem:[#allocation2 + $0x18] sm:$0xff] %v574
        %579 = vrot.lane.b32.xlu0 %v482, 15
        %v580 = vpop.permute.xlu0 %579
        %581 = vrot.lane.b32.xlu0 %v484, 15
        %v582 = vpop.permute.xlu0 %581
        %583 = vrot.lane.b32.xlu0 %v483, 15
        %v584 = vpop.permute.xlu0 %583
        %585 = vrot.lane.b32.xlu0 %v485, 15
        %v586 = vpop.permute.xlu0 %585
        %vm587 = vcmp.lt.s32.totalorder %v499, 15
        %v588 = vsel %vm587, %v580, %v584
        %v589 = vsel %vm587, %v582, %v586
        %v590 = vsel %vm587, %v584, %v580
        %v591 = vsel %vm587, %v586, %v582
        %s592 = scalar_lea.vmem [#allocation9], 2
        %v593 = vld [vmem:[%s592] ss:$8 sm:$0x3]
        %v595 = vlaneseq
        %v596 = vshrl.u32 %v595, 7
        %v597 = vsub.s32 0, %v596
        %v598 = vrot.slane %v593, %v597
        %v599 = vlaneseq
        %v600 = vshrl.u32 %v599, 7
        %v601 = vsub.s32 1, %v600
        %v602 = vrot.slane %v593, %v601
        %v605 = vmul.f32 %v590, %v598
        %v606 = vmul.f32 %v588, %v602
        %v607 = vmul.f32 %v591, %v598
        %v608 = vmul.f32 %v589, %v602
        %v609 = vpack.c.bf16 %v607, %v605
        %v610 = vpack.c.bf16 %v608, %v606
        %v613 = vunpack.c.l.b16 %v609
        %v614 = vunpack.c.l.b16 %v610
        %v615 = vunpack.c.h.b16 %v609
        %v616 = vunpack.c.h.b16 %v610
        %v617 = vpack.c.b16 %v614, %v613
        %v618 = vpack.c.b16 %v616, %v615
        %621 = vst [vmem:[#allocation2 + $0x20] sm:$0xff] %v617
        %622 = vst [vmem:[#allocation2 + $0x28] sm:$0xff] %v618
        %623 = vrot.lane.b32.xlu0 %v482, 1
        %v624 = vpop.permute.xlu0 %623
        %625 = vrot.lane.b32.xlu0 %v484, 1
        %v626 = vpop.permute.xlu0 %625
        %627 = vrot.lane.b32.xlu0 %v483, 1
        %v628 = vpop.permute.xlu0 %627
        %629 = vrot.lane.b32.xlu0 %v485, 1
        %v630 = vpop.permute.xlu0 %629
        %vm631 = vcmp.lt.s32.totalorder %v499, 1
        %v632 = vsel %vm631, %v624, %v628
        %v633 = vsel %vm631, %v626, %v630
        %v634 = vsel %vm631, %v628, %v624
        %v635 = vsel %vm631, %v630, %v626
        %s636 = scalar_lea.vmem [#allocation9], 3
        %v637 = vld [vmem:[%s636] ss:$8 sm:$0x3]
        %v639 = vlaneseq
        %v640 = vshrl.u32 %v639, 7
        %v641 = vsub.s32 0, %v640
        %v642 = vrot.slane %v637, %v641
        %v643 = vlaneseq
        %v644 = vshrl.u32 %v643, 7
        %v645 = vsub.s32 1, %v644
        %v646 = vrot.slane %v637, %v645
        %v649 = vmul.f32 %v634, %v642
        %v650 = vmul.f32 %v632, %v646
        %v651 = vmul.f32 %v635, %v642
        %v652 = vmul.f32 %v633, %v646
        %v653 = vpack.c.bf16 %v651, %v649
        %v654 = vpack.c.bf16 %v652, %v650
        %v657 = vunpack.c.l.b16 %v653
        %v658 = vunpack.c.l.b16 %v654
        %v659 = vunpack.c.h.b16 %v653
        %v660 = vunpack.c.h.b16 %v654
        %v661 = vpack.c.b16 %v658, %v657
        %v662 = vpack.c.b16 %v660, %v659
        %665 = vst [vmem:[#allocation2 + $0x30] sm:$0xff] %v661
        %666 = vst [vmem:[#allocation2 + $0x38] sm:$0xff] %v662
        %v667 = vpack.c.bf16 %v484, %v482
        %v668 = vpack.c.bf16 %v485, %v483
        %v671 = vunpack.c.l.b16 %v667
        %v672 = vunpack.c.l.b16 %v668
        %v673 = vunpack.c.h.b16 %v667
        %v674 = vunpack.c.h.b16 %v668
        %v675 = vpack.c.b16 %v672, %v671
        %v676 = vpack.c.b16 %v674, %v673
        %679 = vst [vmem:[#allocation2 + $0x40] sm:$0xff] %v675
        %680 = vst [vmem:[#allocation2 + $0x48] sm:$0xff] %v676
        %681 = vrot.lane.b32.xlu0 %v482, 127
        %v682 = vpop.permute.xlu0 %681
        %683 = vrot.lane.b32.xlu0 %v484, 127
        %v684 = vpop.permute.xlu0 %683
        %685 = vrot.lane.b32.xlu0 %v483, 127
        %v686 = vpop.permute.xlu0 %685
        %687 = vrot.lane.b32.xlu0 %v485, 127
        %v688 = vpop.permute.xlu0 %687
        %vm689 = vcmp.lt.s32.totalorder %v499, 127
        %v690 = vsel %vm689, %v682, %v686
        %v691 = vsel %vm689, %v684, %v688
        %v692 = vsel %vm689, %v686, %v682
        %v693 = vsel %vm689, %v688, %v684
        %s694 = scalar_lea.vmem [#allocation9], 5
        %v695 = vld [vmem:[%s694] ss:$8 sm:$0x3]
        %v697 = vlaneseq
        %v698 = vshrl.u32 %v697, 7
        %v699 = vsub.s32 0, %v698
        %v700 = vrot.slane %v695, %v699
        %v701 = vlaneseq
        %v702 = vshrl.u32 %v701, 7
        %v703 = vsub.s32 1, %v702
        %v704 = vrot.slane %v695, %v703
        %v707 = vmul.f32 %v690, %v700
        %v708 = vmul.f32 %v692, %v704
        %v709 = vmul.f32 %v691, %v700
        %v710 = vmul.f32 %v693, %v704
        %v711 = vpack.c.bf16 %v709, %v707
        %v712 = vpack.c.bf16 %v710, %v708
        %v715 = vunpack.c.l.b16 %v711
        %v716 = vunpack.c.l.b16 %v712
        %v717 = vunpack.c.h.b16 %v711
        %v718 = vunpack.c.h.b16 %v712
        %v719 = vpack.c.b16 %v716, %v715
        %v720 = vpack.c.b16 %v718, %v717
        %723 = vst [vmem:[#allocation2 + $0x50] sm:$0xff] %v719
        %724 = vst [vmem:[#allocation2 + $0x58] sm:$0xff] %v720
        %725 = vrot.lane.b32.xlu0 %v482, 113
        %v726 = vpop.permute.xlu0 %725
        %727 = vrot.lane.b32.xlu0 %v484, 113
        %v728 = vpop.permute.xlu0 %727
        %729 = vrot.lane.b32.xlu0 %v483, 113
        %v730 = vpop.permute.xlu0 %729
        %731 = vrot.lane.b32.xlu0 %v485, 113
        %v732 = vpop.permute.xlu0 %731
        %vm733 = vcmp.lt.s32.totalorder %v499, 113
        %v734 = vsel %vm733, %v726, %v730
        %v735 = vsel %vm733, %v728, %v732
        %v736 = vsel %vm733, %v730, %v726
        %v737 = vsel %vm733, %v732, %v728
        %s738 = scalar_lea.vmem [#allocation9], 6
        %v739 = vld [vmem:[%s738] ss:$8 sm:$0x3]
        %v741 = vlaneseq
        %v742 = vshrl.u32 %v741, 7
        %v743 = vsub.s32 0, %v742
        %v744 = vrot.slane %v739, %v743
        %v745 = vlaneseq
        %v746 = vshrl.u32 %v745, 7
        %v747 = vsub.s32 1, %v746
        %v748 = vrot.slane %v739, %v747
        %v751 = vmul.f32 %v734, %v744
        %v752 = vmul.f32 %v736, %v748
        %v753 = vmul.f32 %v735, %v744
        %v754 = vmul.f32 %v737, %v748
        %v755 = vpack.c.bf16 %v753, %v751
        %v756 = vpack.c.bf16 %v754, %v752
        %v759 = vunpack.c.l.b16 %v755
        %v760 = vunpack.c.l.b16 %v756
        %v761 = vunpack.c.h.b16 %v755
        %v762 = vunpack.c.h.b16 %v756
        %v763 = vpack.c.b16 %v760, %v759
        %v764 = vpack.c.b16 %v762, %v761
        %767 = vst [vmem:[#allocation2 + $0x60] sm:$0xff] %v763
        %768 = vst [vmem:[#allocation2 + $0x68] sm:$0xff] %v764
        %769 = vrot.lane.b32.xlu0 %v482, 112
        %v770 = vpop.permute.xlu0 %769
        %771 = vrot.lane.b32.xlu0 %v484, 112
        %v772 = vpop.permute.xlu0 %771
        %773 = vrot.lane.b32.xlu0 %v483, 112
        %v774 = vpop.permute.xlu0 %773
        %775 = vrot.lane.b32.xlu0 %v485, 112
        %v776 = vpop.permute.xlu0 %775
        %vm777 = vcmp.lt.s32.totalorder %v499, 112
        %v778 = vsel %vm777, %v770, %v774
        %v779 = vsel %vm777, %v772, %v776
        %v780 = vsel %vm777, %v774, %v770
        %v781 = vsel %vm777, %v776, %v772
        %s782 = scalar_lea.vmem [#allocation9], 7
        %v783 = vld [vmem:[%s782] ss:$8 sm:$0x3]
        %v785 = vlaneseq
        %v786 = vshrl.u32 %v785, 7
        %v787 = vsub.s32 0, %v786
        %v788 = vrot.slane %v783, %v787
        %v789 = vlaneseq
        %v790 = vshrl.u32 %v789, 7
        %v791 = vsub.s32 1, %v790
        %v792 = vrot.slane %v783, %v791
        %v795 = vmul.f32 %v778, %v788
        %v796 = vmul.f32 %v780, %v792
        %v797 = vmul.f32 %v779, %v788
        %v798 = vmul.f32 %v781, %v792
        %v799 = vpack.c.bf16 %v797, %v795
        %v800 = vpack.c.bf16 %v798, %v796
        %v803 = vunpack.c.l.b16 %v799
        %v804 = vunpack.c.l.b16 %v800
        %v805 = vunpack.c.h.b16 %v799
        %v806 = vunpack.c.h.b16 %v800
        %v807 = vpack.c.b16 %v804, %v803
        %v808 = vpack.c.b16 %v806, %v805
        %811 = vst [vmem:[#allocation2 + $0x70] sm:$0xff] %v807
        %812 = vst [vmem:[#allocation2 + $0x78] sm:$0xff] %v808
        %813 = vrot.lane.b32.xlu0 %v482, 111
        %v814 = vpop.permute.xlu0 %813
        %815 = vrot.lane.b32.xlu0 %v484, 111
        %v816 = vpop.permute.xlu0 %815
        %817 = vrot.lane.b32.xlu0 %v483, 111
        %v818 = vpop.permute.xlu0 %817
        %819 = vrot.lane.b32.xlu0 %v485, 111
        %v820 = vpop.permute.xlu0 %819
        %vm821 = vcmp.lt.s32.totalorder %v499, 111
        %v822 = vsel %vm821, %v814, %v818
        %v823 = vsel %vm821, %v816, %v820
        %v824 = vsel %vm821, %v818, %v814
        %v825 = vsel %vm821, %v820, %v816
        %s826 = scalar_lea.vmem [#allocation9], 16
        %v827 = vld [vmem:[%s826] ss:$8 sm:$0x3]
        %v829 = vlaneseq
        %v830 = vshrl.u32 %v829, 7
        %v831 = vsub.s32 0, %v830
        %v832 = vrot.slane %v827, %v831
        %v833 = vlaneseq
        %v834 = vshrl.u32 %v833, 7
        %v835 = vsub.s32 1, %v834
        %v836 = vrot.slane %v827, %v835
        %v839 = vmul.f32 %v822, %v832
        %v840 = vmul.f32 %v824, %v836
        %v841 = vmul.f32 %v823, %v832
        %v842 = vmul.f32 %v825, %v836
        %v843 = vpack.c.bf16 %v841, %v839
        %v844 = vpack.c.bf16 %v842, %v840
        %v847 = vunpack.c.l.b16 %v843
        %v848 = vunpack.c.l.b16 %v844
        %v849 = vunpack.c.h.b16 %v843
        %v850 = vunpack.c.h.b16 %v844
        %v851 = vpack.c.b16 %v848, %v847
        %v852 = vpack.c.b16 %v850, %v849
        %855 = vst [vmem:[#allocation2 + $0x80] sm:$0xff] %v851
        %856 = vst [vmem:[#allocation2 + $0x88] sm:$0xff] %v852
        %857 = vrot.lane.b32.xlu0 %v486, 34
        %v858 = vpop.permute.xlu0 %857
        %859 = vrot.lane.b32.xlu0 %v488, 34
        %v860 = vpop.permute.xlu0 %859
        %861 = vrot.lane.b32.xlu0 %v487, 34
        %v862 = vpop.permute.xlu0 %861
        %863 = vrot.lane.b32.xlu0 %v489, 34
        %v864 = vpop.permute.xlu0 %863
        %vm865 = vcmp.lt.s32.totalorder %v499, 34
        %v866 = vsel %vm865, %v858, %v862
        %v867 = vsel %vm865, %v860, %v864
        %v868 = vsel %vm865, %v862, %v858
        %v869 = vsel %vm865, %v864, %v860
        %v870 = vld [vmem:[#allocation10] ss:$8 sm:$0x3]
        %v872 = vlaneseq
        %v873 = vshrl.u32 %v872, 7
        %v874 = vsub.s32 0, %v873
        %v875 = vrot.slane %v870, %v874
        %v876 = vlaneseq
        %v877 = vshrl.u32 %v876, 7
        %v878 = vsub.s32 1, %v877
        %v879 = vrot.slane %v870, %v878
        %v882 = vmul.f32 %v868, %v875
        %v883 = vmul.f32 %v866, %v879
        %v884 = vmul.f32 %v869, %v875
        %v885 = vmul.f32 %v867, %v879
        %v886 = vpack.c.bf16 %v884, %v882
        %v887 = vpack.c.bf16 %v885, %v883
        %v890 = vunpack.c.l.b16 %v886
        %v891 = vunpack.c.l.b16 %v887
        %v892 = vunpack.c.h.b16 %v886
        %v893 = vunpack.c.h.b16 %v887
        %v894 = vpack.c.b16 %v891, %v890
        %v895 = vpack.c.b16 %v893, %v892
        %898 = vst [vmem:[#allocation3] sm:$0xff] %v894
        %899 = vst [vmem:[#allocation3 + $0x8] sm:$0xff] %v895
        %900 = vrot.lane.b32.xlu0 %v486, 33
        %v901 = vpop.permute.xlu0 %900
        %902 = vrot.lane.b32.xlu0 %v488, 33
        %v903 = vpop.permute.xlu0 %902
        %904 = vrot.lane.b32.xlu0 %v487, 33
        %v905 = vpop.permute.xlu0 %904
        %906 = vrot.lane.b32.xlu0 %v489, 33
        %v907 = vpop.permute.xlu0 %906
        %vm908 = vcmp.lt.s32.totalorder %v499, 33
        %v909 = vsel %vm908, %v901, %v905
        %v910 = vsel %vm908, %v903, %v907
        %v911 = vsel %vm908, %v905, %v901
        %v912 = vsel %vm908, %v907, %v903
        %s913 = scalar_lea.vmem [#allocation10], 1
        %v914 = vld [vmem:[%s913] ss:$8 sm:$0x3]
        %v916 = vlaneseq
        %v917 = vshrl.u32 %v916, 7
        %v918 = vsub.s32 0, %v917
        %v919 = vrot.slane %v914, %v918
        %v920 = vlaneseq
        %v921 = vshrl.u32 %v920, 7
        %v922 = vsub.s32 1, %v921
        %v923 = vrot.slane %v914, %v922
        %v926 = vmul.f32 %v911, %v919
        %v927 = vmul.f32 %v909, %v923
        %v928 = vmul.f32 %v912, %v919
        %v929 = vmul.f32 %v910, %v923
        %v930 = vpack.c.bf16 %v928, %v926
        %v931 = vpack.c.bf16 %v929, %v927
        %v934 = vunpack.c.l.b16 %v930
        %v935 = vunpack.c.l.b16 %v931
        %v936 = vunpack.c.h.b16 %v930
        %v937 = vunpack.c.h.b16 %v931
        %v938 = vpack.c.b16 %v935, %v934
        %v939 = vpack.c.b16 %v937, %v936
        %942 = vst [vmem:[#allocation3 + $0x10] sm:$0xff] %v938
        %943 = vst [vmem:[#allocation3 + $0x18] sm:$0xff] %v939
        %944 = vrot.lane.b32.xlu0 %v486, 32
        %v945 = vpop.permute.xlu0 %944
        %946 = vrot.lane.b32.xlu0 %v488, 32
        %v947 = vpop.permute.xlu0 %946
        %948 = vrot.lane.b32.xlu0 %v487, 32
        %v949 = vpop.permute.xlu0 %948
        %950 = vrot.lane.b32.xlu0 %v489, 32
        %v951 = vpop.permute.xlu0 %950
        %vm952 = vcmp.lt.s32.totalorder %v499, 32
        %v953 = vsel %vm952, %v945, %v949
        %v954 = vsel %vm952, %v947, %v951
        %v955 = vsel %vm952, %v949, %v945
        %v956 = vsel %vm952, %v951, %v947
        %s957 = scalar_lea.vmem [#allocation10], 2
        %v958 = vld [vmem:[%s957] ss:$8 sm:$0x3]
        %v960 = vlaneseq
        %v961 = vshrl.u32 %v960, 7
        %v962 = vsub.s32 0, %v961
        %v963 = vrot.slane %v958, %v962
        %v964 = vlaneseq
        %v965 = vshrl.u32 %v964, 7
        %v966 = vsub.s32 1, %v965
        %v967 = vrot.slane %v958, %v966
        %v970 = vmul.f32 %v955, %v963
        %v971 = vmul.f32 %v953, %v967
        %v972 = vmul.f32 %v956, %v963
        %v973 = vmul.f32 %v954, %v967
        %v974 = vpack.c.bf16 %v972, %v970
        %v975 = vpack.c.bf16 %v973, %v971
        %v978 = vunpack.c.l.b16 %v974
        %v979 = vunpack.c.l.b16 %v975
        %v980 = vunpack.c.h.b16 %v974
        %v981 = vunpack.c.h.b16 %v975
        %v982 = vpack.c.b16 %v979, %v978
        %v983 = vpack.c.b16 %v981, %v980
        %986 = vst [vmem:[#allocation3 + $0x20] sm:$0xff] %v982
        %987 = vst [vmem:[#allocation3 + $0x28] sm:$0xff] %v983
        %988 = vrot.lane.b32.xlu0 %v486, 31
        %v989 = vpop.permute.xlu0 %988
        %990 = vrot.lane.b32.xlu0 %v488, 31
        %v991 = vpop.permute.xlu0 %990
        %992 = vrot.lane.b32.xlu0 %v487, 31
        %v993 = vpop.permute.xlu0 %992
        %994 = vrot.lane.b32.xlu0 %v489, 31
        %v995 = vpop.permute.xlu0 %994
        %vm996 = vcmp.lt.s32.totalorder %v499, 31
        %v997 = vsel %vm996, %v989, %v993
        %v998 = vsel %vm996, %v991, %v995
        %v999 = vsel %vm996, %v993, %v989
        %v1000 = vsel %vm996, %v995, %v991
        %s1001 = scalar_lea.vmem [#allocation10], 3
        %v1002 = vld [vmem:[%s1001] ss:$8 sm:$0x3]
        %v1004 = vlaneseq
        %v1005 = vshrl.u32 %v1004, 7
        %v1006 = vsub.s32 0, %v1005
        %v1007 = vrot.slane %v1002, %v1006
        %v1008 = vlaneseq
        %v1009 = vshrl.u32 %v1008, 7
        %v1010 = vsub.s32 1, %v1009
        %v1011 = vrot.slane %v1002, %v1010
        %v1014 = vmul.f32 %v999, %v1007
        %v1015 = vmul.f32 %v997, %v1011
        %v1016 = vmul.f32 %v1000, %v1007
        %v1017 = vmul.f32 %v998, %v1011
        %v1018 = vpack.c.bf16 %v1016, %v1014
        %v1019 = vpack.c.bf16 %v1017, %v1015
        %v1022 = vunpack.c.l.b16 %v1018
        %v1023 = vunpack.c.l.b16 %v1019
        %v1024 = vunpack.c.h.b16 %v1018
        %v1025 = vunpack.c.h.b16 %v1019
        %v1026 = vpack.c.b16 %v1023, %v1022
        %v1027 = vpack.c.b16 %v1025, %v1024
        %1030 = vst [vmem:[#allocation3 + $0x30] sm:$0xff] %v1026
        %1031 = vst [vmem:[#allocation3 + $0x38] sm:$0xff] %v1027
        %1032 = vrot.lane.b32.xlu0 %v486, 30
        %v1033 = vpop.permute.xlu0 %1032
        %1034 = vrot.lane.b32.xlu0 %v488, 30
        %v1035 = vpop.permute.xlu0 %1034
        %1036 = vrot.lane.b32.xlu0 %v487, 30
        %v1037 = vpop.permute.xlu0 %1036
        %1038 = vrot.lane.b32.xlu0 %v489, 30
        %v1039 = vpop.permute.xlu0 %1038
        %vm1040 = vcmp.lt.s32.totalorder %v499, 30
        %v1041 = vsel %vm1040, %v1033, %v1037
        %v1042 = vsel %vm1040, %v1035, %v1039
        %v1043 = vsel %vm1040, %v1037, %v1033
        %v1044 = vsel %vm1040, %v1039, %v1035
        %s1045 = scalar_lea.vmem [#allocation10], 4
        %v1046 = vld [vmem:[%s1045] ss:$8 sm:$0x3]
        %v1048 = vlaneseq
        %v1049 = vshrl.u32 %v1048, 7
        %v1050 = vsub.s32 0, %v1049
        %v1051 = vrot.slane %v1046, %v1050
        %v1052 = vlaneseq
        %v1053 = vshrl.u32 %v1052, 7
        %v1054 = vsub.s32 1, %v1053
        %v1055 = vrot.slane %v1046, %v1054
        %v1058 = vmul.f32 %v1043, %v1051
        %v1059 = vmul.f32 %v1041, %v1055
        %v1060 = vmul.f32 %v1044, %v1051
        %v1061 = vmul.f32 %v1042, %v1055
        %v1062 = vpack.c.bf16 %v1060, %v1058
        %v1063 = vpack.c.bf16 %v1061, %v1059
        %v1066 = vunpack.c.l.b16 %v1062
        %v1067 = vunpack.c.l.b16 %v1063
        %v1068 = vunpack.c.h.b16 %v1062
        %v1069 = vunpack.c.h.b16 %v1063
        %v1070 = vpack.c.b16 %v1067, %v1066
        %v1071 = vpack.c.b16 %v1069, %v1068
        %1074 = vst [vmem:[#allocation3 + $0x40] sm:$0xff] %v1070
        %1075 = vst [vmem:[#allocation3 + $0x48] sm:$0xff] %v1071
        %1076 = vrot.lane.b32.xlu0 %v486, 18
        %v1077 = vpop.permute.xlu0 %1076
        %1078 = vrot.lane.b32.xlu0 %v488, 18
        %v1079 = vpop.permute.xlu0 %1078
        %1080 = vrot.lane.b32.xlu0 %v487, 18
        %v1081 = vpop.permute.xlu0 %1080
        %1082 = vrot.lane.b32.xlu0 %v489, 18
        %v1083 = vpop.permute.xlu0 %1082
        %vm1084 = vcmp.lt.s32.totalorder %v499, 18
        %v1085 = vsel %vm1084, %v1077, %v1081
        %v1086 = vsel %vm1084, %v1079, %v1083
        %v1087 = vsel %vm1084, %v1081, %v1077
        %v1088 = vsel %vm1084, %v1083, %v1079
        %s1089 = scalar_lea.vmem [#allocation10], 5
        %v1090 = vld [vmem:[%s1089] ss:$8 sm:$0x3]
        %v1092 = vlaneseq
        %v1093 = vshrl.u32 %v1092, 7
        %v1094 = vsub.s32 0, %v1093
        %v1095 = vrot.slane %v1090, %v1094
        %v1096 = vlaneseq
        %v1097 = vshrl.u32 %v1096, 7
        %v1098 = vsub.s32 1, %v1097
        %v1099 = vrot.slane %v1090, %v1098
        %v1102 = vmul.f32 %v1087, %v1095
        %v1103 = vmul.f32 %v1085, %v1099
        %v1104 = vmul.f32 %v1088, %v1095
        %v1105 = vmul.f32 %v1086, %v1099
        %v1106 = vpack.c.bf16 %v1104, %v1102
        %v1107 = vpack.c.bf16 %v1105, %v1103
        %v1110 = vunpack.c.l.b16 %v1106
        %v1111 = vunpack.c.l.b16 %v1107
        %v1112 = vunpack.c.h.b16 %v1106
        %v1113 = vunpack.c.h.b16 %v1107
        %v1114 = vpack.c.b16 %v1111, %v1110
        %v1115 = vpack.c.b16 %v1113, %v1112
        %1118 = vst [vmem:[#allocation3 + $0x50] sm:$0xff] %v1114
        %1119 = vst [vmem:[#allocation3 + $0x58] sm:$0xff] %v1115
        %1120 = vrot.lane.b32.xlu0 %v486, 17
        %v1121 = vpop.permute.xlu0 %1120
        %1122 = vrot.lane.b32.xlu0 %v488, 17
        %v1123 = vpop.permute.xlu0 %1122
        %1124 = vrot.lane.b32.xlu0 %v487, 17
        %v1125 = vpop.permute.xlu0 %1124
        %1126 = vrot.lane.b32.xlu0 %v489, 17
        %v1127 = vpop.permute.xlu0 %1126
        %v1128 = vsel %vm500, %v1121, %v1125
        %v1129 = vsel %vm500, %v1123, %v1127
        %v1130 = vsel %vm500, %v1125, %v1121
        %v1131 = vsel %vm500, %v1127, %v1123
        %s1132 = scalar_lea.vmem [#allocation10], 6
        %v1133 = vld [vmem:[%s1132] ss:$8 sm:$0x3]
        %v1135 = vlaneseq
        %v1136 = vshrl.u32 %v1135, 7
        %v1137 = vsub.s32 0, %v1136
        %v1138 = vrot.slane %v1133, %v1137
        %v1139 = vlaneseq
        %v1140 = vshrl.u32 %v1139, 7
        %v1141 = vsub.s32 1, %v1140
        %v1142 = vrot.slane %v1133, %v1141
        %v1145 = vmul.f32 %v1130, %v1138
        %v1146 = vmul.f32 %v1128, %v1142
        %v1147 = vmul.f32 %v1131, %v1138
        %v1148 = vmul.f32 %v1129, %v1142
        %v1149 = vpack.c.bf16 %v1147, %v1145
        %v1150 = vpack.c.bf16 %v1148, %v1146
        %v1153 = vunpack.c.l.b16 %v1149
        %v1154 = vunpack.c.l.b16 %v1150
        %v1155 = vunpack.c.h.b16 %v1149
        %v1156 = vunpack.c.h.b16 %v1150
        %v1157 = vpack.c.b16 %v1154, %v1153
        %v1158 = vpack.c.b16 %v1156, %v1155
        %1161 = vst [vmem:[#allocation3 + $0x60] sm:$0xff] %v1157
        %1162 = vst [vmem:[#allocation3 + $0x68] sm:$0xff] %v1158
        %1163 = vrot.lane.b32.xlu0 %v486, 16
        %v1164 = vpop.permute.xlu0 %1163
        %1165 = vrot.lane.b32.xlu0 %v488, 16
        %v1166 = vpop.permute.xlu0 %1165
        %1167 = vrot.lane.b32.xlu0 %v487, 16
        %v1168 = vpop.permute.xlu0 %1167
        %1169 = vrot.lane.b32.xlu0 %v489, 16
        %v1170 = vpop.permute.xlu0 %1169
        %v1171 = vsel %vm543, %v1164, %v1168
        %v1172 = vsel %vm543, %v1166, %v1170
        %v1173 = vsel %vm543, %v1168, %v1164
        %v1174 = vsel %vm543, %v1170, %v1166
        %s1175 = scalar_lea.vmem [#allocation10], 7
        %v1176 = vld [vmem:[%s1175] ss:$8 sm:$0x3]
        %v1178 = vlaneseq
        %v1179 = vshrl.u32 %v1178, 7
        %v1180 = vsub.s32 0, %v1179
        %v1181 = vrot.slane %v1176, %v1180
        %v1182 = vlaneseq
        %v1183 = vshrl.u32 %v1182, 7
        %v1184 = vsub.s32 1, %v1183
        %v1185 = vrot.slane %v1176, %v1184
        %v1188 = vmul.f32 %v1173, %v1181
        %v1189 = vmul.f32 %v1171, %v1185
        %v1190 = vmul.f32 %v1174, %v1181
        %v1191 = vmul.f32 %v1172, %v1185
        %v1192 = vpack.c.bf16 %v1190, %v1188
        %v1193 = vpack.c.bf16 %v1191, %v1189
        %v1196 = vunpack.c.l.b16 %v1192
        %v1197 = vunpack.c.l.b16 %v1193
        %v1198 = vunpack.c.h.b16 %v1192
        %v1199 = vunpack.c.h.b16 %v1193
        %v1200 = vpack.c.b16 %v1197, %v1196
        %v1201 = vpack.c.b16 %v1199, %v1198
        %1204 = vst [vmem:[#allocation3 + $0x70] sm:$0xff] %v1200
        %1205 = vst [vmem:[#allocation3 + $0x78] sm:$0xff] %v1201
        %1206 = vrot.lane.b32.xlu0 %v486, 15
        %v1207 = vpop.permute.xlu0 %1206
        %1208 = vrot.lane.b32.xlu0 %v488, 15
        %v1209 = vpop.permute.xlu0 %1208
        %1210 = vrot.lane.b32.xlu0 %v487, 15
        %v1211 = vpop.permute.xlu0 %1210
        %1212 = vrot.lane.b32.xlu0 %v489, 15
        %v1213 = vpop.permute.xlu0 %1212
        %v1214 = vsel %vm587, %v1207, %v1211
        %v1215 = vsel %vm587, %v1209, %v1213
        %v1216 = vsel %vm587, %v1211, %v1207
        %v1217 = vsel %vm587, %v1213, %v1209
        %s1218 = scalar_lea.vmem [#allocation10], 16
        %v1219 = vld [vmem:[%s1218] ss:$8 sm:$0x3]
        %v1221 = vlaneseq
        %v1222 = vshrl.u32 %v1221, 7
        %v1223 = vsub.s32 0, %v1222
        %v1224 = vrot.slane %v1219, %v1223
        %v1225 = vlaneseq
        %v1226 = vshrl.u32 %v1225, 7
        %v1227 = vsub.s32 1, %v1226
        %v1228 = vrot.slane %v1219, %v1227
        %v1231 = vmul.f32 %v1216, %v1224
        %v1232 = vmul.f32 %v1214, %v1228
        %v1233 = vmul.f32 %v1217, %v1224
        %v1234 = vmul.f32 %v1215, %v1228
        %v1235 = vpack.c.bf16 %v1233, %v1231
        %v1236 = vpack.c.bf16 %v1234, %v1232
        %v1239 = vunpack.c.l.b16 %v1235
        %v1240 = vunpack.c.l.b16 %v1236
        %v1241 = vunpack.c.h.b16 %v1235
        %v1242 = vunpack.c.h.b16 %v1236
        %v1243 = vpack.c.b16 %v1240, %v1239
        %v1244 = vpack.c.b16 %v1242, %v1241
        %1247 = vst [vmem:[#allocation3 + $0x80] sm:$0xff] %v1243
        %1248 = vst [vmem:[#allocation3 + $0x88] sm:$0xff] %v1244
        %1249 = vrot.lane.b32.xlu0 %v486, 14
        %v1250 = vpop.permute.xlu0 %1249
        %1251 = vrot.lane.b32.xlu0 %v488, 14
        %v1252 = vpop.permute.xlu0 %1251
        %1253 = vrot.lane.b32.xlu0 %v487, 14
        %v1254 = vpop.permute.xlu0 %1253
        %1255 = vrot.lane.b32.xlu0 %v489, 14
        %v1256 = vpop.permute.xlu0 %1255
        %vm1257 = vcmp.lt.s32.totalorder %v499, 14
        %v1258 = vsel %vm1257, %v1250, %v1254
        %v1259 = vsel %vm1257, %v1252, %v1256
        %v1260 = vsel %vm1257, %v1254, %v1250
        %v1261 = vsel %vm1257, %v1256, %v1252
        %s1262 = scalar_lea.vmem [#allocation10], 17
        %v1263 = vld [vmem:[%s1262] ss:$8 sm:$0x3]
        %v1265 = vlaneseq
        %v1266 = vshrl.u32 %v1265, 7
        %v1267 = vsub.s32 0, %v1266
        %v1268 = vrot.slane %v1263, %v1267
        %v1269 = vlaneseq
        %v1270 = vshrl.u32 %v1269, 7
        %v1271 = vsub.s32 1, %v1270
        %v1272 = vrot.slane %v1263, %v1271
        %v1275 = vmul.f32 %v1260, %v1268
        %v1276 = vmul.f32 %v1258, %v1272
        %v1277 = vmul.f32 %v1261, %v1268
        %v1278 = vmul.f32 %v1259, %v1272
        %v1279 = vpack.c.bf16 %v1277, %v1275
        %v1280 = vpack.c.bf16 %v1278, %v1276
        %v1283 = vunpack.c.l.b16 %v1279
        %v1284 = vunpack.c.l.b16 %v1280
        %v1285 = vunpack.c.h.b16 %v1279
        %v1286 = vunpack.c.h.b16 %v1280
        %v1287 = vpack.c.b16 %v1284, %v1283
        %v1288 = vpack.c.b16 %v1286, %v1285
        %1291 = vst [vmem:[#allocation3 + $0x90] sm:$0xff] %v1287
        %1292 = vst [vmem:[#allocation3 + $0x98] sm:$0xff] %v1288
        %1293 = vrot.lane.b32.xlu0 %v486, 2
        %v1294 = vpop.permute.xlu0 %1293
        %1295 = vrot.lane.b32.xlu0 %v488, 2
        %v1296 = vpop.permute.xlu0 %1295
        %1297 = vrot.lane.b32.xlu0 %v487, 2
        %v1298 = vpop.permute.xlu0 %1297
        %1299 = vrot.lane.b32.xlu0 %v489, 2
        %v1300 = vpop.permute.xlu0 %1299
        %vm1301 = vcmp.lt.s32.totalorder %v499, 2
        %v1302 = vsel %vm1301, %v1294, %v1298
        %v1303 = vsel %vm1301, %v1296, %v1300
        %v1304 = vsel %vm1301, %v1298, %v1294
        %v1305 = vsel %vm1301, %v1300, %v1296
        %s1306 = scalar_lea.vmem [#allocation10], 18
        %v1307 = vld [vmem:[%s1306] ss:$8 sm:$0x3]
        %v1309 = vlaneseq
        %v1310 = vshrl.u32 %v1309, 7
        %v1311 = vsub.s32 0, %v1310
        %v1312 = vrot.slane %v1307, %v1311
        %v1313 = vlaneseq
        %v1314 = vshrl.u32 %v1313, 7
        %v1315 = vsub.s32 1, %v1314
        %v1316 = vrot.slane %v1307, %v1315
        %v1319 = vmul.f32 %v1304, %v1312
        %v1320 = vmul.f32 %v1302, %v1316
        %v1321 = vmul.f32 %v1305, %v1312
        %v1322 = vmul.f32 %v1303, %v1316
        %v1323 = vpack.c.bf16 %v1321, %v1319
        %v1324 = vpack.c.bf16 %v1322, %v1320
        %v1327 = vunpack.c.l.b16 %v1323
        %v1328 = vunpack.c.l.b16 %v1324
        %v1329 = vunpack.c.h.b16 %v1323
        %v1330 = vunpack.c.h.b16 %v1324
        %v1331 = vpack.c.b16 %v1328, %v1327
        %v1332 = vpack.c.b16 %v1330, %v1329
        %1335 = vst [vmem:[#allocation3 + $0xa0] sm:$0xff] %v1331
        %1336 = vst [vmem:[#allocation3 + $0xa8] sm:$0xff] %v1332
        %1337 = vrot.lane.b32.xlu0 %v486, 1
        %v1338 = vpop.permute.xlu0 %1337
        %1339 = vrot.lane.b32.xlu0 %v488, 1
        %v1340 = vpop.permute.xlu0 %1339
        %1341 = vrot.lane.b32.xlu0 %v487, 1
        %v1342 = vpop.permute.xlu0 %1341
        %1343 = vrot.lane.b32.xlu0 %v489, 1
        %v1344 = vpop.permute.xlu0 %1343
        %v1345 = vsel %vm631, %v1338, %v1342
        %v1346 = vsel %vm631, %v1340, %v1344
        %v1347 = vsel %vm631, %v1342, %v1338
        %v1348 = vsel %vm631, %v1344, %v1340
        %s1349 = scalar_lea.vmem [#allocation10], 19
        %v1350 = vld [vmem:[%s1349] ss:$8 sm:$0x3]
        %v1352 = vlaneseq
        %v1353 = vshrl.u32 %v1352, 7
        %v1354 = vsub.s32 0, %v1353
        %v1355 = vrot.slane %v1350, %v1354
        %v1356 = vlaneseq
        %v1357 = vshrl.u32 %v1356, 7
        %v1358 = vsub.s32 1, %v1357
        %v1359 = vrot.slane %v1350, %v1358
        %v1362 = vmul.f32 %v1347, %v1355
        %v1363 = vmul.f32 %v1345, %v1359
        %v1364 = vmul.f32 %v1348, %v1355
        %v1365 = vmul.f32 %v1346, %v1359
        %v1366 = vpack.c.bf16 %v1364, %v1362
        %v1367 = vpack.c.bf16 %v1365, %v1363
        %v1370 = vunpack.c.l.b16 %v1366
        %v1371 = vunpack.c.l.b16 %v1367
        %v1372 = vunpack.c.h.b16 %v1366
        %v1373 = vunpack.c.h.b16 %v1367
        %v1374 = vpack.c.b16 %v1371, %v1370
        %v1375 = vpack.c.b16 %v1373, %v1372
        %1378 = vst [vmem:[#allocation3 + $0xb0] sm:$0xff] %v1374
        %1379 = vst [vmem:[#allocation3 + $0xb8] sm:$0xff] %v1375
        %v1380 = vpack.c.bf16 %v488, %v486
        %v1381 = vpack.c.bf16 %v489, %v487
        %v1384 = vunpack.c.l.b16 %v1380
        %v1385 = vunpack.c.l.b16 %v1381
        %v1386 = vunpack.c.h.b16 %v1380
        %v1387 = vunpack.c.h.b16 %v1381
        %v1388 = vpack.c.b16 %v1385, %v1384
        %v1389 = vpack.c.b16 %v1387, %v1386
        %1392 = vst [vmem:[#allocation3 + $0xc0] sm:$0xff] %v1388
        %1393 = vst [vmem:[#allocation3 + $0xc8] sm:$0xff] %v1389
        %1394 = vrot.lane.b32.xlu0 %v486, 127
        %v1395 = vpop.permute.xlu0 %1394
        %1396 = vrot.lane.b32.xlu0 %v488, 127
        %v1397 = vpop.permute.xlu0 %1396
        %1398 = vrot.lane.b32.xlu0 %v487, 127
        %v1399 = vpop.permute.xlu0 %1398
        %1400 = vrot.lane.b32.xlu0 %v489, 127
        %v1401 = vpop.permute.xlu0 %1400
        %v1402 = vsel %vm689, %v1395, %v1399
        %v1403 = vsel %vm689, %v1397, %v1401
        %v1404 = vsel %vm689, %v1399, %v1395
        %v1405 = vsel %vm689, %v1401, %v1397
        %s1406 = scalar_lea.vmem [#allocation10], 21
        %v1407 = vld [vmem:[%s1406] ss:$8 sm:$0x3]
        %v1409 = vlaneseq
        %v1410 = vshrl.u32 %v1409, 7
        %v1411 = vsub.s32 0, %v1410
        %v1412 = vrot.slane %v1407, %v1411
        %v1413 = vlaneseq
        %v1414 = vshrl.u32 %v1413, 7
        %v1415 = vsub.s32 1, %v1414
        %v1416 = vrot.slane %v1407, %v1415
        %v1419 = vmul.f32 %v1402, %v1412
        %v1420 = vmul.f32 %v1404, %v1416
        %v1421 = vmul.f32 %v1403, %v1412
        %v1422 = vmul.f32 %v1405, %v1416
        %v1423 = vpack.c.bf16 %v1421, %v1419
        %v1424 = vpack.c.bf16 %v1422, %v1420
        %v1427 = vunpack.c.l.b16 %v1423
        %v1428 = vunpack.c.l.b16 %v1424
        %v1429 = vunpack.c.h.b16 %v1423
        %v1430 = vunpack.c.h.b16 %v1424
        %v1431 = vpack.c.b16 %v1428, %v1427
        %v1432 = vpack.c.b16 %v1430, %v1429
        %1435 = vst [vmem:[#allocation3 + $0xd0] sm:$0xff] %v1431
        %1436 = vst [vmem:[#allocation3 + $0xd8] sm:$0xff] %v1432
        %1437 = vrot.lane.b32.xlu0 %v486, 126
        %v1438 = vpop.permute.xlu0 %1437
        %1439 = vrot.lane.b32.xlu0 %v488, 126
        %v1440 = vpop.permute.xlu0 %1439
        %1441 = vrot.lane.b32.xlu0 %v487, 126
        %v1442 = vpop.permute.xlu0 %1441
        %1443 = vrot.lane.b32.xlu0 %v489, 126
        %v1444 = vpop.permute.xlu0 %1443
        %vm1445 = vcmp.lt.s32.totalorder %v499, 126
        %v1446 = vsel %vm1445, %v1438, %v1442
        %v1447 = vsel %vm1445, %v1440, %v1444
        %v1448 = vsel %vm1445, %v1442, %v1438
        %v1449 = vsel %vm1445, %v1444, %v1440
        %s1450 = scalar_lea.vmem [#allocation10], 22
        %v1451 = vld [vmem:[%s1450] ss:$8 sm:$0x3]
        %v1453 = vlaneseq
        %v1454 = vshrl.u32 %v1453, 7
        %v1455 = vsub.s32 0, %v1454
        %v1456 = vrot.slane %v1451, %v1455
        %v1457 = vlaneseq
        %v1458 = vshrl.u32 %v1457, 7
        %v1459 = vsub.s32 1, %v1458
        %v1460 = vrot.slane %v1451, %v1459
        %v1463 = vmul.f32 %v1446, %v1456
        %v1464 = vmul.f32 %v1448, %v1460
        %v1465 = vmul.f32 %v1447, %v1456
        %v1466 = vmul.f32 %v1449, %v1460
        %v1467 = vpack.c.bf16 %v1465, %v1463
        %v1468 = vpack.c.bf16 %v1466, %v1464
        %v1471 = vunpack.c.l.b16 %v1467
        %v1472 = vunpack.c.l.b16 %v1468
        %v1473 = vunpack.c.h.b16 %v1467
        %v1474 = vunpack.c.h.b16 %v1468
        %v1475 = vpack.c.b16 %v1472, %v1471
        %v1476 = vpack.c.b16 %v1474, %v1473
        %1479 = vst [vmem:[#allocation3 + $0xe0] sm:$0xff] %v1475
        %1480 = vst [vmem:[#allocation3 + $0xe8] sm:$0xff] %v1476
        %1481 = vrot.lane.b32.xlu0 %v486, 114
        %v1482 = vpop.permute.xlu0 %1481
        %1483 = vrot.lane.b32.xlu0 %v488, 114
        %v1484 = vpop.permute.xlu0 %1483
        %1485 = vrot.lane.b32.xlu0 %v487, 114
        %v1486 = vpop.permute.xlu0 %1485
        %1487 = vrot.lane.b32.xlu0 %v489, 114
        %v1488 = vpop.permute.xlu0 %1487
        %vm1489 = vcmp.lt.s32.totalorder %v499, 114
        %v1490 = vsel %vm1489, %v1482, %v1486
        %v1491 = vsel %vm1489, %v1484, %v1488
        %v1492 = vsel %vm1489, %v1486, %v1482
        %v1493 = vsel %vm1489, %v1488, %v1484
        %s1494 = scalar_lea.vmem [#allocation10], 23
        %v1495 = vld [vmem:[%s1494] ss:$8 sm:$0x3]
        %v1497 = vlaneseq
        %v1498 = vshrl.u32 %v1497, 7
        %v1499 = vsub.s32 0, %v1498
        %v1500 = vrot.slane %v1495, %v1499
        %v1501 = vlaneseq
        %v1502 = vshrl.u32 %v1501, 7
        %v1503 = vsub.s32 1, %v1502
        %v1504 = vrot.slane %v1495, %v1503
        %v1507 = vmul.f32 %v1490, %v1500
        %v1508 = vmul.f32 %v1492, %v1504
        %v1509 = vmul.f32 %v1491, %v1500
        %v1510 = vmul.f32 %v1493, %v1504
        %v1511 = vpack.c.bf16 %v1509, %v1507
        %v1512 = vpack.c.bf16 %v1510, %v1508
        %v1515 = vunpack.c.l.b16 %v1511
        %v1516 = vunpack.c.l.b16 %v1512
        %v1517 = vunpack.c.h.b16 %v1511
        %v1518 = vunpack.c.h.b16 %v1512
        %v1519 = vpack.c.b16 %v1516, %v1515
        %v1520 = vpack.c.b16 %v1518, %v1517
        %1523 = vst [vmem:[#allocation3 + $0xf0] sm:$0xff] %v1519
        %1524 = vst [vmem:[#allocation3 + $0xf8] sm:$0xff] %v1520
        %1525 = vrot.lane.b32.xlu0 %v486, 113
        %v1526 = vpop.permute.xlu0 %1525
        %1527 = vrot.lane.b32.xlu0 %v488, 113
        %v1528 = vpop.permute.xlu0 %1527
        %1529 = vrot.lane.b32.xlu0 %v487, 113
        %v1530 = vpop.permute.xlu0 %1529
        %1531 = vrot.lane.b32.xlu0 %v489, 113
        %v1532 = vpop.permute.xlu0 %1531
        %v1533 = vsel %vm733, %v1526, %v1530
        %v1534 = vsel %vm733, %v1528, %v1532
        %v1535 = vsel %vm733, %v1530, %v1526
        %v1536 = vsel %vm733, %v1532, %v1528
        %s1537 = scalar_lea.vmem [#allocation10], 32
        %v1538 = vld [vmem:[%s1537] ss:$8 sm:$0x3]
        %v1540 = vlaneseq
        %v1541 = vshrl.u32 %v1540, 7
        %v1542 = vsub.s32 0, %v1541
        %v1543 = vrot.slane %v1538, %v1542
        %v1544 = vlaneseq
        %v1545 = vshrl.u32 %v1544, 7
        %v1546 = vsub.s32 1, %v1545
        %v1547 = vrot.slane %v1538, %v1546
        %v1550 = vmul.f32 %v1533, %v1543
        %v1551 = vmul.f32 %v1535, %v1547
        %v1552 = vmul.f32 %v1534, %v1543
        %v1553 = vmul.f32 %v1536, %v1547
        %v1554 = vpack.c.bf16 %v1552, %v1550
        %v1555 = vpack.c.bf16 %v1553, %v1551
        %v1558 = vunpack.c.l.b16 %v1554
        %v1559 = vunpack.c.l.b16 %v1555
        %v1560 = vunpack.c.h.b16 %v1554
        %v1561 = vunpack.c.h.b16 %v1555
        %v1562 = vpack.c.b16 %v1559, %v1558
        %v1563 = vpack.c.b16 %v1561, %v1560
        %1566 = vst [vmem:[#allocation3 + $0x100] sm:$0xff] %v1562
        %1567 = vst [vmem:[#allocation3 + $0x108] sm:$0xff] %v1563
        %1568 = vrot.lane.b32.xlu0 %v486, 112
        %v1569 = vpop.permute.xlu0 %1568
        %1570 = vrot.lane.b32.xlu0 %v488, 112
        %v1571 = vpop.permute.xlu0 %1570
        %1572 = vrot.lane.b32.xlu0 %v487, 112
        %v1573 = vpop.permute.xlu0 %1572
        %1574 = vrot.lane.b32.xlu0 %v489, 112
        %v1575 = vpop.permute.xlu0 %1574
        %v1576 = vsel %vm777, %v1569, %v1573
        %v1577 = vsel %vm777, %v1571, %v1575
        %v1578 = vsel %vm777, %v1573, %v1569
        %v1579 = vsel %vm777, %v1575, %v1571
        %s1580 = scalar_lea.vmem [#allocation10], 33
        %v1581 = vld [vmem:[%s1580] ss:$8 sm:$0x3]
        %v1583 = vlaneseq
        %v1584 = vshrl.u32 %v1583, 7
        %v1585 = vsub.s32 0, %v1584
        %v1586 = vrot.slane %v1581, %v1585
        %v1587 = vlaneseq
        %v1588 = vshrl.u32 %v1587, 7
        %v1589 = vsub.s32 1, %v1588
        %v1590 = vrot.slane %v1581, %v1589
        %v1593 = vmul.f32 %v1576, %v1586
        %v1594 = vmul.f32 %v1578, %v1590
        %v1595 = vmul.f32 %v1577, %v1586
        %v1596 = vmul.f32 %v1579, %v1590
        %v1597 = vpack.c.bf16 %v1595, %v1593
        %v1598 = vpack.c.bf16 %v1596, %v1594
        %v1601 = vunpack.c.l.b16 %v1597
        %v1602 = vunpack.c.l.b16 %v1598
        %v1603 = vunpack.c.h.b16 %v1597
        %v1604 = vunpack.c.h.b16 %v1598
        %v1605 = vpack.c.b16 %v1602, %v1601
        %v1606 = vpack.c.b16 %v1604, %v1603
        %1609 = vst [vmem:[#allocation3 + $0x110] sm:$0xff] %v1605
        %1610 = vst [vmem:[#allocation3 + $0x118] sm:$0xff] %v1606
        %1611 = vrot.lane.b32.xlu0 %v486, 111
        %v1612 = vpop.permute.xlu0 %1611
        %1613 = vrot.lane.b32.xlu0 %v488, 111
        %v1614 = vpop.permute.xlu0 %1613
        %1615 = vrot.lane.b32.xlu0 %v487, 111
        %v1616 = vpop.permute.xlu0 %1615
        %1617 = vrot.lane.b32.xlu0 %v489, 111
        %v1618 = vpop.permute.xlu0 %1617
        %v1619 = vsel %vm821, %v1612, %v1616
        %v1620 = vsel %vm821, %v1614, %v1618
        %v1621 = vsel %vm821, %v1616, %v1612
        %v1622 = vsel %vm821, %v1618, %v1614
        %s1623 = scalar_lea.vmem [#allocation10], 34
        %v1624 = vld [vmem:[%s1623] ss:$8 sm:$0x3]
        %v1626 = vlaneseq
        %v1627 = vshrl.u32 %v1626, 7
        %v1628 = vsub.s32 0, %v1627
        %v1629 = vrot.slane %v1624, %v1628
        %v1630 = vlaneseq
        %v1631 = vshrl.u32 %v1630, 7
        %v1632 = vsub.s32 1, %v1631
        %v1633 = vrot.slane %v1624, %v1632
        %v1636 = vmul.f32 %v1619, %v1629
        %v1637 = vmul.f32 %v1621, %v1633
        %v1638 = vmul.f32 %v1620, %v1629
        %v1639 = vmul.f32 %v1622, %v1633
        %v1640 = vpack.c.bf16 %v1638, %v1636
        %v1641 = vpack.c.bf16 %v1639, %v1637
        %v1644 = vunpack.c.l.b16 %v1640
        %v1645 = vunpack.c.l.b16 %v1641
        %v1646 = vunpack.c.h.b16 %v1640
        %v1647 = vunpack.c.h.b16 %v1641
        %v1648 = vpack.c.b16 %v1645, %v1644
        %v1649 = vpack.c.b16 %v1647, %v1646
        %1652 = vst [vmem:[#allocation3 + $0x120] sm:$0xff] %v1648
        %1653 = vst [vmem:[#allocation3 + $0x128] sm:$0xff] %v1649
        %1654 = vrot.lane.b32.xlu0 %v486, 110
        %v1655 = vpop.permute.xlu0 %1654
        %1656 = vrot.lane.b32.xlu0 %v488, 110
        %v1657 = vpop.permute.xlu0 %1656
        %1658 = vrot.lane.b32.xlu0 %v487, 110
        %v1659 = vpop.permute.xlu0 %1658
        %1660 = vrot.lane.b32.xlu0 %v489, 110
        %v1661 = vpop.permute.xlu0 %1660
        %vm1662 = vcmp.lt.s32.totalorder %v499, 110
        %v1663 = vsel %vm1662, %v1655, %v1659
        %v1664 = vsel %vm1662, %v1657, %v1661
        %v1665 = vsel %vm1662, %v1659, %v1655
        %v1666 = vsel %vm1662, %v1661, %v1657
        %s1667 = scalar_lea.vmem [#allocation10], 35
        %v1668 = vld [vmem:[%s1667] ss:$8 sm:$0x3]
        %v1670 = vlaneseq
        %v1671 = vshrl.u32 %v1670, 7
        %v1672 = vsub.s32 0, %v1671
        %v1673 = vrot.slane %v1668, %v1672
        %v1674 = vlaneseq
        %v1675 = vshrl.u32 %v1674, 7
        %v1676 = vsub.s32 1, %v1675
        %v1677 = vrot.slane %v1668, %v1676
        %v1680 = vmul.f32 %v1663, %v1673
        %v1681 = vmul.f32 %v1665, %v1677
        %v1682 = vmul.f32 %v1664, %v1673
        %v1683 = vmul.f32 %v1666, %v1677
        %v1684 = vpack.c.bf16 %v1682, %v1680
        %v1685 = vpack.c.bf16 %v1683, %v1681
        %v1688 = vunpack.c.l.b16 %v1684
        %v1689 = vunpack.c.l.b16 %v1685
        %v1690 = vunpack.c.h.b16 %v1684
        %v1691 = vunpack.c.h.b16 %v1685
        %v1692 = vpack.c.b16 %v1689, %v1688
        %v1693 = vpack.c.b16 %v1691, %v1690
        %1696 = vst [vmem:[#allocation3 + $0x130] sm:$0xff] %v1692
        %1697 = vst [vmem:[#allocation3 + $0x138] sm:$0xff] %v1693
        %1698 = vrot.lane.b32.xlu0 %v486, 98
        %v1699 = vpop.permute.xlu0 %1698
        %1700 = vrot.lane.b32.xlu0 %v488, 98
        %v1701 = vpop.permute.xlu0 %1700
        %1702 = vrot.lane.b32.xlu0 %v487, 98
        %v1703 = vpop.permute.xlu0 %1702
        %1704 = vrot.lane.b32.xlu0 %v489, 98
        %v1705 = vpop.permute.xlu0 %1704
        %vm1706 = vcmp.lt.s32.totalorder %v499, 98
        %v1707 = vsel %vm1706, %v1699, %v1703
        %v1708 = vsel %vm1706, %v1701, %v1705
        %v1709 = vsel %vm1706, %v1703, %v1699
        %v1710 = vsel %vm1706, %v1705, %v1701
        %s1711 = scalar_lea.vmem [#allocation10], 36
        %v1712 = vld [vmem:[%s1711] ss:$8 sm:$0x3]
        %v1714 = vlaneseq
        %v1715 = vshrl.u32 %v1714, 7
        %v1716 = vsub.s32 0, %v1715
        %v1717 = vrot.slane %v1712, %v1716
        %v1718 = vlaneseq
        %v1719 = vshrl.u32 %v1718, 7
        %v1720 = vsub.s32 1, %v1719
        %v1721 = vrot.slane %v1712, %v1720
        %v1724 = vmul.f32 %v1707, %v1717
        %v1725 = vmul.f32 %v1709, %v1721
        %v1726 = vmul.f32 %v1708, %v1717
        %v1727 = vmul.f32 %v1710, %v1721
        %v1728 = vpack.c.bf16 %v1726, %v1724
        %v1729 = vpack.c.bf16 %v1727, %v1725
        %v1732 = vunpack.c.l.b16 %v1728
        %v1733 = vunpack.c.l.b16 %v1729
        %v1734 = vunpack.c.h.b16 %v1728
        %v1735 = vunpack.c.h.b16 %v1729
        %v1736 = vpack.c.b16 %v1733, %v1732
        %v1737 = vpack.c.b16 %v1735, %v1734
        %1740 = vst [vmem:[#allocation3 + $0x140] sm:$0xff] %v1736
        %1741 = vst [vmem:[#allocation3 + $0x148] sm:$0xff] %v1737
        %1742 = vrot.lane.b32.xlu0 %v486, 97
        %v1743 = vpop.permute.xlu0 %1742
        %1744 = vrot.lane.b32.xlu0 %v488, 97
        %v1745 = vpop.permute.xlu0 %1744
        %1746 = vrot.lane.b32.xlu0 %v487, 97
        %v1747 = vpop.permute.xlu0 %1746
        %1748 = vrot.lane.b32.xlu0 %v489, 97
        %v1749 = vpop.permute.xlu0 %1748
        %vm1750 = vcmp.lt.s32.totalorder %v499, 97
        %v1751 = vsel %vm1750, %v1743, %v1747
        %v1752 = vsel %vm1750, %v1745, %v1749
        %v1753 = vsel %vm1750, %v1747, %v1743
        %v1754 = vsel %vm1750, %v1749, %v1745
        %s1755 = scalar_lea.vmem [#allocation10], 37
        %v1756 = vld [vmem:[%s1755] ss:$8 sm:$0x3]
        %v1758 = vlaneseq
        %v1759 = vshrl.u32 %v1758, 7
        %v1760 = vsub.s32 0, %v1759
        %v1761 = vrot.slane %v1756, %v1760
        %v1762 = vlaneseq
        %v1763 = vshrl.u32 %v1762, 7
        %v1764 = vsub.s32 1, %v1763
        %v1765 = vrot.slane %v1756, %v1764
        %v1768 = vmul.f32 %v1751, %v1761
        %v1769 = vmul.f32 %v1753, %v1765
        %v1770 = vmul.f32 %v1752, %v1761
        %v1771 = vmul.f32 %v1754, %v1765
        %v1772 = vpack.c.bf16 %v1770, %v1768
        %v1773 = vpack.c.bf16 %v1771, %v1769
        %v1776 = vunpack.c.l.b16 %v1772
        %v1777 = vunpack.c.l.b16 %v1773
        %v1778 = vunpack.c.h.b16 %v1772
        %v1779 = vunpack.c.h.b16 %v1773
        %v1780 = vpack.c.b16 %v1777, %v1776
        %v1781 = vpack.c.b16 %v1779, %v1778
        %1784 = vst [vmem:[#allocation3 + $0x150] sm:$0xff] %v1780
        %1785 = vst [vmem:[#allocation3 + $0x158] sm:$0xff] %v1781
        %1786 = vrot.lane.b32.xlu0 %v486, 96
        %v1787 = vpop.permute.xlu0 %1786
        %1788 = vrot.lane.b32.xlu0 %v488, 96
        %v1789 = vpop.permute.xlu0 %1788
        %1790 = vrot.lane.b32.xlu0 %v487, 96
        %v1791 = vpop.permute.xlu0 %1790
        %1792 = vrot.lane.b32.xlu0 %v489, 96
        %v1793 = vpop.permute.xlu0 %1792
        %vm1794 = vcmp.lt.s32.totalorder %v499, 96
        %v1795 = vsel %vm1794, %v1787, %v1791
        %v1796 = vsel %vm1794, %v1789, %v1793
        %v1797 = vsel %vm1794, %v1791, %v1787
        %v1798 = vsel %vm1794, %v1793, %v1789
        %s1799 = scalar_lea.vmem [#allocation10], 38
        %v1800 = vld [vmem:[%s1799] ss:$8 sm:$0x3]
        %v1802 = vlaneseq
        %v1803 = vshrl.u32 %v1802, 7
        %v1804 = vsub.s32 0, %v1803
        %v1805 = vrot.slane %v1800, %v1804
        %v1806 = vlaneseq
        %v1807 = vshrl.u32 %v1806, 7
        %v1808 = vsub.s32 1, %v1807
        %v1809 = vrot.slane %v1800, %v1808
        %v1812 = vmul.f32 %v1795, %v1805
        %v1813 = vmul.f32 %v1797, %v1809
        %v1814 = vmul.f32 %v1796, %v1805
        %v1815 = vmul.f32 %v1798, %v1809
        %v1816 = vpack.c.bf16 %v1814, %v1812
        %v1817 = vpack.c.bf16 %v1815, %v1813
        %v1820 = vunpack.c.l.b16 %v1816
        %v1821 = vunpack.c.l.b16 %v1817
        %v1822 = vunpack.c.h.b16 %v1816
        %v1823 = vunpack.c.h.b16 %v1817
        %v1824 = vpack.c.b16 %v1821, %v1820
        %v1825 = vpack.c.b16 %v1823, %v1822
        %1828 = vst [vmem:[#allocation3 + $0x160] sm:$0xff] %v1824
        %1829 = vst [vmem:[#allocation3 + $0x168] sm:$0xff] %v1825
        %1830 = vrot.lane.b32.xlu0 %v486, 95
        %v1831 = vpop.permute.xlu0 %1830
        %1832 = vrot.lane.b32.xlu0 %v488, 95
        %v1833 = vpop.permute.xlu0 %1832
        %1834 = vrot.lane.b32.xlu0 %v487, 95
        %v1835 = vpop.permute.xlu0 %1834
        %1836 = vrot.lane.b32.xlu0 %v489, 95
        %v1837 = vpop.permute.xlu0 %1836
        %vm1838 = vcmp.lt.s32.totalorder %v499, 95
        %v1839 = vsel %vm1838, %v1831, %v1835
        %v1840 = vsel %vm1838, %v1833, %v1837
        %v1841 = vsel %vm1838, %v1835, %v1831
        %v1842 = vsel %vm1838, %v1837, %v1833
        %s1843 = scalar_lea.vmem [#allocation10], 39
        %v1844 = vld [vmem:[%s1843] ss:$8 sm:$0x3]
        %v1846 = vlaneseq
        %v1847 = vshrl.u32 %v1846, 7
        %v1848 = vsub.s32 0, %v1847
        %v1849 = vrot.slane %v1844, %v1848
        %v1850 = vlaneseq
        %v1851 = vshrl.u32 %v1850, 7
        %v1852 = vsub.s32 1, %v1851
        %v1853 = vrot.slane %v1844, %v1852
        %v1856 = vmul.f32 %v1839, %v1849
        %v1857 = vmul.f32 %v1841, %v1853
        %v1858 = vmul.f32 %v1840, %v1849
        %v1859 = vmul.f32 %v1842, %v1853
        %v1860 = vpack.c.bf16 %v1858, %v1856
        %v1861 = vpack.c.bf16 %v1859, %v1857
        %v1864 = vunpack.c.l.b16 %v1860
        %v1865 = vunpack.c.l.b16 %v1861
        %v1866 = vunpack.c.h.b16 %v1860
        %v1867 = vunpack.c.h.b16 %v1861
        %v1868 = vpack.c.b16 %v1865, %v1864
        %v1869 = vpack.c.b16 %v1867, %v1866
        %1872 = vst [vmem:[#allocation3 + $0x170] sm:$0xff] %v1868
        %1873 = vst [vmem:[#allocation3 + $0x178] sm:$0xff] %v1869
        %1874 = vrot.lane.b32.xlu0 %v486, 94
        %v1875 = vpop.permute.xlu0 %1874
        %1876 = vrot.lane.b32.xlu0 %v488, 94
        %v1877 = vpop.permute.xlu0 %1876
        %1878 = vrot.lane.b32.xlu0 %v487, 94
        %v1879 = vpop.permute.xlu0 %1878
        %1880 = vrot.lane.b32.xlu0 %v489, 94
        %v1881 = vpop.permute.xlu0 %1880
        %vm1882 = vcmp.lt.s32.totalorder %v499, 94
        %v1883 = vsel %vm1882, %v1875, %v1879
        %v1884 = vsel %vm1882, %v1877, %v1881
        %v1885 = vsel %vm1882, %v1879, %v1875
        %v1886 = vsel %vm1882, %v1881, %v1877
        %s1887 = scalar_lea.vmem [#allocation10], 48
        %v1888 = vld [vmem:[%s1887] ss:$8 sm:$0x3]
        %v1890 = vlaneseq
        %v1891 = vshrl.u32 %v1890, 7
        %v1892 = vsub.s32 0, %v1891
        %v1893 = vrot.slane %v1888, %v1892
        %v1894 = vlaneseq
        %v1895 = vshrl.u32 %v1894, 7
        %v1896 = vsub.s32 1, %v1895
        %v1897 = vrot.slane %v1888, %v1896
        %v1900 = vmul.f32 %v1883, %v1893
        %v1901 = vmul.f32 %v1885, %v1897
        %v1902 = vmul.f32 %v1884, %v1893
        %v1903 = vmul.f32 %v1886, %v1897
        %v1904 = vpack.c.bf16 %v1902, %v1900
        %v1905 = vpack.c.bf16 %v1903, %v1901
        %v1908 = vunpack.c.l.b16 %v1904
        %v1909 = vunpack.c.l.b16 %v1905
        %v1910 = vunpack.c.h.b16 %v1904
        %v1911 = vunpack.c.h.b16 %v1905
        %v1912 = vpack.c.b16 %v1909, %v1908
        %v1913 = vpack.c.b16 %v1911, %v1910
        %1916 = vst [vmem:[#allocation3 + $0x180] sm:$0xff] %v1912
        %1917 = vst [vmem:[#allocation3 + $0x188] sm:$0xff] %v1913
        %v1918 = vld [vmem:[#allocation7] sm:$0xff]
        %v1919 = vld [vmem:[#allocation7 + $0x8] sm:$0xff]
        %v1920 = vld [vmem:[#allocation2] sm:$0xff]
        %v1921 = vld [vmem:[#allocation2 + $0x8] sm:$0xff]
        %v1922 = vld [vmem:[#allocation2 + $0x10] sm:$0xff]
        %v1923 = vld [vmem:[#allocation2 + $0x18] sm:$0xff]
        %v1924 = vld [vmem:[#allocation2 + $0x20] sm:$0xff]
        %v1925 = vld [vmem:[#allocation2 + $0x28] sm:$0xff]
        %v1926 = vld [vmem:[#allocation2 + $0x30] sm:$0xff]
        %v1927 = vld [vmem:[#allocation2 + $0x38] sm:$0xff]
        %v1928 = vld [vmem:[#allocation2 + $0x40] sm:$0xff]
        %v1929 = vld [vmem:[#allocation2 + $0x48] sm:$0xff]
        %v1930 = vld [vmem:[#allocation2 + $0x50] sm:$0xff]
        %v1931 = vld [vmem:[#allocation2 + $0x58] sm:$0xff]
        %v1932 = vld [vmem:[#allocation2 + $0x60] sm:$0xff]
        %v1933 = vld [vmem:[#allocation2 + $0x68] sm:$0xff]
        %v1934 = vld [vmem:[#allocation2 + $0x70] sm:$0xff]
        %v1935 = vld [vmem:[#allocation2 + $0x78] sm:$0xff]
        %v1936 = vld [vmem:[#allocation2 + $0x80] sm:$0xff]
        %v1937 = vld [vmem:[#allocation2 + $0x88] sm:$0xff]
        %v1938 = vld [vmem:[%s4] sm:$0xff]
        %v1939 = vld [vmem:[%s4 + $0x8] sm:$0xff]
        %1941 = vset.pattern.permute.xlu0 0
        %1942 = vperm.xlu0 %1941, %v1938
        %v1943 = vpop.permute.xlu0 %1942
        %1946 = vset.pattern.permute.xlu0 0
        %1947 = vperm.xlu0 %1946, %v1939
        %v1948 = vpop.permute.xlu0 %1947
        %v1952 = vunpack.c.l.b16 %v1918
        %v1953 = vunpack.c.h.b16 %v1918
        %v1954 = vunpack.c.l.b16 %v1919
        %v1955 = vunpack.c.h.b16 %v1919
        %v1956 = vpack.c.b16 %v1954, %v1952
        %v1957 = vpack.c.b16 %v1955, %v1953
        %v1977 = vunpack.c.l.b16 %v1920
        %v1978 = vunpack.c.h.b16 %v1920
        %v1979 = vunpack.c.l.b16 %v1921
        %v1980 = vunpack.c.h.b16 %v1921
        %v1981 = vunpack.c.l.b16 %v1922
        %v1982 = vunpack.c.h.b16 %v1922
        %v1983 = vunpack.c.l.b16 %v1923
        %v1984 = vunpack.c.h.b16 %v1923
        %v1985 = vunpack.c.l.b16 %v1924
        %v1986 = vunpack.c.h.b16 %v1924
        %v1987 = vunpack.c.l.b16 %v1925
        %v1988 = vunpack.c.h.b16 %v1925
        %v1989 = vunpack.c.l.b16 %v1926
        %v1990 = vunpack.c.h.b16 %v1926
        %v1991 = vunpack.c.l.b16 %v1927
        %v1992 = vunpack.c.h.b16 %v1927
        %v1993 = vunpack.c.l.b16 %v1928
        %v1994 = vunpack.c.h.b16 %v1928
        %v1995 = vunpack.c.l.b16 %v1929
        %v1996 = vunpack.c.h.b16 %v1929
        %v1997 = vunpack.c.l.b16 %v1930
        %v1998 = vunpack.c.h.b16 %v1930
        %v1999 = vunpack.c.l.b16 %v1931
        %v2000 = vunpack.c.h.b16 %v1931
        %v2001 = vunpack.c.l.b16 %v1932
        %v2002 = vunpack.c.h.b16 %v1932
        %v2003 = vunpack.c.l.b16 %v1933
        %v2004 = vunpack.c.h.b16 %v1933
        %v2005 = vunpack.c.l.b16 %v1934
        %v2006 = vunpack.c.h.b16 %v1934
        %v2007 = vunpack.c.l.b16 %v1935
        %v2008 = vunpack.c.h.b16 %v1935
        %v2009 = vunpack.c.l.b16 %v1936
        %v2010 = vunpack.c.h.b16 %v1936
        %v2011 = vunpack.c.l.b16 %v1937
        %v2012 = vunpack.c.h.b16 %v1937
        %v2013 = vpack.c.b16 %v1979, %v1977
        %v2014 = vpack.c.b16 %v1980, %v1978
        %v2015 = vpack.c.b16 %v1983, %v1981
        %v2016 = vpack.c.b16 %v1984, %v1982
        %v2017 = vpack.c.b16 %v1987, %v1985
        %v2018 = vpack.c.b16 %v1988, %v1986
        %v2019 = vpack.c.b16 %v1991, %v1989
        %v2020 = vpack.c.b16 %v1992, %v1990
        %v2021 = vpack.c.b16 %v1995, %v1993
        %v2022 = vpack.c.b16 %v1996, %v1994
        %v2023 = vpack.c.b16 %v1999, %v1997
        %v2024 = vpack.c.b16 %v2000, %v1998
        %v2025 = vpack.c.b16 %v2003, %v2001
        %v2026 = vpack.c.b16 %v2004, %v2002
        %v2027 = vpack.c.b16 %v2007, %v2005
        %v2028 = vpack.c.b16 %v2008, %v2006
        %v2029 = vpack.c.b16 %v2011, %v2009
        %v2030 = vpack.c.b16 %v2012, %v2010
        %vm2049 = vcmask 130048
        %v2051 = vsel %vm2049, %v1957, 0
        %2053 = vmatprep.subr.bf16.mxu0 %v2028
        %2054 = vmatpush1.bf16.msra.mxu0 %v2027
        %2055 = vmatprep.subr.bf16.mxu0 %v2026
        %2056 = vmatpush1.bf16.msra.mxu0 %v2025
        %2057 = vmatprep.subr.bf16.mxu0 %v2024
        %2058 = vmatpush1.bf16.msra.mxu0 %v2023
        %2059 = vmatprep.subr.bf16.mxu0 %v2022
        %2060 = vmatpush1.bf16.msra.mxu0 %v2021
        %2061 = vmatprep.subr.bf16.mxu0 %v2020
        %2062 = vmatpush1.bf16.msra.mxu0 %v2019
        %2063 = vmatprep.subr.bf16.mxu0 %v2018
        %2064 = vmatpush1.bf16.msra.mxu0 %v2017
        %2065 = vmatprep.subr.bf16.mxu0 %v2016
        %2066 = vmatpush1.bf16.msra.mxu0 %v2015
        %2067 = vmatprep.subr.bf16.mxu0 %v2014
        %2068 = vmatpush1.bf16.msra.mxu0 %v2013
        %2069 = vmatprep.subr.bf16.mxu0 0
        %2070 = vmatpush2.bf16.msra.mxu0 0
        %2071 = vmatprep.subr.bf16.mxu0 0
        %2072 = vmatpush2.bf16.msra.mxu0 0
        %2073 = vmatprep.subr.bf16.mxu0 0
        %2074 = vmatpush2.bf16.msra.mxu0 0
        %2075 = vmatprep.subr.bf16.mxu0 0
        %2076 = vmatpush2.bf16.msra.mxu0 0
        %2077 = vmatprep.subr.bf16.mxu0 0
        %2078 = vmatpush2.bf16.msra.mxu0 0
        %2079 = vmatprep.subr.bf16.mxu0 0
        %2080 = vmatpush2.bf16.msra.mxu0 0
        %2081 = vmatprep.subr.bf16.mxu0 0
        %2082 = vmatpush2.bf16.msra.mxu0 0
        %2083 = vmatprep.subr.bf16.mxu0 %v2030
        %2084 = vmatpush2.bf16.msra.mxu0 %v2029
        %2085 = vmatprep.mubr.bf16.mxu0 %v2051
        %2086 = vmatmul.mubr.bf16.gmra.mxu0 %v1956
        %v2087 = vpop.f32.mrf.mxu0
        %v2088 = vadd.f32 %v1943, %v2087
        %v2089 = vpop.f32.mrf.mxu0
        %v2090 = vadd.f32 %v1943, %v2089
        %v2091 = vpop.f32.mrf.mxu0
        %v2092 = vadd.f32 %v1948, %v2091
        %v2093 = vpop.f32.mrf.mxu0
        %v2094 = vadd.f32 %v1948, %v2093
        %2095 = vdwg.mxu0
        %v2096 = vmax.f32 %v2088, 0.0
        %v2097 = vmax.f32 %v2090, 0.0
        %v2098 = vmax.f32 %v2092, 0.0
        %v2099 = vmax.f32 %v2094, 0.0
        %v2100 = vld [vmem:[%s3] sm:$0xff]
        %v2101 = vld [vmem:[%s3 + $0x8] sm:$0xff]
        %v2102 = vld [vmem:[%s3 + $0x10] sm:$0xff]
        %v2103 = vld [vmem:[%s3 + $0x18] sm:$0xff]
        %v2104 = vld [vmem:[#allocation3] sm:$0xff]
        %v2105 = vld [vmem:[#allocation3 + $0x8] sm:$0xff]
        %v2106 = vld [vmem:[#allocation3 + $0x10] sm:$0xff]
        %v2107 = vld [vmem:[#allocation3 + $0x18] sm:$0xff]
        %v2108 = vld [vmem:[#allocation3 + $0x20] sm:$0xff]
        %v2109 = vld [vmem:[#allocation3 + $0x28] sm:$0xff]
        %v2110 = vld [vmem:[#allocation3 + $0x30] sm:$0xff]
        %v2111 = vld [vmem:[#allocation3 + $0x38] sm:$0xff]
        %v2112 = vld [vmem:[#allocation3 + $0x40] sm:$0xff]
        %v2113 = vld [vmem:[#allocation3 + $0x48] sm:$0xff]
        %v2114 = vld [vmem:[#allocation3 + $0x50] sm:$0xff]
        %v2115 = vld [vmem:[#allocation3 + $0x58] sm:$0xff]
        %v2116 = vld [vmem:[#allocation3 + $0x60] sm:$0xff]
        %v2117 = vld [vmem:[#allocation3 + $0x68] sm:$0xff]
        %v2118 = vld [vmem:[#allocation3 + $0x70] sm:$0xff]
        %v2119 = vld [vmem:[#allocation3 + $0x78] sm:$0xff]
        %v2120 = vld [vmem:[#allocation3 + $0x80] sm:$0xff]
        %v2121 = vld [vmem:[#allocation3 + $0x88] sm:$0xff]
        %v2122 = vld [vmem:[#allocation3 + $0x90] sm:$0xff]
        %v2123 = vld [vmem:[#allocation3 + $0x98] sm:$0xff]
        %v2124 = vld [vmem:[#allocation3 + $0xa0] sm:$0xff]
        %v2125 = vld [vmem:[#allocation3 + $0xa8] sm:$0xff]
        %v2126 = vld [vmem:[#allocation3 + $0xb0] sm:$0xff]
        %v2127 = vld [vmem:[#allocation3 + $0xb8] sm:$0xff]
        %v2128 = vld [vmem:[#allocation3 + $0xc0] sm:$0xff]
        %v2129 = vld [vmem:[#allocation3 + $0xc8] sm:$0xff]
        %v2130 = vld [vmem:[#allocation3 + $0xd0] sm:$0xff]
        %v2131 = vld [vmem:[#allocation3 + $0xd8] sm:$0xff]
        %v2132 = vld [vmem:[#allocation3 + $0xe0] sm:$0xff]
        %v2133 = vld [vmem:[#allocation3 + $0xe8] sm:$0xff]
        %v2134 = vld [vmem:[#allocation3 + $0xf0] sm:$0xff]
        %v2135 = vld [vmem:[#allocation3 + $0xf8] sm:$0xff]
        %v2136 = vld [vmem:[#allocation3 + $0x100] sm:$0xff]
        %v2137 = vld [vmem:[#allocation3 + $0x108] sm:$0xff]
        %v2138 = vld [vmem:[#allocation3 + $0x110] sm:$0xff]
        %v2139 = vld [vmem:[#allocation3 + $0x118] sm:$0xff]
        %v2140 = vld [vmem:[#allocation3 + $0x120] sm:$0xff]
        %v2141 = vld [vmem:[#allocation3 + $0x128] sm:$0xff]
        %v2142 = vld [vmem:[#allocation3 + $0x130] sm:$0xff]
        %v2143 = vld [vmem:[#allocation3 + $0x138] sm:$0xff]
        %v2144 = vld [vmem:[#allocation3 + $0x140] sm:$0xff]
        %v2145 = vld [vmem:[#allocation3 + $0x148] sm:$0xff]
        %v2146 = vld [vmem:[#allocation3 + $0x150] sm:$0xff]
        %v2147 = vld [vmem:[#allocation3 + $0x158] sm:$0xff]
        %v2148 = vld [vmem:[#allocation3 + $0x160] sm:$0xff]
        %v2149 = vld [vmem:[#allocation3 + $0x168] sm:$0xff]
        %v2150 = vld [vmem:[#allocation3 + $0x170] sm:$0xff]
        %v2151 = vld [vmem:[#allocation3 + $0x178] sm:$0xff]
        %v2152 = vld [vmem:[#allocation3 + $0x180] sm:$0xff]
        %v2153 = vld [vmem:[#allocation3 + $0x188] sm:$0xff]
        %2154 = vset.pattern.permute.xlu0 1
        %2155 = vperm.xlu0 %2154, %v1938
        %v2156 = vpop.permute.xlu0 %2155
        %2158 = vset.pattern.permute.xlu0 1
        %2159 = vperm.xlu0 %2158, %v1939
        %v2160 = vpop.permute.xlu0 %2159
        %v2166 = vunpack.c.l.b16 %v2100
        %v2167 = vunpack.c.h.b16 %v2100
        %v2168 = vunpack.c.l.b16 %v2101
        %v2169 = vunpack.c.h.b16 %v2101
        %v2170 = vunpack.c.l.b16 %v2102
        %v2171 = vunpack.c.h.b16 %v2102
        %v2172 = vunpack.c.l.b16 %v2103
        %v2173 = vunpack.c.h.b16 %v2103
        %v2174 = vpack.c.b16 %v2170, %v2166
        %v2175 = vpack.c.b16 %v2171, %v2167
        %v2176 = vpack.c.b16 %v2172, %v2168
        %v2177 = vpack.c.b16 %v2173, %v2169
        %v2231 = vunpack.c.l.b16 %v2104
        %v2232 = vunpack.c.h.b16 %v2104
        %v2233 = vunpack.c.l.b16 %v2105
        %v2234 = vunpack.c.h.b16 %v2105
        %v2235 = vunpack.c.l.b16 %v2106
        %v2236 = vunpack.c.h.b16 %v2106
        %v2237 = vunpack.c.l.b16 %v2107
        %v2238 = vunpack.c.h.b16 %v2107
        %v2239 = vunpack.c.l.b16 %v2108
        %v2240 = vunpack.c.h.b16 %v2108
        %v2241 = vunpack.c.l.b16 %v2109
        %v2242 = vunpack.c.h.b16 %v2109
        %v2243 = vunpack.c.l.b16 %v2110
        %v2244 = vunpack.c.h.b16 %v2110
        %v2245 = vunpack.c.l.b16 %v2111
        %v2246 = vunpack.c.h.b16 %v2111
        %v2247 = vunpack.c.l.b16 %v2112
        %v2248 = vunpack.c.h.b16 %v2112
        %v2249 = vunpack.c.l.b16 %v2113
        %v2250 = vunpack.c.h.b16 %v2113
        %v2251 = vunpack.c.l.b16 %v2114
        %v2252 = vunpack.c.h.b16 %v2114
        %v2253 = vunpack.c.l.b16 %v2115
        %v2254 = vunpack.c.h.b16 %v2115
        %v2255 = vunpack.c.l.b16 %v2116
        %v2256 = vunpack.c.h.b16 %v2116
        %v2257 = vunpack.c.l.b16 %v2117
        %v2258 = vunpack.c.h.b16 %v2117
        %v2259 = vunpack.c.l.b16 %v2118
        %v2260 = vunpack.c.h.b16 %v2118
        %v2261 = vunpack.c.l.b16 %v2119
        %v2262 = vunpack.c.h.b16 %v2119
        %v2263 = vunpack.c.l.b16 %v2120
        %v2264 = vunpack.c.h.b16 %v2120
        %v2265 = vunpack.c.l.b16 %v2121
        %v2266 = vunpack.c.h.b16 %v2121
        %v2267 = vunpack.c.l.b16 %v2122
        %v2268 = vunpack.c.h.b16 %v2122
        %v2269 = vunpack.c.l.b16 %v2123
        %v2270 = vunpack.c.h.b16 %v2123
        %v2271 = vunpack.c.l.b16 %v2124
        %v2272 = vunpack.c.h.b16 %v2124
        %v2273 = vunpack.c.l.b16 %v2125
        %v2274 = vunpack.c.h.b16 %v2125
        %v2275 = vunpack.c.l.b16 %v2126
        %v2276 = vunpack.c.h.b16 %v2126
        %v2277 = vunpack.c.l.b16 %v2127
        %v2278 = vunpack.c.h.b16 %v2127
        %v2279 = vunpack.c.l.b16 %v2128
        %v2280 = vunpack.c.h.b16 %v2128
        %v2281 = vunpack.c.l.b16 %v2129
        %v2282 = vunpack.c.h.b16 %v2129
        %v2283 = vunpack.c.l.b16 %v2130
        %v2284 = vunpack.c.h.b16 %v2130
        %v2285 = vunpack.c.l.b16 %v2131
        %v2286 = vunpack.c.h.b16 %v2131
        %v2287 = vunpack.c.l.b16 %v2132
        %v2288 = vunpack.c.h.b16 %v2132
        %v2289 = vunpack.c.l.b16 %v2133
        %v2290 = vunpack.c.h.b16 %v2133
        %v2291 = vunpack.c.l.b16 %v2134
        %v2292 = vunpack.c.h.b16 %v2134
        %v2293 = vunpack.c.l.b16 %v2135
        %v2294 = vunpack.c.h.b16 %v2135
        %v2295 = vunpack.c.l.b16 %v2136
        %v2296 = vunpack.c.h.b16 %v2136
        %v2297 = vunpack.c.l.b16 %v2137
        %v2298 = vunpack.c.h.b16 %v2137
        %v2299 = vunpack.c.l.b16 %v2138
        %v2300 = vunpack.c.h.b16 %v2138
        %v2301 = vunpack.c.l.b16 %v2139
        %v2302 = vunpack.c.h.b16 %v2139
        %v2303 = vunpack.c.l.b16 %v2140
        %v2304 = vunpack.c.h.b16 %v2140
        %v2305 = vunpack.c.l.b16 %v2141
        %v2306 = vunpack.c.h.b16 %v2141
        %v2307 = vunpack.c.l.b16 %v2142
        %v2308 = vunpack.c.h.b16 %v2142
        %v2309 = vunpack.c.l.b16 %v2143
        %v2310 = vunpack.c.h.b16 %v2143
        %v2311 = vunpack.c.l.b16 %v2144
        %v2312 = vunpack.c.h.b16 %v2144
        %v2313 = vunpack.c.l.b16 %v2145
        %v2314 = vunpack.c.h.b16 %v2145
        %v2315 = vunpack.c.l.b16 %v2146
        %v2316 = vunpack.c.h.b16 %v2146
        %v2317 = vunpack.c.l.b16 %v2147
        %v2318 = vunpack.c.h.b16 %v2147
        %v2319 = vunpack.c.l.b16 %v2148
        %v2320 = vunpack.c.h.b16 %v2148
        %v2321 = vunpack.c.l.b16 %v2149
        %v2322 = vunpack.c.h.b16 %v2149
        %v2323 = vunpack.c.l.b16 %v2150
        %v2324 = vunpack.c.h.b16 %v2150
        %v2325 = vunpack.c.l.b16 %v2151
        %v2326 = vunpack.c.h.b16 %v2151
        %v2327 = vunpack.c.l.b16 %v2152
        %v2328 = vunpack.c.h.b16 %v2152
        %v2329 = vunpack.c.l.b16 %v2153
        %v2330 = vunpack.c.h.b16 %v2153
        %v2331 = vpack.c.b16 %v2233, %v2231
        %v2332 = vpack.c.b16 %v2234, %v2232
        %v2333 = vpack.c.b16 %v2237, %v2235
        %v2334 = vpack.c.b16 %v2238, %v2236
        %v2335 = vpack.c.b16 %v2241, %v2239
        %v2336 = vpack.c.b16 %v2242, %v2240
        %v2337 = vpack.c.b16 %v2245, %v2243
        %v2338 = vpack.c.b16 %v2246, %v2244
        %v2339 = vpack.c.b16 %v2249, %v2247
        %v2340 = vpack.c.b16 %v2250, %v2248
        %v2341 = vpack.c.b16 %v2253, %v2251
        %v2342 = vpack.c.b16 %v2254, %v2252
        %v2343 = vpack.c.b16 %v2257, %v2255
        %v2344 = vpack.c.b16 %v2258, %v2256
        %v2345 = vpack.c.b16 %v2261, %v2259
        %v2346 = vpack.c.b16 %v2262, %v2260
        %v2347 = vpack.c.b16 %v2265, %v2263
        %v2348 = vpack.c.b16 %v2266, %v2264
        %v2349 = vpack.c.b16 %v2269, %v2267
        %v2350 = vpack.c.b16 %v2270, %v2268
        %v2351 = vpack.c.b16 %v2273, %v2271
        %v2352 = vpack.c.b16 %v2274, %v2272
        %v2353 = vpack.c.b16 %v2277, %v2275
        %v2354 = vpack.c.b16 %v2278, %v2276
        %v2355 = vpack.c.b16 %v2281, %v2279
        %v2356 = vpack.c.b16 %v2282, %v2280
        %v2357 = vpack.c.b16 %v2285, %v2283
        %v2358 = vpack.c.b16 %v2286, %v2284
        %v2359 = vpack.c.b16 %v2289, %v2287
        %v2360 = vpack.c.b16 %v2290, %v2288
        %v2361 = vpack.c.b16 %v2293, %v2291
        %v2362 = vpack.c.b16 %v2294, %v2292
        %v2363 = vpack.c.b16 %v2297, %v2295
        %v2364 = vpack.c.b16 %v2298, %v2296
        %v2365 = vpack.c.b16 %v2301, %v2299
        %v2366 = vpack.c.b16 %v2302, %v2300
        %v2367 = vpack.c.b16 %v2305, %v2303
        %v2368 = vpack.c.b16 %v2306, %v2304
        %v2369 = vpack.c.b16 %v2309, %v2307
        %v2370 = vpack.c.b16 %v2310, %v2308
        %v2371 = vpack.c.b16 %v2313, %v2311
        %v2372 = vpack.c.b16 %v2314, %v2312
        %v2373 = vpack.c.b16 %v2317, %v2315
        %v2374 = vpack.c.b16 %v2318, %v2316
        %v2375 = vpack.c.b16 %v2321, %v2319
        %v2376 = vpack.c.b16 %v2322, %v2320
        %v2377 = vpack.c.b16 %v2325, %v2323
        %v2378 = vpack.c.b16 %v2326, %v2324
        %v2379 = vpack.c.b16 %v2329, %v2327
        %v2380 = vpack.c.b16 %v2330, %v2328
        %v2432 = vsel %vm2049, %v2177, 0
        %2434 = vmatprep.subr.bf16.mxu0 %v2346
        %2435 = vmatpush1.bf16.msra.mxu0 %v2345
        %2436 = vmatprep.subr.bf16.mxu0 %v2344
        %2437 = vmatpush1.bf16.msra.mxu0 %v2343
        %2438 = vmatprep.subr.bf16.mxu0 %v2342
        %2439 = vmatpush1.bf16.msra.mxu0 %v2341
        %2440 = vmatprep.subr.bf16.mxu0 %v2340
        %2441 = vmatpush1.bf16.msra.mxu0 %v2339
        %2442 = vmatprep.subr.bf16.mxu0 %v2338
        %2443 = vmatpush1.bf16.msra.mxu0 %v2337
        %2444 = vmatprep.subr.bf16.mxu0 %v2336
        %2445 = vmatpush1.bf16.msra.mxu0 %v2335
        %2446 = vmatprep.subr.bf16.mxu0 %v2334
        %2447 = vmatpush1.bf16.msra.mxu0 %v2333
        %2448 = vmatprep.subr.bf16.mxu0 %v2332
        %2449 = vmatpush1.bf16.msra.mxu0 %v2331
        %2450 = vmatprep.subr.bf16.mxu0 %v2362
        %2451 = vmatpush2.bf16.msra.mxu0 %v2361
        %2452 = vmatprep.subr.bf16.mxu0 %v2360
        %2453 = vmatpush2.bf16.msra.mxu0 %v2359
        %2454 = vmatprep.subr.bf16.mxu0 %v2358
        %2455 = vmatpush2.bf16.msra.mxu0 %v2357
        %2456 = vmatprep.subr.bf16.mxu0 %v2356
        %2457 = vmatpush2.bf16.msra.mxu0 %v2355
        %2458 = vmatprep.subr.bf16.mxu0 %v2354
        %2459 = vmatpush2.bf16.msra.mxu0 %v2353
        %2460 = vmatprep.subr.bf16.mxu0 %v2352
        %2461 = vmatpush2.bf16.msra.mxu0 %v2351
        %2462 = vmatprep.subr.bf16.mxu0 %v2350
        %2463 = vmatpush2.bf16.msra.mxu0 %v2349
        %2464 = vmatprep.subr.bf16.mxu0 %v2348
        %2465 = vmatpush2.bf16.msra.mxu0 %v2347
        %2466 = vmatprep.mubr.bf16.mxu0 %v2175
        %2467 = vmatmul.mubr.bf16.gmra.mxu0 %v2174
        %v2468 = vpop.f32.mrf.mxu0
        %v2469 = vadd.f32 %v2156, %v2468
        %v2470 = vpop.f32.mrf.mxu0
        %v2471 = vadd.f32 %v2156, %v2470
        %v2472 = vpop.f32.mrf.mxu0
        %v2473 = vadd.f32 %v2160, %v2472
        %v2474 = vpop.f32.mrf.mxu0
        %v2475 = vadd.f32 %v2160, %v2474
        %2476 = vdwg.mxu0
        %2477 = vmatprep.subr.bf16.mxu0 %v2378
        %2478 = vmatpush1.bf16.msra.mxu0 %v2377
        %2479 = vmatprep.subr.bf16.mxu0 %v2376
        %2480 = vmatpush1.bf16.msra.mxu0 %v2375
        %2481 = vmatprep.subr.bf16.mxu0 %v2374
        %2482 = vmatpush1.bf16.msra.mxu0 %v2373
        %2483 = vmatprep.subr.bf16.mxu0 %v2372
        %2484 = vmatpush1.bf16.msra.mxu0 %v2371
        %2485 = vmatprep.subr.bf16.mxu0 %v2370
        %2486 = vmatpush1.bf16.msra.mxu0 %v2369
        %2487 = vmatprep.subr.bf16.mxu0 %v2368
        %2488 = vmatpush1.bf16.msra.mxu0 %v2367
        %2489 = vmatprep.subr.bf16.mxu0 %v2366
        %2490 = vmatpush1.bf16.msra.mxu0 %v2365
        %2491 = vmatprep.subr.bf16.mxu0 %v2364
        %2492 = vmatpush1.bf16.msra.mxu0 %v2363
        %2493 = vmatprep.subr.bf16.mxu0 0
        %2494 = vmatpush2.bf16.msra.mxu0 0
        %2495 = vmatprep.subr.bf16.mxu0 0
        %2496 = vmatpush2.bf16.msra.mxu0 0
        %2497 = vmatprep.subr.bf16.mxu0 0
        %2498 = vmatpush2.bf16.msra.mxu0 0
        %2499 = vmatprep.subr.bf16.mxu0 0
        %2500 = vmatpush2.bf16.msra.mxu0 0
        %2501 = vmatprep.subr.bf16.mxu0 0
        %2502 = vmatpush2.bf16.msra.mxu0 0
        %2503 = vmatprep.subr.bf16.mxu0 0
        %2504 = vmatpush2.bf16.msra.mxu0 0
        %2505 = vmatprep.subr.bf16.mxu0 0
        %2506 = vmatpush2.bf16.msra.mxu0 0
        %2507 = vmatprep.subr.bf16.mxu0 %v2380
        %2508 = vmatpush2.bf16.msra.mxu0 %v2379
        %2509 = vmatprep.mubr.bf16.mxu0 %v2432
        %2510 = vmatmul.mubr.bf16.gmra.mxu0 %v2176
        %v2511 = vpop.f32.mrf.mxu0
        %v2512 = vadd.f32 %v2469, %v2511
        %v2513 = vpop.f32.mrf.mxu0
        %v2514 = vadd.f32 %v2471, %v2513
        %v2515 = vpop.f32.mrf.mxu0
        %v2516 = vadd.f32 %v2473, %v2515
        %v2517 = vpop.f32.mrf.mxu0
        %v2518 = vadd.f32 %v2475, %v2517
        %2519 = vdwg.mxu0
        %v2520 = vmax.f32 %v2512, 0.0
        %v2521 = vmax.f32 %v2514, 0.0
        %v2522 = vmax.f32 %v2516, 0.0
        %v2523 = vmax.f32 %v2518, 0.0
        %v2524 = vadd.f32 %v2096, %v2520
        %v2525 = vadd.f32 %v2097, %v2521
        %v2526 = vadd.f32 %v2098, %v2522
        %v2527 = vadd.f32 %v2099, %v2523
        %v2528 = vadd.f32 %v2524, %v2525
        %2529 = vadd.xlane.f32.xlu0 %v2528
        %v2530 = vpop.xlane.xlu0 %2529
        %v2531 = vadd.f32 %v2526, %v2527
        %2532 = vadd.xlane.f32.xlu0 %v2531
        %v2533 = vpop.xlane.xlu0 %2532
        %v2534 = vrcp.pop 256.0
        %v2535 = vmul.f32 %v2530, %v2534
        %v2536 = vmul.f32 %v2533, %v2534
        %v2537 = vld [vmem:[%s7] sm:$0xff]
        %v2538 = vld [vmem:[%s7 + $0x8] sm:$0xff]
        %v2539 = vmul.f32 %v2537, %v2535
        %v2540 = vmul.f32 %v2538, %v2536
        %vm2541 = vcmask 64512
        %v2542 = vsel %vm2541, %v2539, 0.0
        %v2543 = vsel %vm2541, %v2540, 0.0
        %v2544 = vadd.f32 %v2542, %v2543
        %v2545 = vrot.slane %v2544, 4
        %v2546 = vadd.f32 %v2544, %v2545
        %v2547 = vrot.slane %v2546, 2
        %v2548 = vadd.f32 %v2546, %v2547
        %v2549 = vrot.slane %v2548, 1
        %v2550 = vadd.f32 %v2548, %v2549
        %v2551 = vld [vmem:[#allocation12] sm:$0x1]
        %v2552 = vadd.f32 %v2550, %v2551
        %v2553 = vld [vmem:[%s9] sm:$0xff]
        %v2554 = vld [vmem:[%s9 + $0x8] sm:$0xff]
        %v2555 = vlaneseq
        %v2556 = vshrl.u32 %v2555, 7
        %v2557 = vsub.s32 0, %v2556
        %v2558 = vrot.slane %v2552, %v2557
        %v2559 = vmul.f32 %v2553, %v2558
        %v2560 = vmul.f32 %v2554, %v2558
        %v2561 = vsel %vm2541, %v2559, 0.0
        %2562 = vadd.xlane.f32.xlu0 %v2561
        %v2563 = vpop.xlane.xlu0 %2562
        %v2564 = vsel %vm2541, %v2560, 0.0
        %2565 = vadd.xlane.f32.xlu0 %v2564
        %v2566 = vpop.xlane.xlu0 %2565
        %v2567 = vld [vmem:[%s10] sm:$0xff]
        %v2568 = vld [vmem:[%s10 + $0x8] sm:$0xff]
        %v2569 = vadd.f32 %v2563, %v2567
        %v2570 = vadd.f32 %v2566, %v2568
        %s2571 = scalar_lea.vmem %s9, 16
        %v2572 = vld [vmem:[%s2571] sm:$0xff]
        %v2573 = vld [vmem:[%s2571 + $0x8] sm:$0xff]
        %v2574 = vmul.f32 %v2572, %v2558
        %v2575 = vmul.f32 %v2573, %v2558
        %v2576 = vsel %vm2541, %v2574, 0.0
        %2577 = vadd.xlane.f32.xlu0 %v2576
        %v2578 = vpop.xlane.xlu0 %2577
        %v2579 = vsel %vm2541, %v2575, 0.0
        %2580 = vadd.xlane.f32.xlu0 %v2579
        %v2581 = vpop.xlane.xlu0 %2580
        %v2582 = vadd.f32 %v2578, %v2567
        %v2583 = vadd.f32 %v2581, %v2568
        %2586 = vrot.lane.b32.xlu0 %v2582, 127
        %v2587 = vpop.permute.xlu0 %2586
        %2588 = vrot.lane.b32.xlu0 %v2583, 127
        %v2589 = vpop.permute.xlu0 %2588
        %v2592 = vmax.f32 %v2569, %v2587
        %v2593 = vmax.f32 %v2570, %v2589
        %v2594 = vsub.f32 %v2569, %v2592
        %v2595 = vsub.f32 %v2570, %v2593
        %v2596 = vmul.f32 %v2594, 1.442695
        %v2597 = vpow.pop %v2596
        %v2598 = vmul.f32 %v2595, 1.442695
        %v2599 = vpow.pop %v2598
        %2602 = vrot.lane.b32.xlu0 %v2592, 1
        %v2603 = vpop.permute.xlu0 %2602
        %2604 = vrot.lane.b32.xlu0 %v2593, 1
        %v2605 = vpop.permute.xlu0 %2604
        %v2608 = vsub.f32 %v2582, %v2603
        %v2609 = vsub.f32 %v2583, %v2605
        %v2610 = vmul.f32 %v2608, 1.442695
        %v2611 = vpow.pop %v2610
        %v2612 = vmul.f32 %v2609, 1.442695
        %v2613 = vpow.pop %v2612
        %2616 = vrot.lane.b32.xlu0 %v2611, 127
        %v2617 = vpop.permute.xlu0 %2616
        %2618 = vrot.lane.b32.xlu0 %v2613, 127
        %v2619 = vpop.permute.xlu0 %2618
        %v2622 = vadd.f32 %v2597, %v2617
        %v2623 = vadd.f32 %v2599, %v2619
        %v2624 = vrcp.pop %v2622
        %v2625 = vrcp.pop %v2623
        %v2626 = vmul.f32 %v2597, %v2624
        %v2627 = vmul.f32 %v2599, %v2625
        %2629 = vset.pattern.permute.xlu0 0
        %2630 = vperm.xlu0 %2629, %v2626
        %v2631 = vpop.permute.xlu0 %2630
        %2634 = vset.pattern.permute.xlu0 0
        %2635 = vperm.xlu0 %2634, %v2627
        %v2636 = vpop.permute.xlu0 %2635
        %v2638 = vmul.f32 %v2096, %v2631
        %v2639 = vmul.f32 %v2097, %v2631
        %v2640 = vmul.f32 %v2098, %v2636
        %v2641 = vmul.f32 %v2099, %v2636
        %2644 = vrot.lane.b32.xlu0 %v2624, 1
        %v2645 = vpop.permute.xlu0 %2644
        %2646 = vrot.lane.b32.xlu0 %v2625, 1
        %v2647 = vpop.permute.xlu0 %2646
        %v2650 = vmul.f32 %v2611, %v2645
        %v2651 = vmul.f32 %v2613, %v2647
        %2653 = vset.pattern.permute.xlu0 1
        %2654 = vperm.xlu0 %2653, %v2650
        %v2655 = vpop.permute.xlu0 %2654
        %2658 = vset.pattern.permute.xlu0 1
        %2659 = vperm.xlu0 %2658, %v2651
        %v2660 = vpop.permute.xlu0 %2659
        %v2662 = vmul.f32 %v2520, %v2655
        %v2663 = vmul.f32 %v2521, %v2655
        %v2664 = vmul.f32 %v2522, %v2660
        %v2665 = vmul.f32 %v2523, %v2660
        %v2666 = vadd.f32 %v2638, %v2662
        %v2667 = vadd.f32 %v2639, %v2663
        %v2668 = vadd.f32 %v2640, %v2664
        %v2669 = vadd.f32 %v2641, %v2665
        %2670 = vst [vmem:[%s475] sm:$0xff] %v2666
        %2671 = vst [vmem:[%s475 + $0x8] sm:$0xff] %v2667
        %2672 = vst [vmem:[%s475 + $0x10] sm:$0xff] %v2668
        %2673 = vst [vmem:[%s475 + $0x18] sm:$0xff] %v2669
        %s2674 = sand.u32 %s279, 1
        %s2675 = scalar_lea.sflag [#allocation6], %s2674
        %s2676 = sand.u32 %s279, 1
        %s2677 = smul.addr %s2676, 32
        %s2678 = scalar_lea.vmem [#allocation13], %s2677
        // Predicated region
        $region85: #{tpu_custom_call.1} parent=63 // pred_check
          %p2679 = pneg %p289
        $region86: #{tpu_custom_call.1} parent=63 // pred_check_branch
          %2681 = sbr.rel (%p2679) target = $region88
        $region87: #{tpu_custom_call.1} parent=63 // pred_region
          %s2683 = ssub.s32 512, 512
          %2684 = vsyncadd %s2675, %s2683
          %s2685 = smul.addr %s30, 4
          %s2686 = smul.addr %s2685, 128
          %s2687 = scalar_lea.hbm %s11, %s2686
          %s2688 = sshll.u32 %s2678, 4
          %s2689 = int_to_ptr.vmem [resolvable:$true] %s2688
          %2694 = dma.vmem_to_hbm [thread:$0]  %s2689, 512, %s2687, %s2675, 256, 256, 16
        $region88: #{tpu_custom_call.1} parent=63 // pred_fallthru
          _
      $region64: #{tpu_custom_call.1} parent=5 // pred_fallthru
        _
      %p2695 = scmp.le.s32.totalorder 2, %s25
      // Predicated region
      $region89: #{tpu_custom_call.1} parent=5 // pred_check
        %p2696 = pneg %p2695
      $region90: #{tpu_custom_call.1} parent=5 // pred_check_branch
        %2698 = sbr.rel (%p2696) target = $region92
      $region91: #{tpu_custom_call.1} parent=5 // pred_region
        %s2699 = ssub.s32 %s25, 2
        // Predicated region
        $region93: #{tpu_custom_call.1} parent=91 // pred_check
          %p2700 = pneg %p295
        $region94: #{tpu_custom_call.1} parent=91 // pred_check_branch
          %2702 = sbr.rel (%p2700) target = $region96
        $region95: #{tpu_custom_call.1} parent=91 // pred_region
          %s2703 = sand.u32 %s280, 1
          %s2704 = scalar_lea.sflag [#allocation6], %s2703
          %s2705 = sand.u32 %s280, 1
          %s2706 = smul.addr %s2705, 32
          %s2707 = scalar_lea.vmem [#allocation13], %s2706
          %2708 = dma.done %s2704, 512
        $region96: #{tpu_custom_call.1} parent=91 // pred_fallthru
          _
      $region92: #{tpu_custom_call.1} parent=5 // pred_fallthru
        _
    $region6: #{tpu_custom_call.1} parent=1 // loop_footer
      %s29 = sadd.s32 1, %s25
    $region7: #{tpu_custom_call.1} parent=1 // loop_footer_branch
      %24 = sbr.rel target = $region3
    $region8: #{tpu_custom_call.1} parent=1 // loop_exit
      _
    %2709 = vsyncpa [#allocation5], 1
    %s2710 = scalar_lea.sflag [#allocation5], 1
    %2711 = vsyncpa %s2710, 1
    %2712 = vsyncpa [#allocation8], 1
    %2713 = vsyncpa [#allocation11], 1
    %2714 = vsyncpa [#allocation6], 1
    %s2715 = scalar_lea.sflag [#allocation6], 1
    %2716 = vsyncpa %s2715, 1

</llo_original>
